<compile_context>
chip_gen: v7x
topology: tpu7x:2x2x1
jax: 0.10.0
libtpu: 0.0.40
codegen_flags: <defaults>
</compile_context>

<pallas_src>
import functools

import jax
import jax.numpy as jnp
import numpy as np
from jax import lax
from jax.experimental import pallas as pl
from jax.experimental.pallas import tpu as pltpu

GN_EPS = 1e-5   # nn.GroupNorm default eps
WS_EPS = 1e-6   # StdConv2d weight-standardization eps


def make_divisible(v, divisor=8, min_value=None, round_limit=0.9):
    min_value = min_value or divisor
    new_v = max(min_value, int(v + divisor / 2) // divisor * divisor)
    if new_v < round_limit * v:
        new_v += divisor
    return new_v


def _standardize_weight(w, eps=WS_EPS):
    """Per-output-channel standardization (biased var), matching
    F.batch_norm(weight.reshape(1, O, -1), training=True, eps=eps)."""
    o = w.shape[0]
    wf = w.reshape(o, -1).astype(jnp.float32)
    m = jnp.mean(wf, axis=1, keepdims=True)
    v = jnp.mean((wf - m) ** 2, axis=1, keepdims=True)
    wf = (wf - m) / jnp.sqrt(v + eps)
    return wf.reshape(w.shape)


def _gn4(y, gamma, beta, hw):
    """GroupNorm(num_groups=4) on a per-sample (HW, C) f32 activation.

    Per-channel sums + tiny per-group lane slices; folded into one y*scale+shift pass."""
    c = y.shape[-1]
    cs = c // 4
    inv_n = 1.0 / float(hw * cs)
    s = jnp.sum(y, axis=0, keepdims=True)          # (1, C)
    ss = jnp.sum(y * y, axis=0, keepdims=True)     # (1, C)
    scale_parts, shift_parts = [], []
    for g in range(4):
        lo, hi = g * cs, (g + 1) * cs
        m = jnp.sum(s[:, lo:hi], axis=1, keepdims=True) * inv_n            # (1, 1)
        v = jnp.sum(ss[:, lo:hi], axis=1, keepdims=True) * inv_n - m * m   # (1, 1)
        sc = gamma[:, lo:hi] * lax.rsqrt(v + GN_EPS)                       # (1, cs)
        scale_parts.append(sc)
        shift_parts.append(beta[:, lo:hi] - m * sc)
    scale = jnp.concatenate(scale_parts, axis=1)   # (1, C)
    shift = jnp.concatenate(shift_parts, axis=1)   # (1, C)
    return y * scale + shift


def _bottleneck_kernel(H, W,
                       x_ref, gpre_ref, bpre_ref,
                       w1_ref, g1_ref, b1_ref,
                       w2_ref, g2_ref, b2_ref,
                       w3_ref, g3_ref, b3_ref,
                       out_ref, pad_ref):
    hw = H * W
    f32 = jnp.float32
    cdt = pad_ref.dtype                      # matmul-operand / scratch dtype (bf16)

    x = x_ref[0].astype(f32)                 # (HW, Cin) — input dtype is whatever arrived

    # ---- preact: GroupNorm(Cin, Cin) == per-channel norm over HW, then ReLU ----
    inv_hw = 1.0 / float(hw)
    s = jnp.sum(x, axis=0, keepdims=True)
    ss = jnp.sum(x * x, axis=0, keepdims=True)
    mean = s * inv_hw
    var = ss * inv_hw - mean * mean
    scale_pre = gpre_ref[...] * lax.rsqrt(var + GN_EPS)     # (1, Cin), kept for shortcut
    shift_pre = bpre_ref[...] - mean * scale_pre             # (1, Cin), kept for shortcut
    xa = jnp.maximum(x * scale_pre + shift_pre, 0.0)

    # ---- conv1: weight-standardized 1x1 conv == matmul, then GroupNorm(4) ----
    y = jnp.dot(xa.astype(cdt), w1_ref[...], preferred_element_type=f32)   # (HW, Cmid)
    y = _gn4(y, g1_ref[...], b1_ref[...], hw)
    cmid = y.shape[-1]

    # ---- conv2: 3x3, stride 1, pad 1 ----
    # Build the three horizontal taps once in bf16 (roll + select are dtype-width-agnostic
    # data movement), concat along lanes and do ONE unmasked full-width store into a
    # vertically zero-padded scratch.  Each vertical offset (ky) is then a contiguous
    # slice of the scratch contracted against a stacked (3*Cmid, Cmid) weight.
    ww = lax.broadcasted_iota(jnp.int32, (hw, 1), 0) % W
    yb = y.astype(cdt)
    zero = jnp.zeros_like(yb)
    y_m1 = jnp.where(ww > 0, jnp.roll(yb, 1, axis=0), zero)         # y[h, w-1], 0 at w==0
    y_p1 = jnp.where(ww < W - 1, jnp.roll(yb, -1, axis=0), zero)    # y[h, w+1], 0 at w==W-1
    taps = jnp.concatenate([y_m1, yb, y_p1], axis=1)                # (HW, 3*Cmid)

    # Pad rows are re-zeroed every step (cheap); NOT program_id==0 guarded — see header note.
    zrow = jnp.zeros((W, 3 * cmid), cdt)
    pad_ref[pl.ds(0, W), :] = zrow                    # top pad rows
    pad_ref[pl.ds((H + 1) * W, W), :] = zrow          # bottom pad rows
    pad_ref[pl.ds(W, hw), :] = taps                   # single lane-dense store of the slab

    acc = jnp.dot(pad_ref[pl.ds(0, hw), :], w2_ref[0],
                  preferred_element_type=f32)                            # ky = 0 (h-1)
    acc += jnp.dot(pad_ref[pl.ds(W, hw), :], w2_ref[1],
                   preferred_element_type=f32)                           # ky = 1 (h)
    acc += jnp.dot(pad_ref[pl.ds(2 * W, hw), :], w2_ref[2],
                   preferred_element_type=f32)                           # ky = 2 (h+1)
    y2 = _gn4(acc, g2_ref[...], b2_ref[...], hw)

    # ---- conv3: 1x1, then GroupNorm(4) ----
    z = jnp.dot(y2.astype(cdt), w3_ref[...], preferred_element_type=f32)  # (HW, Cout)
    z = _gn4(z, g3_ref[...], b3_ref[...], hw)

    # ---- drop_path == Identity; residual add + final ReLU ----
    # Shortcut is recomputed from the still-resident x block instead of being held as a
    # second live f32 (HW, Cin) buffer for the whole kernel (bit-identical values).
    shortcut = jnp.maximum(x_ref[0].astype(f32) * scale_pre + shift_pre, 0.0)
    out_ref[0] = jnp.maximum(z + shortcut, 0.0).astype(out_ref.dtype)


def resnetv2_bottleneck_nhwc(x_nhwc, params, *, act_dtype=jnp.bfloat16):
    """Preferred entry point: NHWC activations in, NHWC act_dtype (bf16) activations out."""
    N, H, W, Cin = x_nhwc.shape
    hw = H * W

    w1 = _standardize_weight(params["conv1_w"])               # (Cmid, Cin, 1, 1)
    w2 = _standardize_weight(params["conv2_w"])               # (Cmid, Cmid, 3, 3)
    w3 = _standardize_weight(params["conv3_w"])               # (Cout, Cmid, 1, 1)
    Cmid, Cout = w1.shape[0], w3.shape[0]
    assert Cmid % 4 == 0 and Cout % 4 == 0, "GroupNorm(4, .) needs channels % 4 == 0"
    assert Cout == Cin, "stride=1 residual path requires out_chs == in_chs"

    # Free reshape; keep the caller's dtype (the kernel casts internally), bf16 weights.
    x = x_nhwc.reshape(N, hw, Cin)
    w1m = jnp.transpose(w1[:, :, 0, 0], (1, 0)).astype(act_dtype)            # (Cin, Cmid)
    w3m = jnp.transpose(w3[:, :, 0, 0], (1, 0)).astype(act_dtype)            # (Cmid, Cout)
    # (ky, kx, in, out) stacked over kx along K:  w2t[ky] is (3*Cmid, Cmid)
    w2t = jnp.transpose(w2, (2, 3, 1, 0)).reshape(3, 3 * Cmid, Cmid).astype(act_dtype)

    row2 = lambda v: v.reshape(1, -1).astype(jnp.float32)
    g_pre, b_pre = row2(params["preact_g"]), row2(params["preact_b"])
    g1, b1 = row2(params["norm1_g"]), row2(params["norm1_b"])
    g2, b2 = row2(params["norm2_g"]), row2(params["norm2_b"])
    g3, b3 = row2(params["norm3_g"]), row2(params["norm3_b"])

    # VMEM budget: double-buffered activation blocks + (double-buffered) weights + conv2
    # scratch + rough f32 temporaries, with 2x headroom, clamped to <= 48 MiB (v7x has 64 MiB).
    in_bytes = jnp.dtype(x.dtype).itemsize
    act_bytes = jnp.dtype(act_dtype).itemsize
    need = (2 * hw * Cin * in_bytes + 2 * hw * Cout * act_bytes
            + 2 * (Cin * Cmid + 9 * Cmid * Cmid + Cmid * Cout) * act_bytes
            + (H + 2) * W * 3 * Cmid * act_bytes
            + hw * (Cin + 3 * Cmid + 2 * max(Cmid, Cout)) * 4)
    vmem_limit = int(min(48 << 20, max(24 << 20, 2 * need)))

    def const_spec(a):
        nd = a.ndim
        return pl.BlockSpec(a.shape, lambda b, _nd=nd: (0,) * _nd)

    kernel = functools.partial(_bottleneck_kernel, H, W)
    out = pl.pallas_call(
        kernel,
        out_shape=jax.ShapeDtypeStruct((N, hw, Cout), act_dtype),
        grid=(N,),
        in_specs=[
            pl.BlockSpec((1, hw, Cin), lambda b: (b, 0, 0)),
            const_spec(g_pre), const_spec(b_pre),
            const_spec(w1m), const_spec(g1), const_spec(b1),
            const_spec(w2t), const_spec(g2), const_spec(b2),
            const_spec(w3m), const_spec(g3), const_spec(b3),
        ],
        out_specs=pl.BlockSpec((1, hw, Cout), lambda b: (b, 0, 0)),
        scratch_shapes=[pltpu.VMEM(((H + 2) * W, 3 * Cmid), act_dtype)],
        compiler_params=pltpu.CompilerParams(
            dimension_semantics=("parallel",),
            vmem_limit_bytes=vmem_limit),
    )(x, g_pre, b_pre, w1m, g1, b1, w2t, g2, b2, w3m, g3, b3)

    return out.reshape(N, H, W, Cout)


def resnetv2_bottleneck(x_nchw, params, *, act_dtype=jnp.bfloat16):
    """NCHW adapter for parity with the PyTorch module.  Prefer resnetv2_bottleneck_nhwc and
    keep activations NHWC + bf16 between blocks: the transposes/casts here are full extra HBM
    round trips that can dominate this (roughly HBM-bound) layer's wall-clock."""
    out = resnetv2_bottleneck_nhwc(jnp.transpose(x_nchw, (0, 2, 3, 1)), params,
                                   act_dtype=act_dtype)
    return jnp.transpose(out, (0, 3, 1, 2)).astype(x_nchw.dtype)


def reference(x_nchw, params, act_dtype=jnp.bfloat16):
    """Pure-JAX reference of the PyTorch forward, mirroring the kernel's operand policy
    (f32 input, bf16 conv operands, f32 accumulation/norms, bf16 HBM output)."""
    x = jnp.transpose(x_nchw, (0, 2, 3, 1)).astype(jnp.float32)  # NHWC f32
    N, H, W, Cin = x.shape

    def gn(x, gamma, beta, groups):
        n, h, w, c = x.shape
        cs = c // groups
        xg = x.reshape(n, h * w, groups, cs)
        m = jnp.mean(xg, axis=(1, 3), keepdims=True)
        v = jnp.mean((xg - m) ** 2, axis=(1, 3), keepdims=True)
        xg = (xg - m) / jnp.sqrt(v + GN_EPS)
        return xg.reshape(n, h, w, c) * gamma.reshape(1, 1, 1, c) + beta.reshape(1, 1, 1, c)

    x = jnp.maximum(gn(x, params["preact_g"], params["preact_b"], Cin), 0.0)
    shortcut = x

    w1 = _standardize_weight(params["conv1_w"]).astype(act_dtype)
    w2 = _standardize_weight(params["conv2_w"]).astype(act_dtype)
    w3 = _standardize_weight(params["conv3_w"]).astype(act_dtype)

    y = jnp.einsum('nhwc,oc->nhwo', x.astype(act_dtype), w1[:, :, 0, 0],
                   preferred_element_type=jnp.float32)
    y = gn(y, params["norm1_g"], params["norm1_b"], 4)
    y = lax.conv_general_dilated(
        y.astype(act_dtype), jnp.transpose(w2, (2, 3, 1, 0)), (1, 1), ((1, 1), (1, 1)),
        dimension_numbers=('NHWC', 'HWIO', 'NHWC'),
        preferred_element_type=jnp.float32)
    y = gn(y, params["norm2_g"], params["norm2_b"], 4)
    z = jnp.einsum('nhwc,oc->nhwo', y.astype(act_dtype), w3[:, :, 0, 0],
                   preferred_element_type=jnp.float32)
    z = gn(z, params["norm3_g"], params["norm3_b"], 4)
    out = jnp.maximum(z + shortcut, 0.0).astype(act_dtype).astype(jnp.float32)
    return jnp.transpose(out, (0, 3, 1, 2))


if __name__ == "__main__":
    in_chs = 32
    out_chs = 32                                   # default: out_chs = in_chs
    mid_chs = make_divisible(out_chs * 0.25)       # = 8
    N, H, W = 2, 16, 16

    key = jax.random.PRNGKey(0)
    ks = jax.random.split(key, 12)
    params = {
        "preact_g": jax.random.normal(ks[0], (in_chs,)) * 0.1 + 1.0,
        "preact_b": jax.random.normal(ks[1], (in_chs,)) * 0.1,
        "conv1_w": jax.random.normal(ks[2], (mid_chs, in_chs, 1, 1)) * 0.1,
        "norm1_g": jax.random.normal(ks[3], (mid_chs,)) * 0.1 + 1.0,
        "norm1_b": jax.random.normal(ks[4], (mid_chs,)) * 0.1,
        "conv2_w": jax.random.normal(ks[5], (mid_chs, mid_chs, 3, 3)) * 0.1,
        "norm2_g": jax.random.normal(ks[6], (mid_chs,)) * 0.1 + 1.0,
        "norm2_b": jax.random.normal(ks[7], (mid_chs,)) * 0.1,
        "conv3_w": jax.random.normal(ks[8], (out_chs, mid_chs, 1, 1)) * 0.1,
        "norm3_g": jax.random.normal(ks[9], (out_chs,)) * 0.1 + 1.0,
        "norm3_b": jax.random.normal(ks[10], (out_chs,)) * 0.1,
    }
    x = jax.random.normal(ks[11], (N, in_chs, H, W), jnp.float32)

    out = jax.block_until_ready(resnetv2_bottleneck(x, params))
    ref = jax.block_until_ready(reference(x, params))
    np.testing.assert_allclose(np.asarray(out), np.asarray(ref), atol=2e-2, rtol=2e-2)
    print("KERNEL_OK")
</pallas_src>

<mosaic_0001>
module attributes {stable_mosaic.version = 11 : i64} {
  func.func @_bottleneck_kernel(%arg0: i32, %arg1: memref<1x256x32xf32, #tpu.memory_space<vmem>>, %arg2: memref<1x32xf32, #tpu.memory_space<vmem>>, %arg3: memref<1x32xf32, #tpu.memory_space<vmem>>, %arg4: memref<32x8xbf16, #tpu.memory_space<vmem>>, %arg5: memref<1x8xf32, #tpu.memory_space<vmem>>, %arg6: memref<1x8xf32, #tpu.memory_space<vmem>>, %arg7: memref<3x24x8xbf16, #tpu.memory_space<vmem>>, %arg8: memref<1x8xf32, #tpu.memory_space<vmem>>, %arg9: memref<1x8xf32, #tpu.memory_space<vmem>>, %arg10: memref<8x32xbf16, #tpu.memory_space<vmem>>, %arg11: memref<1x32xf32, #tpu.memory_space<vmem>>, %arg12: memref<1x32xf32, #tpu.memory_space<vmem>>, %arg13: memref<1x256x32xbf16, #tpu.memory_space<vmem>>, %arg14: memref<288x24xbf16, #tpu.memory_space<vmem>>) attributes {dimension_semantics = [#tpu.dimension_semantics<parallel>], iteration_bounds = array<i64: 2>, scalar_prefetch = 0 : i64, scratch_operands = 1 : i64, tpu.core_type = #tpu.core_type<tc>, window_params = [{transform_indices = @transform_0, window_bounds = array<i64: 1, 256, 32>}, {pipeline_mode = #tpu.pipeline_mode<synchronous>, transform_indices = @transform_1, window_bounds = array<i64: 1, 32>}, {pipeline_mode = #tpu.pipeline_mode<synchronous>, transform_indices = @transform_2, window_bounds = array<i64: 1, 32>}, {pipeline_mode = #tpu.pipeline_mode<synchronous>, transform_indices = @transform_3, window_bounds = array<i64: 32, 8>}, {pipeline_mode = #tpu.pipeline_mode<synchronous>, transform_indices = @transform_4, window_bounds = array<i64: 1, 8>}, {pipeline_mode = #tpu.pipeline_mode<synchronous>, transform_indices = @transform_5, window_bounds = array<i64: 1, 8>}, {pipeline_mode = #tpu.pipeline_mode<synchronous>, transform_indices = @transform_6, window_bounds = array<i64: 3, 24, 8>}, {pipeline_mode = #tpu.pipeline_mode<synchronous>, transform_indices = @transform_7, window_bounds = array<i64: 1, 8>}, {pipeline_mode = #tpu.pipeline_mode<synchronous>, transform_indices = @transform_8, window_bounds = array<i64: 1, 8>}, {pipeline_mode = #tpu.pipeline_mode<synchronous>, transform_indices = @transform_9, window_bounds = array<i64: 8, 32>}, {pipeline_mode = #tpu.pipeline_mode<synchronous>, transform_indices = @transform_10, window_bounds = array<i64: 1, 32>}, {pipeline_mode = #tpu.pipeline_mode<synchronous>, transform_indices = @transform_11, window_bounds = array<i64: 1, 32>}, {transform_indices = @transform_12, window_bounds = array<i64: 1, 256, 32>}]} {
    %c0 = arith.constant 0 : index
    %c0_0 = arith.constant 0 : index
    %c0_1 = arith.constant 0 : index
    %0 = vector.load %arg1[%c0, %c0_0, %c0_1] : memref<1x256x32xf32, #tpu.memory_space<vmem>>, vector<1x256x32xf32>
    %1 = vector.shape_cast %0 : vector<1x256x32xf32> to vector<256x32xf32>
    %cst = arith.constant dense<0.000000e+00> : vector<32xf32>
    %2 = vector.multi_reduction <add>, %1, %cst [0] : vector<256x32xf32> to vector<32xf32>
    %3 = vector.shape_cast %2 : vector<32xf32> to vector<1x32xf32>
    %4 = arith.mulf %1, %1 : vector<256x32xf32>
    %cst_2 = arith.constant dense<0.000000e+00> : vector<32xf32>
    %5 = vector.multi_reduction <add>, %4, %cst_2 [0] : vector<256x32xf32> to vector<32xf32>
    %6 = vector.shape_cast %5 : vector<32xf32> to vector<1x32xf32>
    %cst_3 = arith.constant 3.906250e-03 : f32
    %7 = vector.broadcast %cst_3 : f32 to vector<1x32xf32>
    %8 = arith.mulf %3, %7 : vector<1x32xf32>
    %cst_4 = arith.constant 3.906250e-03 : f32
    %9 = vector.broadcast %cst_4 : f32 to vector<1x32xf32>
    %10 = arith.mulf %6, %9 : vector<1x32xf32>
    %11 = arith.mulf %8, %8 : vector<1x32xf32>
    %12 = arith.subf %10, %11 : vector<1x32xf32>
    %c0_5 = arith.constant 0 : index
    %c0_6 = arith.constant 0 : index
    %13 = vector.load %arg2[%c0_5, %c0_6] : memref<1x32xf32, #tpu.memory_space<vmem>>, vector<1x32xf32>
    %cst_7 = arith.constant 9.99999974E-6 : f32
    %14 = vector.broadcast %cst_7 : f32 to vector<1x32xf32>
    %15 = arith.addf %12, %14 : vector<1x32xf32>
    %16 = math.rsqrt %15 : vector<1x32xf32>
    %17 = arith.mulf %13, %16 : vector<1x32xf32>
    %c0_8 = arith.constant 0 : index
    %c0_9 = arith.constant 0 : index
    %18 = vector.load %arg3[%c0_8, %c0_9] : memref<1x32xf32, #tpu.memory_space<vmem>>, vector<1x32xf32>
    %19 = arith.mulf %8, %17 : vector<1x32xf32>
    %20 = arith.subf %18, %19 : vector<1x32xf32>
    %21 = vector.broadcast %17 : vector<1x32xf32> to vector<256x32xf32>
    %22 = arith.mulf %1, %21 : vector<256x32xf32>
    %23 = vector.broadcast %20 : vector<1x32xf32> to vector<256x32xf32>
    %24 = arith.addf %22, %23 : vector<256x32xf32>
    %cst_10 = arith.constant 0.000000e+00 : f32
    %25 = vector.broadcast %cst_10 : f32 to vector<256x32xf32>
    %26 = arith.maximumf %24, %25 : vector<256x32xf32>
    %27 = arith.truncf %26 : vector<256x32xf32> to vector<256x32xbf16>
    %c0_11 = arith.constant 0 : index
    %c0_12 = arith.constant 0 : index
    %28 = vector.load %arg4[%c0_11, %c0_12] : memref<32x8xbf16, #tpu.memory_space<vmem>>, vector<32x8xbf16>
    %cst_13 = arith.constant dense<0.000000e+00> : vector<256x8xf32>
    %29 = tpu.matmul %27, %28, %cst_13 {dimension_numbers = #tpu.dot_dimension_numbers<[1], [0], [0], [1], [0, 0, 1, 1], [], []>} : vector<256x32xbf16>, vector<32x8xbf16>, vector<256x8xf32> -> vector<256x8xf32>
    %c0_14 = arith.constant 0 : index
    %c0_15 = arith.constant 0 : index
    %30 = vector.load %arg5[%c0_14, %c0_15] : memref<1x8xf32, #tpu.memory_space<vmem>>, vector<1x8xf32>
    %c0_16 = arith.constant 0 : index
    %c0_17 = arith.constant 0 : index
    %31 = vector.load %arg6[%c0_16, %c0_17] : memref<1x8xf32, #tpu.memory_space<vmem>>, vector<1x8xf32>
    %cst_18 = arith.constant dense<0.000000e+00> : vector<8xf32>
    %32 = vector.multi_reduction <add>, %29, %cst_18 [0] : vector<256x8xf32> to vector<8xf32>
    %33 = vector.shape_cast %32 : vector<8xf32> to vector<1x8xf32>
    %34 = arith.mulf %29, %29 : vector<256x8xf32>
    %cst_19 = arith.constant dense<0.000000e+00> : vector<8xf32>
    %35 = vector.multi_reduction <add>, %34, %cst_19 [0] : vector<256x8xf32> to vector<8xf32>
    %36 = vector.shape_cast %35 : vector<8xf32> to vector<1x8xf32>
    %37 = vector.extract_strided_slice %33 {offsets = [0, 0], sizes = [1, 2], strides = [1, 1]} : vector<1x8xf32> to vector<1x2xf32>
    %cst_20 = arith.constant dense<0.000000e+00> : vector<1xf32>
    %38 = vector.multi_reduction <add>, %37, %cst_20 [1] : vector<1x2xf32> to vector<1xf32>
    %39 = vector.shape_cast %38 : vector<1xf32> to vector<1x1xf32>
    %cst_21 = arith.constant 0.001953125 : f32
    %40 = vector.broadcast %cst_21 : f32 to vector<1x1xf32>
    %41 = arith.mulf %39, %40 : vector<1x1xf32>
    %42 = vector.extract_strided_slice %36 {offsets = [0, 0], sizes = [1, 2], strides = [1, 1]} : vector<1x8xf32> to vector<1x2xf32>
    %cst_22 = arith.constant dense<0.000000e+00> : vector<1xf32>
    %43 = vector.multi_reduction <add>, %42, %cst_22 [1] : vector<1x2xf32> to vector<1xf32>
    %44 = vector.shape_cast %43 : vector<1xf32> to vector<1x1xf32>
    %cst_23 = arith.constant 0.001953125 : f32
    %45 = vector.broadcast %cst_23 : f32 to vector<1x1xf32>
    %46 = arith.mulf %44, %45 : vector<1x1xf32>
    %47 = arith.mulf %41, %41 : vector<1x1xf32>
    %48 = arith.subf %46, %47 : vector<1x1xf32>
    %49 = vector.extract_strided_slice %30 {offsets = [0, 0], sizes = [1, 2], strides = [1, 1]} : vector<1x8xf32> to vector<1x2xf32>
    %cst_24 = arith.constant 9.99999974E-6 : f32
    %50 = vector.broadcast %cst_24 : f32 to vector<1x1xf32>
    %51 = arith.addf %48, %50 : vector<1x1xf32>
    %52 = math.rsqrt %51 : vector<1x1xf32>
    %53 = vector.broadcast %52 : vector<1x1xf32> to vector<1x2xf32>
    %54 = arith.mulf %49, %53 : vector<1x2xf32>
    %55 = vector.extract_strided_slice %31 {offsets = [0, 0], sizes = [1, 2], strides = [1, 1]} : vector<1x8xf32> to vector<1x2xf32>
    %56 = vector.broadcast %41 : vector<1x1xf32> to vector<1x2xf32>
    %57 = arith.mulf %56, %54 : vector<1x2xf32>
    %58 = arith.subf %55, %57 : vector<1x2xf32>
    %59 = vector.extract_strided_slice %33 {offsets = [0, 2], sizes = [1, 2], strides = [1, 1]} : vector<1x8xf32> to vector<1x2xf32>
    %cst_25 = arith.constant dense<0.000000e+00> : vector<1xf32>
    %60 = vector.multi_reduction <add>, %59, %cst_25 [1] : vector<1x2xf32> to vector<1xf32>
    %61 = vector.shape_cast %60 : vector<1xf32> to vector<1x1xf32>
    %cst_26 = arith.constant 0.001953125 : f32
    %62 = vector.broadcast %cst_26 : f32 to vector<1x1xf32>
    %63 = arith.mulf %61, %62 : vector<1x1xf32>
    %64 = vector.extract_strided_slice %36 {offsets = [0, 2], sizes = [1, 2], strides = [1, 1]} : vector<1x8xf32> to vector<1x2xf32>
    %cst_27 = arith.constant dense<0.000000e+00> : vector<1xf32>
    %65 = vector.multi_reduction <add>, %64, %cst_27 [1] : vector<1x2xf32> to vector<1xf32>
    %66 = vector.shape_cast %65 : vector<1xf32> to vector<1x1xf32>
    %cst_28 = arith.constant 0.001953125 : f32
    %67 = vector.broadcast %cst_28 : f32 to vector<1x1xf32>
    %68 = arith.mulf %66, %67 : vector<1x1xf32>
    %69 = arith.mulf %63, %63 : vector<1x1xf32>
    %70 = arith.subf %68, %69 : vector<1x1xf32>
    %71 = vector.extract_strided_slice %30 {offsets = [0, 2], sizes = [1, 2], strides = [1, 1]} : vector<1x8xf32> to vector<1x2xf32>
    %cst_29 = arith.constant 9.99999974E-6 : f32
    %72 = vector.broadcast %cst_29 : f32 to vector<1x1xf32>
    %73 = arith.addf %70, %72 : vector<1x1xf32>
    %74 = math.rsqrt %73 : vector<1x1xf32>
    %75 = vector.broadcast %74 : vector<1x1xf32> to vector<1x2xf32>
    %76 = arith.mulf %71, %75 : vector<1x2xf32>
    %77 = vector.extract_strided_slice %31 {offsets = [0, 2], sizes = [1, 2], strides = [1, 1]} : vector<1x8xf32> to vector<1x2xf32>
    %78 = vector.broadcast %63 : vector<1x1xf32> to vector<1x2xf32>
    %79 = arith.mulf %78, %76 : vector<1x2xf32>
    %80 = arith.subf %77, %79 : vector<1x2xf32>
    %81 = vector.extract_strided_slice %33 {offsets = [0, 4], sizes = [1, 2], strides = [1, 1]} : vector<1x8xf32> to vector<1x2xf32>
    %cst_30 = arith.constant dense<0.000000e+00> : vector<1xf32>
    %82 = vector.multi_reduction <add>, %81, %cst_30 [1] : vector<1x2xf32> to vector<1xf32>
    %83 = vector.shape_cast %82 : vector<1xf32> to vector<1x1xf32>
    %cst_31 = arith.constant 0.001953125 : f32
    %84 = vector.broadcast %cst_31 : f32 to vector<1x1xf32>
    %85 = arith.mulf %83, %84 : vector<1x1xf32>
    %86 = vector.extract_strided_slice %36 {offsets = [0, 4], sizes = [1, 2], strides = [1, 1]} : vector<1x8xf32> to vector<1x2xf32>
    %cst_32 = arith.constant dense<0.000000e+00> : vector<1xf32>
    %87 = vector.multi_reduction <add>, %86, %cst_32 [1] : vector<1x2xf32> to vector<1xf32>
    %88 = vector.shape_cast %87 : vector<1xf32> to vector<1x1xf32>
    %cst_33 = arith.constant 0.001953125 : f32
    %89 = vector.broadcast %cst_33 : f32 to vector<1x1xf32>
    %90 = arith.mulf %88, %89 : vector<1x1xf32>
    %91 = arith.mulf %85, %85 : vector<1x1xf32>
    %92 = arith.subf %90, %91 : vector<1x1xf32>
    %93 = vector.extract_strided_slice %30 {offsets = [0, 4], sizes = [1, 2], strides = [1, 1]} : vector<1x8xf32> to vector<1x2xf32>
    %cst_34 = arith.constant 9.99999974E-6 : f32
    %94 = vector.broadcast %cst_34 : f32 to vector<1x1xf32>
    %95 = arith.addf %92, %94 : vector<1x1xf32>
    %96 = math.rsqrt %95 : vector<1x1xf32>
    %97 = vector.broadcast %96 : vector<1x1xf32> to vector<1x2xf32>
    %98 = arith.mulf %93, %97 : vector<1x2xf32>
    %99 = vector.extract_strided_slice %31 {offsets = [0, 4], sizes = [1, 2], strides = [1, 1]} : vector<1x8xf32> to vector<1x2xf32>
    %100 = vector.broadcast %85 : vector<1x1xf32> to vector<1x2xf32>
    %101 = arith.mulf %100, %98 : vector<1x2xf32>
    %102 = arith.subf %99, %101 : vector<1x2xf32>
    %103 = vector.extract_strided_slice %33 {offsets = [0, 6], sizes = [1, 2], strides = [1, 1]} : vector<1x8xf32> to vector<1x2xf32>
    %cst_35 = arith.constant dense<0.000000e+00> : vector<1xf32>
    %104 = vector.multi_reduction <add>, %103, %cst_35 [1] : vector<1x2xf32> to vector<1xf32>
    %105 = vector.shape_cast %104 : vector<1xf32> to vector<1x1xf32>
    %cst_36 = arith.constant 0.001953125 : f32
    %106 = vector.broadcast %cst_36 : f32 to vector<1x1xf32>
    %107 = arith.mulf %105, %106 : vector<1x1xf32>
    %108 = vector.extract_strided_slice %36 {offsets = [0, 6], sizes = [1, 2], strides = [1, 1]} : vector<1x8xf32> to vector<1x2xf32>
    %cst_37 = arith.constant dense<0.000000e+00> : vector<1xf32>
    %109 = vector.multi_reduction <add>, %108, %cst_37 [1] : vector<1x2xf32> to vector<1xf32>
    %110 = vector.shape_cast %109 : vector<1xf32> to vector<1x1xf32>
    %cst_38 = arith.constant 0.001953125 : f32
    %111 = vector.broadcast %cst_38 : f32 to vector<1x1xf32>
    %112 = arith.mulf %110, %111 : vector<1x1xf32>
    %113 = arith.mulf %107, %107 : vector<1x1xf32>
    %114 = arith.subf %112, %113 : vector<1x1xf32>
    %115 = vector.extract_strided_slice %30 {offsets = [0, 6], sizes = [1, 2], strides = [1, 1]} : vector<1x8xf32> to vector<1x2xf32>
    %cst_39 = arith.constant 9.99999974E-6 : f32
    %116 = vector.broadcast %cst_39 : f32 to vector<1x1xf32>
    %117 = arith.addf %114, %116 : vector<1x1xf32>
    %118 = math.rsqrt %117 : vector<1x1xf32>
    %119 = vector.broadcast %118 : vector<1x1xf32> to vector<1x2xf32>
    %120 = arith.mulf %115, %119 : vector<1x2xf32>
    %121 = vector.extract_strided_slice %31 {offsets = [0, 6], sizes = [1, 2], strides = [1, 1]} : vector<1x8xf32> to vector<1x2xf32>
    %122 = vector.broadcast %107 : vector<1x1xf32> to vector<1x2xf32>
    %123 = arith.mulf %122, %120 : vector<1x2xf32>
    %124 = arith.subf %121, %123 : vector<1x2xf32>
    %125 = tpu.concatenate %54, %76, %98, %120 in 1 : vector<1x2xf32>, vector<1x2xf32>, vector<1x2xf32>, vector<1x2xf32> -> vector<1x8xf32>
    %126 = tpu.concatenate %58, %80, %102, %124 in 1 : vector<1x2xf32>, vector<1x2xf32>, vector<1x2xf32>, vector<1x2xf32> -> vector<1x8xf32>
    %127 = vector.broadcast %125 : vector<1x8xf32> to vector<256x8xf32>
    %128 = arith.mulf %29, %127 : vector<256x8xf32>
    %129 = vector.broadcast %126 : vector<1x8xf32> to vector<256x8xf32>
    %130 = arith.addf %128, %129 : vector<256x8xf32>
    %131 = tpu.iota {dimensions = array<i32: 0>} : vector<256x1xi32>
    %c16_i32 = arith.constant 16 : i32
    %c0_i32 = arith.constant 0 : i32
    %132 = arith.cmpi eq, %c16_i32, %c0_i32 : i32
    %c1_i32 = arith.constant 1 : i32
    %133 = arith.select %132, %c1_i32, %c16_i32 : i32
    %134 = vector.broadcast %133 : i32 to vector<256x1xi32>
    %135 = arith.remsi %131, %134 : vector<256x1xi32>
    %c0_i32_40 = arith.constant 0 : i32
    %136 = vector.broadcast %c0_i32_40 : i32 to vector<256x1xi32>
    %137 = arith.cmpi ne, %135, %136 : vector<256x1xi32>
    %c0_i32_41 = arith.constant 0 : i32
    %138 = vector.broadcast %c0_i32_41 : i32 to vector<256x1xi32>
    %139 = arith.cmpi slt, %135, %138 : vector<256x1xi32>
    %c0_i32_42 = arith.constant 0 : i32
    %140 = arith.cmpi slt, %133, %c0_i32_42 : i32
    %141 = vector.broadcast %140 : i1 to vector<256x1xi1>
    %142 = vector.broadcast %141 : vector<256x1xi1> to vector<256x1xi1>
    %143 = arith.xori %139, %142 : vector<256x1xi1>
    %144 = arith.andi %143, %137 : vector<256x1xi1>
    %145 = vector.broadcast %133 : i32 to vector<256x1xi32>
    %146 = arith.addi %135, %145 : vector<256x1xi32>
    %147 = arith.select %144, %146, %135 : vector<256x1xi1>, vector<256x1xi32>
    %148 = arith.truncf %130 : vector<256x8xf32> to vector<256x8xbf16>
    %cst_43 = arith.constant 0.000000e+00 : bf16
    %149 = vector.broadcast %cst_43 : bf16 to vector<256x8xbf16>
    %c0_i32_44 = arith.constant 0 : i32
    %150 = vector.broadcast %c0_i32_44 : i32 to vector<256x1xi32>
    %151 = arith.cmpi sgt, %147, %150 : vector<256x1xi32>
    %152 = vector.extract_strided_slice %148 {offsets = [255, 0], sizes = [1, 8], strides = [1, 1]} : vector<256x8xbf16> to vector<1x8xbf16>
    %153 = vector.extract_strided_slice %148 {offsets = [0, 0], sizes = [255, 8], strides = [1, 1]} : vector<256x8xbf16> to vector<255x8xbf16>
    %154 = tpu.concatenate %152, %153 in 0 : vector<1x8xbf16>, vector<255x8xbf16> -> vector<256x8xbf16>
    %155 = vector.shape_cast %151 : vector<256x1xi1> to vector<256x1xi1>
    %156 = vector.broadcast %155 : vector<256x1xi1> to vector<256x8xi1>
    %157 = arith.select %156, %154, %149 : vector<256x8xi1>, vector<256x8xbf16>
    %c15_i32 = arith.constant 15 : i32
    %158 = vector.broadcast %c15_i32 : i32 to vector<256x1xi32>
    %159 = arith.cmpi slt, %147, %158 : vector<256x1xi32>
    %160 = vector.extract_strided_slice %148 {offsets = [1, 0], sizes = [255, 8], strides = [1, 1]} : vector<256x8xbf16> to vector<255x8xbf16>
    %161 = vector.extract_strided_slice %148 {offsets = [0, 0], sizes = [1, 8], strides = [1, 1]} : vector<256x8xbf16> to vector<1x8xbf16>
    %162 = tpu.concatenate %160, %161 in 0 : vector<255x8xbf16>, vector<1x8xbf16> -> vector<256x8xbf16>
    %163 = vector.shape_cast %159 : vector<256x1xi1> to vector<256x1xi1>
    %164 = vector.broadcast %163 : vector<256x1xi1> to vector<256x8xi1>
    %165 = arith.select %164, %162, %149 : vector<256x8xi1>, vector<256x8xbf16>
    %166 = tpu.concatenate %157, %148, %165 in 1 : vector<256x8xbf16>, vector<256x8xbf16>, vector<256x8xbf16> -> vector<256x24xbf16>
    %cst_45 = arith.constant 0.000000e+00 : bf16
    %167 = vector.broadcast %cst_45 : bf16 to vector<16x24xbf16>
    %c0_46 = arith.constant 0 : index
    %c0_47 = arith.constant 0 : index
    %168 = vector.load %arg14[%c0_46, %c0_47] : memref<288x24xbf16, #tpu.memory_space<vmem>>, vector<16x24xbf16>
    tpu.vector_store %arg14[%c0_46, %c0_47], %167 {strides = array<i32>} : memref<288x24xbf16, #tpu.memory_space<vmem>>, vector<16x24xbf16>,
    %c272 = arith.constant 272 : index
    %c0_48 = arith.constant 0 : index
    %169 = vector.load %arg14[%c272, %c0_48] : memref<288x24xbf16, #tpu.memory_space<vmem>>, vector<16x24xbf16>
    tpu.vector_store %arg14[%c272, %c0_48], %167 {strides = array<i32>} : memref<288x24xbf16, #tpu.memory_space<vmem>>, vector<16x24xbf16>,
    %c16 = arith.constant 16 : index
    %c0_49 = arith.constant 0 : index
    %170 = vector.load %arg14[%c16, %c0_49] : memref<288x24xbf16, #tpu.memory_space<vmem>>, vector<256x24xbf16>
    tpu.vector_store %arg14[%c16, %c0_49], %166 {strides = array<i32>} : memref<288x24xbf16, #tpu.memory_space<vmem>>, vector<256x24xbf16>,
    %c0_50 = arith.constant 0 : index
    %c0_51 = arith.constant 0 : index
    %171 = vector.load %arg14[%c0_50, %c0_51] : memref<288x24xbf16, #tpu.memory_space<vmem>>, vector<256x24xbf16>
    %c0_52 = arith.constant 0 : index
    %c0_53 = arith.constant 0 : index
    %c0_54 = arith.constant 0 : index
    %172 = vector.load %arg7[%c0_52, %c0_53, %c0_54] : memref<3x24x8xbf16, #tpu.memory_space<vmem>>, vector<1x24x8xbf16>
    %173 = vector.shape_cast %172 : vector<1x24x8xbf16> to vector<24x8xbf16>
    %cst_55 = arith.constant dense<0.000000e+00> : vector<256x8xf32>
    %174 = tpu.matmul %171, %173, %cst_55 {dimension_numbers = #tpu.dot_dimension_numbers<[1], [0], [0], [1], [0, 0, 1, 1], [], []>} : vector<256x24xbf16>, vector<24x8xbf16>, vector<256x8xf32> -> vector<256x8xf32>
    %c16_56 = arith.constant 16 : index
    %c0_57 = arith.constant 0 : index
    %175 = vector.load %arg14[%c16_56, %c0_57] : memref<288x24xbf16, #tpu.memory_space<vmem>>, vector<256x24xbf16>
    %c1 = arith.constant 1 : index
    %c0_58 = arith.constant 0 : index
    %c0_59 = arith.constant 0 : index
    %176 = vector.load %arg7[%c1, %c0_58, %c0_59] : memref<3x24x8xbf16, #tpu.memory_space<vmem>>, vector<1x24x8xbf16>
    %177 = vector.shape_cast %176 : vector<1x24x8xbf16> to vector<24x8xbf16>
    %cst_60 = arith.constant dense<0.000000e+00> : vector<256x8xf32>
    %178 = tpu.matmul %175, %177, %cst_60 {dimension_numbers = #tpu.dot_dimension_numbers<[1], [0], [0], [1], [0, 0, 1, 1], [], []>} : vector<256x24xbf16>, vector<24x8xbf16>, vector<256x8xf32> -> vector<256x8xf32>
    %179 = arith.addf %174, %178 : vector<256x8xf32>
    %c32 = arith.constant 32 : index
    %c0_61 = arith.constant 0 : index
    %180 = vector.load %arg14[%c32, %c0_61] : memref<288x24xbf16, #tpu.memory_space<vmem>>, vector<256x24xbf16>
    %c2 = arith.constant 2 : index
    %c0_62 = arith.constant 0 : index
    %c0_63 = arith.constant 0 : index
    %181 = vector.load %arg7[%c2, %c0_62, %c0_63] : memref<3x24x8xbf16, #tpu.memory_space<vmem>>, vector<1x24x8xbf16>
    %182 = vector.shape_cast %181 : vector<1x24x8xbf16> to vector<24x8xbf16>
    %cst_64 = arith.constant dense<0.000000e+00> : vector<256x8xf32>
    %183 = tpu.matmul %180, %182, %cst_64 {dimension_numbers = #tpu.dot_dimension_numbers<[1], [0], [0], [1], [0, 0, 1, 1], [], []>} : vector<256x24xbf16>, vector<24x8xbf16>, vector<256x8xf32> -> vector<256x8xf32>
    %184 = arith.addf %179, %183 : vector<256x8xf32>
    %c0_65 = arith.constant 0 : index
    %c0_66 = arith.constant 0 : index
    %185 = vector.load %arg8[%c0_65, %c0_66] : memref<1x8xf32, #tpu.memory_space<vmem>>, vector<1x8xf32>
    %c0_67 = arith.constant 0 : index
    %c0_68 = arith.constant 0 : index
    %186 = vector.load %arg9[%c0_67, %c0_68] : memref<1x8xf32, #tpu.memory_space<vmem>>, vector<1x8xf32>
    %cst_69 = arith.constant dense<0.000000e+00> : vector<8xf32>
    %187 = vector.multi_reduction <add>, %184, %cst_69 [0] : vector<256x8xf32> to vector<8xf32>
    %188 = vector.shape_cast %187 : vector<8xf32> to vector<1x8xf32>
    %189 = arith.mulf %184, %184 : vector<256x8xf32>
    %cst_70 = arith.constant dense<0.000000e+00> : vector<8xf32>
    %190 = vector.multi_reduction <add>, %189, %cst_70 [0] : vector<256x8xf32> to vector<8xf32>
    %191 = vector.shape_cast %190 : vector<8xf32> to vector<1x8xf32>
    %192 = vector.extract_strided_slice %188 {offsets = [0, 0], sizes = [1, 2], strides = [1, 1]} : vector<1x8xf32> to vector<1x2xf32>
    %cst_71 = arith.constant dense<0.000000e+00> : vector<1xf32>
    %193 = vector.multi_reduction <add>, %192, %cst_71 [1] : vector<1x2xf32> to vector<1xf32>
    %194 = vector.shape_cast %193 : vector<1xf32> to vector<1x1xf32>
    %cst_72 = arith.constant 0.001953125 : f32
    %195 = vector.broadcast %cst_72 : f32 to vector<1x1xf32>
    %196 = arith.mulf %194, %195 : vector<1x1xf32>
    %197 = vector.extract_strided_slice %191 {offsets = [0, 0], sizes = [1, 2], strides = [1, 1]} : vector<1x8xf32> to vector<1x2xf32>
    %cst_73 = arith.constant dense<0.000000e+00> : vector<1xf32>
    %198 = vector.multi_reduction <add>, %197, %cst_73 [1] : vector<1x2xf32> to vector<1xf32>
    %199 = vector.shape_cast %198 : vector<1xf32> to vector<1x1xf32>
    %cst_74 = arith.constant 0.001953125 : f32
    %200 = vector.broadcast %cst_74 : f32 to vector<1x1xf32>
    %201 = arith.mulf %199, %200 : vector<1x1xf32>
    %202 = arith.mulf %196, %196 : vector<1x1xf32>
    %203 = arith.subf %201, %202 : vector<1x1xf32>
    %204 = vector.extract_strided_slice %185 {offsets = [0, 0], sizes = [1, 2], strides = [1, 1]} : vector<1x8xf32> to vector<1x2xf32>
    %cst_75 = arith.constant 9.99999974E-6 : f32
    %205 = vector.broadcast %cst_75 : f32 to vector<1x1xf32>
    %206 = arith.addf %203, %205 : vector<1x1xf32>
    %207 = math.rsqrt %206 : vector<1x1xf32>
    %208 = vector.broadcast %207 : vector<1x1xf32> to vector<1x2xf32>
    %209 = arith.mulf %204, %208 : vector<1x2xf32>
    %210 = vector.extract_strided_slice %186 {offsets = [0, 0], sizes = [1, 2], strides = [1, 1]} : vector<1x8xf32> to vector<1x2xf32>
    %211 = vector.broadcast %196 : vector<1x1xf32> to vector<1x2xf32>
    %212 = arith.mulf %211, %209 : vector<1x2xf32>
    %213 = arith.subf %210, %212 : vector<1x2xf32>
    %214 = vector.extract_strided_slice %188 {offsets = [0, 2], sizes = [1, 2], strides = [1, 1]} : vector<1x8xf32> to vector<1x2xf32>
    %cst_76 = arith.constant dense<0.000000e+00> : vector<1xf32>
    %215 = vector.multi_reduction <add>, %214, %cst_76 [1] : vector<1x2xf32> to vector<1xf32>
    %216 = vector.shape_cast %215 : vector<1xf32> to vector<1x1xf32>
    %cst_77 = arith.constant 0.001953125 : f32
    %217 = vector.broadcast %cst_77 : f32 to vector<1x1xf32>
    %218 = arith.mulf %216, %217 : vector<1x1xf32>
    %219 = vector.extract_strided_slice %191 {offsets = [0, 2], sizes = [1, 2], strides = [1, 1]} : vector<1x8xf32> to vector<1x2xf32>
    %cst_78 = arith.constant dense<0.000000e+00> : vector<1xf32>
    %220 = vector.multi_reduction <add>, %219, %cst_78 [1] : vector<1x2xf32> to vector<1xf32>
    %221 = vector.shape_cast %220 : vector<1xf32> to vector<1x1xf32>
    %cst_79 = arith.constant 0.001953125 : f32
    %222 = vector.broadcast %cst_79 : f32 to vector<1x1xf32>
    %223 = arith.mulf %221, %222 : vector<1x1xf32>
    %224 = arith.mulf %218, %218 : vector<1x1xf32>
    %225 = arith.subf %223, %224 : vector<1x1xf32>
    %226 = vector.extract_strided_slice %185 {offsets = [0, 2], sizes = [1, 2], strides = [1, 1]} : vector<1x8xf32> to vector<1x2xf32>
    %cst_80 = arith.constant 9.99999974E-6 : f32
    %227 = vector.broadcast %cst_80 : f32 to vector<1x1xf32>
    %228 = arith.addf %225, %227 : vector<1x1xf32>
    %229 = math.rsqrt %228 : vector<1x1xf32>
    %230 = vector.broadcast %229 : vector<1x1xf32> to vector<1x2xf32>
    %231 = arith.mulf %226, %230 : vector<1x2xf32>
    %232 = vector.extract_strided_slice %186 {offsets = [0, 2], sizes = [1, 2], strides = [1, 1]} : vector<1x8xf32> to vector<1x2xf32>
    %233 = vector.broadcast %218 : vector<1x1xf32> to vector<1x2xf32>
    %234 = arith.mulf %233, %231 : vector<1x2xf32>
    %235 = arith.subf %232, %234 : vector<1x2xf32>
    %236 = vector.extract_strided_slice %188 {offsets = [0, 4], sizes = [1, 2], strides = [1, 1]} : vector<1x8xf32> to vector<1x2xf32>
    %cst_81 = arith.constant dense<0.000000e+00> : vector<1xf32>
    %237 = vector.multi_reduction <add>, %236, %cst_81 [1] : vector<1x2xf32> to vector<1xf32>
    %238 = vector.shape_cast %237 : vector<1xf32> to vector<1x1xf32>
    %cst_82 = arith.constant 0.001953125 : f32
    %239 = vector.broadcast %cst_82 : f32 to vector<1x1xf32>
    %240 = arith.mulf %238, %239 : vector<1x1xf32>
    %241 = vector.extract_strided_slice %191 {offsets = [0, 4], sizes = [1, 2], strides = [1, 1]} : vector<1x8xf32> to vector<1x2xf32>
    %cst_83 = arith.constant dense<0.000000e+00> : vector<1xf32>
    %242 = vector.multi_reduction <add>, %241, %cst_83 [1] : vector<1x2xf32> to vector<1xf32>
    %243 = vector.shape_cast %242 : vector<1xf32> to vector<1x1xf32>
    %cst_84 = arith.constant 0.001953125 : f32
    %244 = vector.broadcast %cst_84 : f32 to vector<1x1xf32>
    %245 = arith.mulf %243, %244 : vector<1x1xf32>
    %246 = arith.mulf %240, %240 : vector<1x1xf32>
    %247 = arith.subf %245, %246 : vector<1x1xf32>
    %248 = vector.extract_strided_slice %185 {offsets = [0, 4], sizes = [1, 2], strides = [1, 1]} : vector<1x8xf32> to vector<1x2xf32>
    %cst_85 = arith.constant 9.99999974E-6 : f32
    %249 = vector.broadcast %cst_85 : f32 to vector<1x1xf32>
    %250 = arith.addf %247, %249 : vector<1x1xf32>
    %251 = math.rsqrt %250 : vector<1x1xf32>
    %252 = vector.broadcast %251 : vector<1x1xf32> to vector<1x2xf32>
    %253 = arith.mulf %248, %252 : vector<1x2xf32>
    %254 = vector.extract_strided_slice %186 {offsets = [0, 4], sizes = [1, 2], strides = [1, 1]} : vector<1x8xf32> to vector<1x2xf32>
    %255 = vector.broadcast %240 : vector<1x1xf32> to vector<1x2xf32>
    %256 = arith.mulf %255, %253 : vector<1x2xf32>
    %257 = arith.subf %254, %256 : vector<1x2xf32>
    %258 = vector.extract_strided_slice %188 {offsets = [0, 6], sizes = [1, 2], strides = [1, 1]} : vector<1x8xf32> to vector<1x2xf32>
    %cst_86 = arith.constant dense<0.000000e+00> : vector<1xf32>
    %259 = vector.multi_reduction <add>, %258, %cst_86 [1] : vector<1x2xf32> to vector<1xf32>
    %260 = vector.shape_cast %259 : vector<1xf32> to vector<1x1xf32>
    %cst_87 = arith.constant 0.001953125 : f32
    %261 = vector.broadcast %cst_87 : f32 to vector<1x1xf32>
    %262 = arith.mulf %260, %261 : vector<1x1xf32>
    %263 = vector.extract_strided_slice %191 {offsets = [0, 6], sizes = [1, 2], strides = [1, 1]} : vector<1x8xf32> to vector<1x2xf32>
    %cst_88 = arith.constant dense<0.000000e+00> : vector<1xf32>
    %264 = vector.multi_reduction <add>, %263, %cst_88 [1] : vector<1x2xf32> to vector<1xf32>
    %265 = vector.shape_cast %264 : vector<1xf32> to vector<1x1xf32>
    %cst_89 = arith.constant 0.001953125 : f32
    %266 = vector.broadcast %cst_89 : f32 to vector<1x1xf32>
    %267 = arith.mulf %265, %266 : vector<1x1xf32>
    %268 = arith.mulf %262, %262 : vector<1x1xf32>
    %269 = arith.subf %267, %268 : vector<1x1xf32>
    %270 = vector.extract_strided_slice %185 {offsets = [0, 6], sizes = [1, 2], strides = [1, 1]} : vector<1x8xf32> to vector<1x2xf32>
    %cst_90 = arith.constant 9.99999974E-6 : f32
    %271 = vector.broadcast %cst_90 : f32 to vector<1x1xf32>
    %272 = arith.addf %269, %271 : vector<1x1xf32>
    %273 = math.rsqrt %272 : vector<1x1xf32>
    %274 = vector.broadcast %273 : vector<1x1xf32> to vector<1x2xf32>
    %275 = arith.mulf %270, %274 : vector<1x2xf32>
    %276 = vector.extract_strided_slice %186 {offsets = [0, 6], sizes = [1, 2], strides = [1, 1]} : vector<1x8xf32> to vector<1x2xf32>
    %277 = vector.broadcast %262 : vector<1x1xf32> to vector<1x2xf32>
    %278 = arith.mulf %277, %275 : vector<1x2xf32>
    %279 = arith.subf %276, %278 : vector<1x2xf32>
    %280 = tpu.concatenate %209, %231, %253, %275 in 1 : vector<1x2xf32>, vector<1x2xf32>, vector<1x2xf32>, vector<1x2xf32> -> vector<1x8xf32>
    %281 = tpu.concatenate %213, %235, %257, %279 in 1 : vector<1x2xf32>, vector<1x2xf32>, vector<1x2xf32>, vector<1x2xf32> -> vector<1x8xf32>
    %282 = vector.broadcast %280 : vector<1x8xf32> to vector<256x8xf32>
    %283 = arith.mulf %184, %282 : vector<256x8xf32>
    %284 = vector.broadcast %281 : vector<1x8xf32> to vector<256x8xf32>
    %285 = arith.addf %283, %284 : vector<256x8xf32>
    %286 = arith.truncf %285 : vector<256x8xf32> to vector<256x8xbf16>
    %c0_91 = arith.constant 0 : index
    %c0_92 = arith.constant 0 : index
    %287 = vector.load %arg10[%c0_91, %c0_92] : memref<8x32xbf16, #tpu.memory_space<vmem>>, vector<8x32xbf16>
    %cst_93 = arith.constant dense<0.000000e+00> : vector<256x32xf32>
    %288 = tpu.matmul %286, %287, %cst_93 {dimension_numbers = #tpu.dot_dimension_numbers<[1], [0], [0], [1], [0, 0, 1, 1], [], []>} : vector<256x8xbf16>, vector<8x32xbf16>, vector<256x32xf32> -> vector<256x32xf32>
    %c0_94 = arith.constant 0 : index
    %c0_95 = arith.constant 0 : index
    %289 = vector.load %arg11[%c0_94, %c0_95] : memref<1x32xf32, #tpu.memory_space<vmem>>, vector<1x32xf32>
    %c0_96 = arith.constant 0 : index
    %c0_97 = arith.constant 0 : index
    %290 = vector.load %arg12[%c0_96, %c0_97] : memref<1x32xf32, #tpu.memory_space<vmem>>, vector<1x32xf32>
    %cst_98 = arith.constant dense<0.000000e+00> : vector<32xf32>
    %291 = vector.multi_reduction <add>, %288, %cst_98 [0] : vector<256x32xf32> to vector<32xf32>
    %292 = vector.shape_cast %291 : vector<32xf32> to vector<1x32xf32>
    %293 = arith.mulf %288, %288 : vector<256x32xf32>
    %cst_99 = arith.constant dense<0.000000e+00> : vector<32xf32>
    %294 = vector.multi_reduction <add>, %293, %cst_99 [0] : vector<256x32xf32> to vector<32xf32>
    %295 = vector.shape_cast %294 : vector<32xf32> to vector<1x32xf32>
    %296 = vector.extract_strided_slice %292 {offsets = [0, 0], sizes = [1, 8], strides = [1, 1]} : vector<1x32xf32> to vector<1x8xf32>
    %cst_100 = arith.constant dense<0.000000e+00> : vector<1xf32>
    %297 = vector.multi_reduction <add>, %296, %cst_100 [1] : vector<1x8xf32> to vector<1xf32>
    %298 = vector.shape_cast %297 : vector<1xf32> to vector<1x1xf32>
    %cst_101 = arith.constant 4.8828125E-4 : f32
    %299 = vector.broadcast %cst_101 : f32 to vector<1x1xf32>
    %300 = arith.mulf %298, %299 : vector<1x1xf32>
    %301 = vector.extract_strided_slice %295 {offsets = [0, 0], sizes = [1, 8], strides = [1, 1]} : vector<1x32xf32> to vector<1x8xf32>
    %cst_102 = arith.constant dense<0.000000e+00> : vector<1xf32>
    %302 = vector.multi_reduction <add>, %301, %cst_102 [1] : vector<1x8xf32> to vector<1xf32>
    %303 = vector.shape_cast %302 : vector<1xf32> to vector<1x1xf32>
    %cst_103 = arith.constant 4.8828125E-4 : f32
    %304 = vector.broadcast %cst_103 : f32 to vector<1x1xf32>
    %305 = arith.mulf %303, %304 : vector<1x1xf32>
    %306 = arith.mulf %300, %300 : vector<1x1xf32>
    %307 = arith.subf %305, %306 : vector<1x1xf32>
    %308 = vector.extract_strided_slice %289 {offsets = [0, 0], sizes = [1, 8], strides = [1, 1]} : vector<1x32xf32> to vector<1x8xf32>
    %cst_104 = arith.constant 9.99999974E-6 : f32
    %309 = vector.broadcast %cst_104 : f32 to vector<1x1xf32>
    %310 = arith.addf %307, %309 : vector<1x1xf32>
    %311 = math.rsqrt %310 : vector<1x1xf32>
    %312 = vector.broadcast %311 : vector<1x1xf32> to vector<1x8xf32>
    %313 = arith.mulf %308, %312 : vector<1x8xf32>
    %314 = vector.extract_strided_slice %290 {offsets = [0, 0], sizes = [1, 8], strides = [1, 1]} : vector<1x32xf32> to vector<1x8xf32>
    %315 = vector.broadcast %300 : vector<1x1xf32> to vector<1x8xf32>
    %316 = arith.mulf %315, %313 : vector<1x8xf32>
    %317 = arith.subf %314, %316 : vector<1x8xf32>
    %318 = vector.extract_strided_slice %292 {offsets = [0, 8], sizes = [1, 8], strides = [1, 1]} : vector<1x32xf32> to vector<1x8xf32>
    %cst_105 = arith.constant dense<0.000000e+00> : vector<1xf32>
    %319 = vector.multi_reduction <add>, %318, %cst_105 [1] : vector<1x8xf32> to vector<1xf32>
    %320 = vector.shape_cast %319 : vector<1xf32> to vector<1x1xf32>
    %cst_106 = arith.constant 4.8828125E-4 : f32
    %321 = vector.broadcast %cst_106 : f32 to vector<1x1xf32>
    %322 = arith.mulf %320, %321 : vector<1x1xf32>
    %323 = vector.extract_strided_slice %295 {offsets = [0, 8], sizes = [1, 8], strides = [1, 1]} : vector<1x32xf32> to vector<1x8xf32>
    %cst_107 = arith.constant dense<0.000000e+00> : vector<1xf32>
    %324 = vector.multi_reduction <add>, %323, %cst_107 [1] : vector<1x8xf32> to vector<1xf32>
    %325 = vector.shape_cast %324 : vector<1xf32> to vector<1x1xf32>
    %cst_108 = arith.constant 4.8828125E-4 : f32
    %326 = vector.broadcast %cst_108 : f32 to vector<1x1xf32>
    %327 = arith.mulf %325, %326 : vector<1x1xf32>
    %328 = arith.mulf %322, %322 : vector<1x1xf32>
    %329 = arith.subf %327, %328 : vector<1x1xf32>
    %330 = vector.extract_strided_slice %289 {offsets = [0, 8], sizes = [1, 8], strides = [1, 1]} : vector<1x32xf32> to vector<1x8xf32>
    %cst_109 = arith.constant 9.99999974E-6 : f32
    %331 = vector.broadcast %cst_109 : f32 to vector<1x1xf32>
    %332 = arith.addf %329, %331 : vector<1x1xf32>
    %333 = math.rsqrt %332 : vector<1x1xf32>
    %334 = vector.broadcast %333 : vector<1x1xf32> to vector<1x8xf32>
    %335 = arith.mulf %330, %334 : vector<1x8xf32>
    %336 = vector.extract_strided_slice %290 {offsets = [0, 8], sizes = [1, 8], strides = [1, 1]} : vector<1x32xf32> to vector<1x8xf32>
    %337 = vector.broadcast %322 : vector<1x1xf32> to vector<1x8xf32>
    %338 = arith.mulf %337, %335 : vector<1x8xf32>
    %339 = arith.subf %336, %338 : vector<1x8xf32>
    %340 = vector.extract_strided_slice %292 {offsets = [0, 16], sizes = [1, 8], strides = [1, 1]} : vector<1x32xf32> to vector<1x8xf32>
    %cst_110 = arith.constant dense<0.000000e+00> : vector<1xf32>
    %341 = vector.multi_reduction <add>, %340, %cst_110 [1] : vector<1x8xf32> to vector<1xf32>
    %342 = vector.shape_cast %341 : vector<1xf32> to vector<1x1xf32>
    %cst_111 = arith.constant 4.8828125E-4 : f32
    %343 = vector.broadcast %cst_111 : f32 to vector<1x1xf32>
    %344 = arith.mulf %342, %343 : vector<1x1xf32>
    %345 = vector.extract_strided_slice %295 {offsets = [0, 16], sizes = [1, 8], strides = [1, 1]} : vector<1x32xf32> to vector<1x8xf32>
    %cst_112 = arith.constant dense<0.000000e+00> : vector<1xf32>
    %346 = vector.multi_reduction <add>, %345, %cst_112 [1] : vector<1x8xf32> to vector<1xf32>
    %347 = vector.shape_cast %346 : vector<1xf32> to vector<1x1xf32>
    %cst_113 = arith.constant 4.8828125E-4 : f32
    %348 = vector.broadcast %cst_113 : f32 to vector<1x1xf32>
    %349 = arith.mulf %347, %348 : vector<1x1xf32>
    %350 = arith.mulf %344, %344 : vector<1x1xf32>
    %351 = arith.subf %349, %350 : vector<1x1xf32>
    %352 = vector.extract_strided_slice %289 {offsets = [0, 16], sizes = [1, 8], strides = [1, 1]} : vector<1x32xf32> to vector<1x8xf32>
    %cst_114 = arith.constant 9.99999974E-6 : f32
    %353 = vector.broadcast %cst_114 : f32 to vector<1x1xf32>
    %354 = arith.addf %351, %353 : vector<1x1xf32>
    %355 = math.rsqrt %354 : vector<1x1xf32>
    %356 = vector.broadcast %355 : vector<1x1xf32> to vector<1x8xf32>
    %357 = arith.mulf %352, %356 : vector<1x8xf32>
    %358 = vector.extract_strided_slice %290 {offsets = [0, 16], sizes = [1, 8], strides = [1, 1]} : vector<1x32xf32> to vector<1x8xf32>
    %359 = vector.broadcast %344 : vector<1x1xf32> to vector<1x8xf32>
    %360 = arith.mulf %359, %357 : vector<1x8xf32>
    %361 = arith.subf %358, %360 : vector<1x8xf32>
    %362 = vector.extract_strided_slice %292 {offsets = [0, 24], sizes = [1, 8], strides = [1, 1]} : vector<1x32xf32> to vector<1x8xf32>
    %cst_115 = arith.constant dense<0.000000e+00> : vector<1xf32>
    %363 = vector.multi_reduction <add>, %362, %cst_115 [1] : vector<1x8xf32> to vector<1xf32>
    %364 = vector.shape_cast %363 : vector<1xf32> to vector<1x1xf32>
    %cst_116 = arith.constant 4.8828125E-4 : f32
    %365 = vector.broadcast %cst_116 : f32 to vector<1x1xf32>
    %366 = arith.mulf %364, %365 : vector<1x1xf32>
    %367 = vector.extract_strided_slice %295 {offsets = [0, 24], sizes = [1, 8], strides = [1, 1]} : vector<1x32xf32> to vector<1x8xf32>
    %cst_117 = arith.constant dense<0.000000e+00> : vector<1xf32>
    %368 = vector.multi_reduction <add>, %367, %cst_117 [1] : vector<1x8xf32> to vector<1xf32>
    %369 = vector.shape_cast %368 : vector<1xf32> to vector<1x1xf32>
    %cst_118 = arith.constant 4.8828125E-4 : f32
    %370 = vector.broadcast %cst_118 : f32 to vector<1x1xf32>
    %371 = arith.mulf %369, %370 : vector<1x1xf32>
    %372 = arith.mulf %366, %366 : vector<1x1xf32>
    %373 = arith.subf %371, %372 : vector<1x1xf32>
    %374 = vector.extract_strided_slice %289 {offsets = [0, 24], sizes = [1, 8], strides = [1, 1]} : vector<1x32xf32> to vector<1x8xf32>
    %cst_119 = arith.constant 9.99999974E-6 : f32
    %375 = vector.broadcast %cst_119 : f32 to vector<1x1xf32>
    %376 = arith.addf %373, %375 : vector<1x1xf32>
    %377 = math.rsqrt %376 : vector<1x1xf32>
    %378 = vector.broadcast %377 : vector<1x1xf32> to vector<1x8xf32>
    %379 = arith.mulf %374, %378 : vector<1x8xf32>
    %380 = vector.extract_strided_slice %290 {offsets = [0, 24], sizes = [1, 8], strides = [1, 1]} : vector<1x32xf32> to vector<1x8xf32>
    %381 = vector.broadcast %366 : vector<1x1xf32> to vector<1x8xf32>
    %382 = arith.mulf %381, %379 : vector<1x8xf32>
    %383 = arith.subf %380, %382 : vector<1x8xf32>
    %384 = tpu.concatenate %313, %335, %357, %379 in 1 : vector<1x8xf32>, vector<1x8xf32>, vector<1x8xf32>, vector<1x8xf32> -> vector<1x32xf32>
    %385 = tpu.concatenate %317, %339, %361, %383 in 1 : vector<1x8xf32>, vector<1x8xf32>, vector<1x8xf32>, vector<1x8xf32> -> vector<1x32xf32>
    %386 = vector.broadcast %384 : vector<1x32xf32> to vector<256x32xf32>
    %387 = arith.mulf %288, %386 : vector<256x32xf32>
    %388 = vector.broadcast %385 : vector<1x32xf32> to vector<256x32xf32>
    %389 = arith.addf %387, %388 : vector<256x32xf32>
    %c0_120 = arith.constant 0 : index
    %c0_121 = arith.constant 0 : index
    %c0_122 = arith.constant 0 : index
    %390 = vector.load %arg1[%c0_120, %c0_121, %c0_122] : memref<1x256x32xf32, #tpu.memory_space<vmem>>, vector<1x256x32xf32>
    %391 = vector.shape_cast %390 : vector<1x256x32xf32> to vector<256x32xf32>
    %392 = vector.broadcast %17 : vector<1x32xf32> to vector<256x32xf32>
    %393 = arith.mulf %391, %392 : vector<256x32xf32>
    %394 = vector.broadcast %20 : vector<1x32xf32> to vector<256x32xf32>
    %395 = arith.addf %393, %394 : vector<256x32xf32>
    %cst_123 = arith.constant 0.000000e+00 : f32
    %396 = vector.broadcast %cst_123 : f32 to vector<256x32xf32>
    %397 = arith.maximumf %395, %396 : vector<256x32xf32>
    %398 = arith.addf %389, %397 : vector<256x32xf32>
    %cst_124 = arith.constant 0.000000e+00 : f32
    %399 = vector.broadcast %cst_124 : f32 to vector<256x32xf32>
    %400 = arith.maximumf %398, %399 : vector<256x32xf32>
    %401 = arith.truncf %400 : vector<256x32xf32> to vector<256x32xbf16>
    %c0_125 = arith.constant 0 : index
    %c0_126 = arith.constant 0 : index
    %c0_127 = arith.constant 0 : index
    %402 = vector.load %arg13[%c0_125, %c0_126, %c0_127] : memref<1x256x32xbf16, #tpu.memory_space<vmem>>, vector<1x256x32xbf16>
    %403 = vector.shape_cast %402 : vector<1x256x32xbf16> to vector<256x32xbf16>
    %404 = vector.shape_cast %401 : vector<256x32xbf16> to vector<1x256x32xbf16>
    tpu.vector_store %arg13[%c0_125, %c0_126, %c0_127], %404 {strides = array<i32>} : memref<1x256x32xbf16, #tpu.memory_space<vmem>>, vector<1x256x32xbf16>,
    return
  }
  func.func @transform_0(%arg0: i32) -> (i32, i32, i32) {
    %c0_i32 = arith.constant 0 : i32
    %c0_i32_0 = arith.constant 0 : i32
    %c0_i32_1 = arith.constant 0 : i32
    return %arg0, %c0_i32, %c0_i32_0 : i32, i32, i32
  }
  func.func @transform_1(%arg0: i32) -> (i32, i32) {
    %c0_i32 = arith.constant 0 : i32
    %c0_i32_0 = arith.constant 0 : i32
    %c0_i32_1 = arith.constant 0 : i32
    return %c0_i32, %c0_i32_0 : i32, i32
  }
  func.func @transform_2(%arg0: i32) -> (i32, i32) {
    %c0_i32 = arith.constant 0 : i32
    %c0_i32_0 = arith.constant 0 : i32
    %c0_i32_1 = arith.constant 0 : i32
    return %c0_i32, %c0_i32_0 : i32, i32
  }
  func.func @transform_3(%arg0: i32) -> (i32, i32) {
    %c0_i32 = arith.constant 0 : i32
    %c0_i32_0 = arith.constant 0 : i32
    %c0_i32_1 = arith.constant 0 : i32
    return %c0_i32, %c0_i32_0 : i32, i32
  }
  func.func @transform_4(%arg0: i32) -> (i32, i32) {
    %c0_i32 = arith.constant 0 : i32
    %c0_i32_0 = arith.constant 0 : i32
    %c0_i32_1 = arith.constant 0 : i32
    return %c0_i32, %c0_i32_0 : i32, i32
  }
  func.func @transform_5(%arg0: i32) -> (i32, i32) {
    %c0_i32 = arith.constant 0 : i32
    %c0_i32_0 = arith.constant 0 : i32
    %c0_i32_1 = arith.constant 0 : i32
    return %c0_i32, %c0_i32_0 : i32, i32
  }
  func.func @transform_6(%arg0: i32) -> (i32, i32, i32) {
    %c0_i32 = arith.constant 0 : i32
    %c0_i32_0 = arith.constant 0 : i32
    %c0_i32_1 = arith.constant 0 : i32
    %c0_i32_2 = arith.constant 0 : i32
    return %c0_i32, %c0_i32_0, %c0_i32_1 : i32, i32, i32
  }
  func.func @transform_7(%arg0: i32) -> (i32, i32) {
    %c0_i32 = arith.constant 0 : i32
    %c0_i32_0 = arith.constant 0 : i32
    %c0_i32_1 = arith.constant 0 : i32
    return %c0_i32, %c0_i32_0 : i32, i32
  }
  func.func @transform_8(%arg0: i32) -> (i32, i32) {
    %c0_i32 = arith.constant 0 : i32
    %c0_i32_0 = arith.constant 0 : i32
    %c0_i32_1 = arith.constant 0 : i32
    return %c0_i32, %c0_i32_0 : i32, i32
  }
  func.func @transform_9(%arg0: i32) -> (i32, i32) {
    %c0_i32 = arith.constant 0 : i32
    %c0_i32_0 = arith.constant 0 : i32
    %c0_i32_1 = arith.constant 0 : i32
    return %c0_i32, %c0_i32_0 : i32, i32
  }
  func.func @transform_10(%arg0: i32) -> (i32, i32) {
    %c0_i32 = arith.constant 0 : i32
    %c0_i32_0 = arith.constant 0 : i32
    %c0_i32_1 = arith.constant 0 : i32
    return %c0_i32, %c0_i32_0 : i32, i32
  }
  func.func @transform_11(%arg0: i32) -> (i32, i32) {
    %c0_i32 = arith.constant 0 : i32
    %c0_i32_0 = arith.constant 0 : i32
    %c0_i32_1 = arith.constant 0 : i32
    return %c0_i32, %c0_i32_0 : i32, i32
  }
  func.func @transform_12(%arg0: i32) -> (i32, i32, i32) {
    %c0_i32 = arith.constant 0 : i32
    %c0_i32_0 = arith.constant 0 : i32
    %c0_i32_1 = arith.constant 0 : i32
    return %arg0, %c0_i32, %c0_i32_0 : i32, i32, i32
  }
}

</mosaic_0001>

<llo_original>
// kernel: tpu_custom_call.1
$region0: #{tpu_custom_call.1}
  #allocation0 [shape = 'u32[]', space=smem, size = 0x4, offset = 0x4, fixed_abs, tag = 'smem constant byte address 0x4 - core index']
  #allocation1 [shape = 'u32[144,128]{1,0:T(1,128)}', space=vmem, size = 0x12000, scoped, tag = 'internal scratch']
  #allocation2 [shape = 'bf16[288,24]{1,0:T(16,128)(2,1)}', space=vmem, size = 0x12000, scoped, tag = 'scratch operand']
  %s0 = inlined_call_operand.vmem [shape: f32[2,256,32], index: 0, kind: input, shape index: {}]
  %s1 = inlined_call_operand.vmem [shape: f32[1,32], index: 1, kind: input, shape index: {}]
  %s2 = inlined_call_operand.vmem [shape: f32[1,32], index: 2, kind: input, shape index: {}]
  %s3 = inlined_call_operand.vmem [shape: bf16[32,8], index: 3, kind: input, shape index: {}]
  %s4 = inlined_call_operand.vmem [shape: f32[1,8], index: 4, kind: input, shape index: {}]
  %s5 = inlined_call_operand.vmem [shape: f32[1,8], index: 5, kind: input, shape index: {}]
  %s6 = inlined_call_operand.vmem [shape: bf16[3,24,8], index: 6, kind: input, shape index: {}]
  %s7 = inlined_call_operand.vmem [shape: f32[1,8], index: 7, kind: input, shape index: {}]
  %s8 = inlined_call_operand.vmem [shape: f32[1,8], index: 8, kind: input, shape index: {}]
  %s9 = inlined_call_operand.vmem [shape: bf16[8,32], index: 9, kind: input, shape index: {}]
  %s10 = inlined_call_operand.vmem [shape: f32[1,32], index: 10, kind: input, shape index: {}]
  %s11 = inlined_call_operand.vmem [shape: f32[1,32], index: 11, kind: input, shape index: {}]
  %s12 = inlined_call_operand.vmem [shape: bf16[2,256,32], index: 12, kind: output, shape index: {}]
  %s13 = sld [smem:[#allocation0]]
  $region81: #{tpu_custom_call.1} parent=0
    _
  %s15 = ssub.s32 1, %s13
  %s16 = scalar_select 0, %s15, %s13
  loop: start=0, step=1, limit=4
  $region2: #{tpu_custom_call.1} parent=0 // loop_pre_header
    _
  $region3: #{tpu_custom_call.1} parent=0 // loop_header
    %s18 = sphi 0, %s22
    %p19 = scmp.ge.s32.totalorder %s18, 4
    %s28 = sphi 0, %s30
    %s31 = sphi 0, %s28
    %s32 = sphi 0, %s31
    %s48 = sphi 0, %s32
    %s52 = sphi 0, %s52
    %s54 = sphi 0, %s52
    %s55 = sphi 0, %s54
    %s69 = sphi 0, %s55
    %s73 = sphi 0, %s73
    %s75 = sphi 0, %s73
    %s76 = sphi 0, %s75
    %s90 = sphi 0, %s76
    %s94 = sphi 0, %s94
    %s96 = sphi 0, %s94
    %s97 = sphi 0, %s96
    %s111 = sphi 0, %s97
    %s115 = sphi 0, %s115
    %s117 = sphi 0, %s115
    %s118 = sphi 0, %s117
    %s132 = sphi 0, %s118
    %s136 = sphi 0, %s136
    %s138 = sphi 0, %s136
    %s139 = sphi 0, %s138
    %s153 = sphi 0, %s139
    %s157 = sphi 0, %s157
    %s159 = sphi 0, %s157
    %s160 = sphi 0, %s159
    %s174 = sphi 0, %s160
    %s178 = sphi 0, %s178
    %s180 = sphi 0, %s178
    %s181 = sphi 0, %s180
    %s195 = sphi 0, %s181
    %s199 = sphi 0, %s199
    %s201 = sphi 0, %s199
    %s202 = sphi 0, %s201
    %s216 = sphi 0, %s202
    %s220 = sphi 0, %s220
    %s222 = sphi 0, %s220
    %s223 = sphi 0, %s222
    %s237 = sphi 0, %s223
    %s241 = sphi 0, %s241
    %s243 = sphi 0, %s241
    %s244 = sphi 0, %s243
    %s258 = sphi 0, %s244
    %s262 = sphi 0, %s262
    %s264 = sphi 0, %s262
    %s265 = sphi 0, %s264
    %s279 = sphi 0, %s265
    %s285 = sphi 0, %s287
    %s288 = sphi 0, %s285
    %s289 = sphi 0, %s288
    %s305 = sphi 0, %s289
  $region4: #{tpu_custom_call.1} parent=0 // loop_header_branch
    %21 = sbr.rel (%p19) target = $region8
  $region5: #{tpu_custom_call.1} parent=0 // loop_body
    %s23 = ssub.s32 %s18, 1
    %s24 = ssub.s32 %s18, 2
    %s25 = sadd.s32 %s18, 1
    %s26 = ssub.s32 %s18, %s25
    %p27 = scmp.eq.s32.totalorder %s26, 0
    %s29 = sadd.s32 %s28, 1
    %s30 = scalar_select %p27, %s28, %s29
    %p33 = pneg %p27
    %p34 = scmp.eq.s32.totalorder %s18, 1
    %p35 = por %p33, %p34
    %p36 = scmp.ne.s32.totalorder %s28, %s31
    %p37 = scmp.eq.s32.totalorder %s18, 0
    %p38 = por %p36, %p37
    %p39 = scmp.ne.s32.totalorder %s28, %s31
    %p40 = scmp.eq.s32.totalorder %s23, 1
    %p41 = por %p39, %p40
    %p42 = scmp.ne.s32.totalorder %s31, %s32
    %p43 = scmp.eq.s32.totalorder %s23, 0
    %p44 = por %p42, %p43
    %p45 = scmp.ne.s32.totalorder %s31, %s32
    %p46 = scmp.eq.s32.totalorder %s24, 1
    %p47 = por %p45, %p46
    %p49 = scmp.ne.s32.totalorder %s32, %s48
    %p50 = scmp.eq.s32.totalorder %s24, 0
    %p51 = por %p49, %p50
    %s53 = sadd.s32 %s52, 1
    %p56 = scmp.eq.s32.totalorder %s18, 1
    %p57 = scmp.ne.s32.totalorder %s52, %s54
    %p58 = scmp.eq.s32.totalorder %s18, 0
    %p59 = por %p57, %p58
    %p60 = scmp.ne.s32.totalorder %s52, %s54
    %p61 = scmp.eq.s32.totalorder %s23, 1
    %p62 = por %p60, %p61
    %p63 = scmp.ne.s32.totalorder %s54, %s55
    %p64 = scmp.eq.s32.totalorder %s23, 0
    %p65 = por %p63, %p64
    %p66 = scmp.ne.s32.totalorder %s54, %s55
    %p67 = scmp.eq.s32.totalorder %s24, 1
    %p68 = por %p66, %p67
    %p70 = scmp.ne.s32.totalorder %s55, %s69
    %p71 = scmp.eq.s32.totalorder %s24, 0
    %p72 = por %p70, %p71
    %s74 = sadd.s32 %s73, 1
    %p77 = scmp.eq.s32.totalorder %s18, 1
    %p78 = scmp.ne.s32.totalorder %s73, %s75
    %p79 = scmp.eq.s32.totalorder %s18, 0
    %p80 = por %p78, %p79
    %p81 = scmp.ne.s32.totalorder %s73, %s75
    %p82 = scmp.eq.s32.totalorder %s23, 1
    %p83 = por %p81, %p82
    %p84 = scmp.ne.s32.totalorder %s75, %s76
    %p85 = scmp.eq.s32.totalorder %s23, 0
    %p86 = por %p84, %p85
    %p87 = scmp.ne.s32.totalorder %s75, %s76
    %p88 = scmp.eq.s32.totalorder %s24, 1
    %p89 = por %p87, %p88
    %p91 = scmp.ne.s32.totalorder %s76, %s90
    %p92 = scmp.eq.s32.totalorder %s24, 0
    %p93 = por %p91, %p92
    %s95 = sadd.s32 %s94, 1
    %p98 = scmp.eq.s32.totalorder %s18, 1
    %p99 = scmp.ne.s32.totalorder %s94, %s96
    %p100 = scmp.eq.s32.totalorder %s18, 0
    %p101 = por %p99, %p100
    %p102 = scmp.ne.s32.totalorder %s94, %s96
    %p103 = scmp.eq.s32.totalorder %s23, 1
    %p104 = por %p102, %p103
    %p105 = scmp.ne.s32.totalorder %s96, %s97
    %p106 = scmp.eq.s32.totalorder %s23, 0
    %p107 = por %p105, %p106
    %p108 = scmp.ne.s32.totalorder %s96, %s97
    %p109 = scmp.eq.s32.totalorder %s24, 1
    %p110 = por %p108, %p109
    %p112 = scmp.ne.s32.totalorder %s97, %s111
    %p113 = scmp.eq.s32.totalorder %s24, 0
    %p114 = por %p112, %p113
    %s116 = sadd.s32 %s115, 1
    %p119 = scmp.eq.s32.totalorder %s18, 1
    %p120 = scmp.ne.s32.totalorder %s115, %s117
    %p121 = scmp.eq.s32.totalorder %s18, 0
    %p122 = por %p120, %p121
    %p123 = scmp.ne.s32.totalorder %s115, %s117
    %p124 = scmp.eq.s32.totalorder %s23, 1
    %p125 = por %p123, %p124
    %p126 = scmp.ne.s32.totalorder %s117, %s118
    %p127 = scmp.eq.s32.totalorder %s23, 0
    %p128 = por %p126, %p127
    %p129 = scmp.ne.s32.totalorder %s117, %s118
    %p130 = scmp.eq.s32.totalorder %s24, 1
    %p131 = por %p129, %p130
    %p133 = scmp.ne.s32.totalorder %s118, %s132
    %p134 = scmp.eq.s32.totalorder %s24, 0
    %p135 = por %p133, %p134
    %s137 = sadd.s32 %s136, 1
    %p140 = scmp.eq.s32.totalorder %s18, 1
    %p141 = scmp.ne.s32.totalorder %s136, %s138
    %p142 = scmp.eq.s32.totalorder %s18, 0
    %p143 = por %p141, %p142
    %p144 = scmp.ne.s32.totalorder %s136, %s138
    %p145 = scmp.eq.s32.totalorder %s23, 1
    %p146 = por %p144, %p145
    %p147 = scmp.ne.s32.totalorder %s138, %s139
    %p148 = scmp.eq.s32.totalorder %s23, 0
    %p149 = por %p147, %p148
    %p150 = scmp.ne.s32.totalorder %s138, %s139
    %p151 = scmp.eq.s32.totalorder %s24, 1
    %p152 = por %p150, %p151
    %p154 = scmp.ne.s32.totalorder %s139, %s153
    %p155 = scmp.eq.s32.totalorder %s24, 0
    %p156 = por %p154, %p155
    %s158 = sadd.s32 %s157, 1
    %p161 = scmp.eq.s32.totalorder %s18, 1
    %p162 = scmp.ne.s32.totalorder %s157, %s159
    %p163 = scmp.eq.s32.totalorder %s18, 0
    %p164 = por %p162, %p163
    %p165 = scmp.ne.s32.totalorder %s157, %s159
    %p166 = scmp.eq.s32.totalorder %s23, 1
    %p167 = por %p165, %p166
    %p168 = scmp.ne.s32.totalorder %s159, %s160
    %p169 = scmp.eq.s32.totalorder %s23, 0
    %p170 = por %p168, %p169
    %p171 = scmp.ne.s32.totalorder %s159, %s160
    %p172 = scmp.eq.s32.totalorder %s24, 1
    %p173 = por %p171, %p172
    %p175 = scmp.ne.s32.totalorder %s160, %s174
    %p176 = scmp.eq.s32.totalorder %s24, 0
    %p177 = por %p175, %p176
    %s179 = sadd.s32 %s178, 1
    %p182 = scmp.eq.s32.totalorder %s18, 1
    %p183 = scmp.ne.s32.totalorder %s178, %s180
    %p184 = scmp.eq.s32.totalorder %s18, 0
    %p185 = por %p183, %p184
    %p186 = scmp.ne.s32.totalorder %s178, %s180
    %p187 = scmp.eq.s32.totalorder %s23, 1
    %p188 = por %p186, %p187
    %p189 = scmp.ne.s32.totalorder %s180, %s181
    %p190 = scmp.eq.s32.totalorder %s23, 0
    %p191 = por %p189, %p190
    %p192 = scmp.ne.s32.totalorder %s180, %s181
    %p193 = scmp.eq.s32.totalorder %s24, 1
    %p194 = por %p192, %p193
    %p196 = scmp.ne.s32.totalorder %s181, %s195
    %p197 = scmp.eq.s32.totalorder %s24, 0
    %p198 = por %p196, %p197
    %s200 = sadd.s32 %s199, 1
    %p203 = scmp.eq.s32.totalorder %s18, 1
    %p204 = scmp.ne.s32.totalorder %s199, %s201
    %p205 = scmp.eq.s32.totalorder %s18, 0
    %p206 = por %p204, %p205
    %p207 = scmp.ne.s32.totalorder %s199, %s201
    %p208 = scmp.eq.s32.totalorder %s23, 1
    %p209 = por %p207, %p208
    %p210 = scmp.ne.s32.totalorder %s201, %s202
    %p211 = scmp.eq.s32.totalorder %s23, 0
    %p212 = por %p210, %p211
    %p213 = scmp.ne.s32.totalorder %s201, %s202
    %p214 = scmp.eq.s32.totalorder %s24, 1
    %p215 = por %p213, %p214
    %p217 = scmp.ne.s32.totalorder %s202, %s216
    %p218 = scmp.eq.s32.totalorder %s24, 0
    %p219 = por %p217, %p218
    %s221 = sadd.s32 %s220, 1
    %p224 = scmp.eq.s32.totalorder %s18, 1
    %p225 = scmp.ne.s32.totalorder %s220, %s222
    %p226 = scmp.eq.s32.totalorder %s18, 0
    %p227 = por %p225, %p226
    %p228 = scmp.ne.s32.totalorder %s220, %s222
    %p229 = scmp.eq.s32.totalorder %s23, 1
    %p230 = por %p228, %p229
    %p231 = scmp.ne.s32.totalorder %s222, %s223
    %p232 = scmp.eq.s32.totalorder %s23, 0
    %p233 = por %p231, %p232
    %p234 = scmp.ne.s32.totalorder %s222, %s223
    %p235 = scmp.eq.s32.totalorder %s24, 1
    %p236 = por %p234, %p235
    %p238 = scmp.ne.s32.totalorder %s223, %s237
    %p239 = scmp.eq.s32.totalorder %s24, 0
    %p240 = por %p238, %p239
    %s242 = sadd.s32 %s241, 1
    %p245 = scmp.eq.s32.totalorder %s18, 1
    %p246 = scmp.ne.s32.totalorder %s241, %s243
    %p247 = scmp.eq.s32.totalorder %s18, 0
    %p248 = por %p246, %p247
    %p249 = scmp.ne.s32.totalorder %s241, %s243
    %p250 = scmp.eq.s32.totalorder %s23, 1
    %p251 = por %p249, %p250
    %p252 = scmp.ne.s32.totalorder %s243, %s244
    %p253 = scmp.eq.s32.totalorder %s23, 0
    %p254 = por %p252, %p253
    %p255 = scmp.ne.s32.totalorder %s243, %s244
    %p256 = scmp.eq.s32.totalorder %s24, 1
    %p257 = por %p255, %p256
    %p259 = scmp.ne.s32.totalorder %s244, %s258
    %p260 = scmp.eq.s32.totalorder %s24, 0
    %p261 = por %p259, %p260
    %s263 = sadd.s32 %s262, 1
    %p266 = scmp.eq.s32.totalorder %s18, 1
    %p267 = scmp.ne.s32.totalorder %s262, %s264
    %p268 = scmp.eq.s32.totalorder %s18, 0
    %p269 = por %p267, %p268
    %p270 = scmp.ne.s32.totalorder %s262, %s264
    %p271 = scmp.eq.s32.totalorder %s23, 1
    %p272 = por %p270, %p271
    %p273 = scmp.ne.s32.totalorder %s264, %s265
    %p274 = scmp.eq.s32.totalorder %s23, 0
    %p275 = por %p273, %p274
    %p276 = scmp.ne.s32.totalorder %s264, %s265
    %p277 = scmp.eq.s32.totalorder %s24, 1
    %p278 = por %p276, %p277
    %p280 = scmp.ne.s32.totalorder %s265, %s279
    %p281 = scmp.eq.s32.totalorder %s24, 0
    %p282 = por %p280, %p281
    %s283 = ssub.s32 %s18, %s25
    %p284 = scmp.eq.s32.totalorder %s283, 0
    %s286 = sadd.s32 %s285, 1
    %s287 = scalar_select %p284, %s285, %s286
    %p290 = pneg %p284
    %p291 = scmp.eq.s32.totalorder %s18, 1
    %p292 = por %p290, %p291
    %p293 = scmp.ne.s32.totalorder %s285, %s288
    %p294 = scmp.eq.s32.totalorder %s18, 0
    %p295 = por %p293, %p294
    %p296 = scmp.ne.s32.totalorder %s285, %s288
    %p297 = scmp.eq.s32.totalorder %s23, 1
    %p298 = por %p296, %p297
    %p299 = scmp.ne.s32.totalorder %s288, %s289
    %p300 = scmp.eq.s32.totalorder %s23, 0
    %p301 = por %p299, %p300
    %p302 = scmp.ne.s32.totalorder %s288, %s289
    %p303 = scmp.eq.s32.totalorder %s24, 1
    %p304 = por %p302, %p303
    %p306 = scmp.ne.s32.totalorder %s289, %s305
    %p307 = scmp.eq.s32.totalorder %s24, 0
    %p308 = por %p306, %p307
    %p309 = scmp.le.s32.totalorder 1, %s18
    %p310 = scmp.lt.s32.totalorder %s18, 3
    %p311 = pnand %p309, %p310
    %p312 = pneg %p311
    // Predicated region
    $region9: #{tpu_custom_call.1} parent=5 // pred_check
      _
    $region10: #{tpu_custom_call.1} parent=5 // pred_check_branch
      %314 = sbr.rel (%p311) target = $region12
    $region11: #{tpu_custom_call.1} parent=5 // pred_region
      %s315 = ssub.s32 %s18, 1
      // Predicated region
      $region13: #{tpu_custom_call.1} parent=11 // pred_check
        %p316 = pneg %p65
      $region14: #{tpu_custom_call.1} parent=11 // pred_check_branch
        %318 = sbr.rel (%p316) target = $region16
      $region15: #{tpu_custom_call.1} parent=11 // pred_region
        _
      $region16: #{tpu_custom_call.1} parent=11 // pred_fallthru
        _
      // Predicated region
      $region17: #{tpu_custom_call.1} parent=11 // pred_check
        %p319 = pneg %p86
      $region18: #{tpu_custom_call.1} parent=11 // pred_check_branch
        %321 = sbr.rel (%p319) target = $region20
      $region19: #{tpu_custom_call.1} parent=11 // pred_region
        _
      $region20: #{tpu_custom_call.1} parent=11 // pred_fallthru
        _
      // Predicated region
      $region21: #{tpu_custom_call.1} parent=11 // pred_check
        %p322 = pneg %p107
      $region22: #{tpu_custom_call.1} parent=11 // pred_check_branch
        %324 = sbr.rel (%p322) target = $region24
      $region23: #{tpu_custom_call.1} parent=11 // pred_region
        _
      $region24: #{tpu_custom_call.1} parent=11 // pred_fallthru
        _
      // Predicated region
      $region25: #{tpu_custom_call.1} parent=11 // pred_check
        %p325 = pneg %p128
      $region26: #{tpu_custom_call.1} parent=11 // pred_check_branch
        %327 = sbr.rel (%p325) target = $region28
      $region27: #{tpu_custom_call.1} parent=11 // pred_region
        _
      $region28: #{tpu_custom_call.1} parent=11 // pred_fallthru
        _
      // Predicated region
      $region29: #{tpu_custom_call.1} parent=11 // pred_check
        %p328 = pneg %p149
      $region30: #{tpu_custom_call.1} parent=11 // pred_check_branch
        %330 = sbr.rel (%p328) target = $region32
      $region31: #{tpu_custom_call.1} parent=11 // pred_region
        _
      $region32: #{tpu_custom_call.1} parent=11 // pred_fallthru
        _
      // Predicated region
      $region33: #{tpu_custom_call.1} parent=11 // pred_check
        %p331 = pneg %p170
      $region34: #{tpu_custom_call.1} parent=11 // pred_check_branch
        %333 = sbr.rel (%p331) target = $region36
      $region35: #{tpu_custom_call.1} parent=11 // pred_region
        _
      $region36: #{tpu_custom_call.1} parent=11 // pred_fallthru
        _
      // Predicated region
      $region37: #{tpu_custom_call.1} parent=11 // pred_check
        %p334 = pneg %p191
      $region38: #{tpu_custom_call.1} parent=11 // pred_check_branch
        %336 = sbr.rel (%p334) target = $region40
      $region39: #{tpu_custom_call.1} parent=11 // pred_region
        _
      $region40: #{tpu_custom_call.1} parent=11 // pred_fallthru
        _
      // Predicated region
      $region41: #{tpu_custom_call.1} parent=11 // pred_check
        %p337 = pneg %p212
      $region42: #{tpu_custom_call.1} parent=11 // pred_check_branch
        %339 = sbr.rel (%p337) target = $region44
      $region43: #{tpu_custom_call.1} parent=11 // pred_region
        _
      $region44: #{tpu_custom_call.1} parent=11 // pred_fallthru
        _
      // Predicated region
      $region45: #{tpu_custom_call.1} parent=11 // pred_check
        %p340 = pneg %p233
      $region46: #{tpu_custom_call.1} parent=11 // pred_check_branch
        %342 = sbr.rel (%p340) target = $region48
      $region47: #{tpu_custom_call.1} parent=11 // pred_region
        _
      $region48: #{tpu_custom_call.1} parent=11 // pred_fallthru
        _
      // Predicated region
      $region49: #{tpu_custom_call.1} parent=11 // pred_check
        %p343 = pneg %p254
      $region50: #{tpu_custom_call.1} parent=11 // pred_check_branch
        %345 = sbr.rel (%p343) target = $region52
      $region51: #{tpu_custom_call.1} parent=11 // pred_region
        _
      $region52: #{tpu_custom_call.1} parent=11 // pred_fallthru
        _
      // Predicated region
      $region53: #{tpu_custom_call.1} parent=11 // pred_check
        %p346 = pneg %p275
      $region54: #{tpu_custom_call.1} parent=11 // pred_check_branch
        %348 = sbr.rel (%p346) target = $region56
      $region55: #{tpu_custom_call.1} parent=11 // pred_region
        _
      $region56: #{tpu_custom_call.1} parent=11 // pred_fallthru
        _
    $region12: #{tpu_custom_call.1} parent=5 // pred_fallthru
      _
    %p349 = scmp.lt.s32.totalorder %s18, 2
    // Predicated region
    $region57: #{tpu_custom_call.1} parent=5 // pred_check
      %p350 = pneg %p349
    $region58: #{tpu_custom_call.1} parent=5 // pred_check_branch
      %352 = sbr.rel (%p350) target = $region60
    $region59: #{tpu_custom_call.1} parent=5 // pred_region
      // Predicated region
      $region61: #{tpu_custom_call.1} parent=59 // pred_check
        %p353 = pneg %p38
      $region62: #{tpu_custom_call.1} parent=59 // pred_check_branch
        %355 = sbr.rel (%p353) target = $region64
      $region63: #{tpu_custom_call.1} parent=59 // pred_region
        %p356 = scmp.lt.s32.totalorder %s18, 1
        %s357 = scalar_select %p356, %s18, 1
        %s358 = smul.addr %s357, 32
        %s359 = smul.addr %s358, 8
        %s360 = scalar_lea.vmem %s0, %s359
      $region64: #{tpu_custom_call.1} parent=59 // pred_fallthru
        _
    $region60: #{tpu_custom_call.1} parent=5 // pred_fallthru
      _
    %p361 = scmp.le.s32.totalorder 1, %s18
    %p362 = scmp.lt.s32.totalorder %s18, 3
    %p363 = pnand %p361, %p362
    %p364 = pneg %p363
    // Predicated region
    $region65: #{tpu_custom_call.1} parent=5 // pred_check
      _
    $region66: #{tpu_custom_call.1} parent=5 // pred_check_branch
      %366 = sbr.rel (%p363) target = $region68
    $region67: #{tpu_custom_call.1} parent=5 // pred_region
      %s367 = ssub.s32 %s18, 1
      %p368 = scmp.lt.s32.totalorder %s23, 1
      %s369 = scalar_select %p368, %s23, 1
      %s370 = smul.addr %s369, 32
      %s371 = smul.addr %s370, 8
      %s372 = scalar_lea.vmem %s0, %s371
      %p373 = pneg %p44
      %p374 = pneg %p41
      %p375 = pneg %p65
      %p376 = pneg %p62
      %p377 = pneg %p86
      %p378 = pneg %p83
      %p379 = pneg %p107
      %p380 = pneg %p104
      %p381 = pneg %p128
      %p382 = pneg %p125
      %p383 = pneg %p149
      %p384 = pneg %p146
      %p385 = pneg %p170
      %p386 = pneg %p167
      %p387 = pneg %p191
      %p388 = pneg %p188
      %p389 = pneg %p212
      %p390 = pneg %p209
      %p391 = pneg %p233
      %p392 = pneg %p230
      %p393 = pneg %p254
      %p394 = pneg %p251
      %p395 = pneg %p275
      %p396 = pneg %p272
      %p397 = pneg %p301
      %p398 = pneg %p298
      %p399 = scmp.lt.s32.totalorder %s23, 1
      %s400 = scalar_select %p399, %s23, 1
      %s401 = smul.addr %s400, 32
      %s402 = smul.addr %s401, 4
      %s403 = scalar_lea.vmem %s12, %s402
      %p404 = scmp.lt.s32.totalorder %s23, 1
      %s405 = scalar_select %p404, %s23, 1
      %s406 = smul.addr %s405, 32
      %s407 = smul.addr %s406, 8
      %s408 = scalar_lea.vmem %s0, %s407
      %p409 = scmp.lt.s32.totalorder %s23, 1
      %s410 = scalar_select %p409, %s23, 1
      %s411 = smul.addr %s410, 32
      %s412 = smul.addr %s411, 4
      %s413 = scalar_lea.vmem %s12, %s412
      %v417 = vld [vmem:[%s408] sm:$0xff]
      %v418 = vld [vmem:[%s408 + $0x8] sm:$0xff]
      %v419 = vld [vmem:[%s408 + $0x10] sm:$0xff]
      %v420 = vld [vmem:[%s408 + $0x18] sm:$0xff]
      %v421 = vld [vmem:[%s408 + $0x20] sm:$0xff]
      %v422 = vld [vmem:[%s408 + $0x28] sm:$0xff]
      %v423 = vld [vmem:[%s408 + $0x30] sm:$0xff]
      %v424 = vld [vmem:[%s408 + $0x38] sm:$0xff]
      %v425 = vld [vmem:[%s408 + $0x40] sm:$0xff]
      %v426 = vld [vmem:[%s408 + $0x48] sm:$0xff]
      %v427 = vld [vmem:[%s408 + $0x50] sm:$0xff]
      %v428 = vld [vmem:[%s408 + $0x58] sm:$0xff]
      %v429 = vld [vmem:[%s408 + $0x60] sm:$0xff]
      %v430 = vld [vmem:[%s408 + $0x68] sm:$0xff]
      %v431 = vld [vmem:[%s408 + $0x70] sm:$0xff]
      %v432 = vld [vmem:[%s408 + $0x78] sm:$0xff]
      %v433 = vld [vmem:[%s408 + $0x80] sm:$0xff]
      %v434 = vld [vmem:[%s408 + $0x88] sm:$0xff]
      %v435 = vld [vmem:[%s408 + $0x90] sm:$0xff]
      %v436 = vld [vmem:[%s408 + $0x98] sm:$0xff]
      %v437 = vld [vmem:[%s408 + $0xa0] sm:$0xff]
      %v438 = vld [vmem:[%s408 + $0xa8] sm:$0xff]
      %v439 = vld [vmem:[%s408 + $0xb0] sm:$0xff]
      %v440 = vld [vmem:[%s408 + $0xb8] sm:$0xff]
      %v441 = vld [vmem:[%s408 + $0xc0] sm:$0xff]
      %v442 = vld [vmem:[%s408 + $0xc8] sm:$0xff]
      %v443 = vld [vmem:[%s408 + $0xd0] sm:$0xff]
      %v444 = vld [vmem:[%s408 + $0xd8] sm:$0xff]
      %v445 = vld [vmem:[%s408 + $0xe0] sm:$0xff]
      %v446 = vld [vmem:[%s408 + $0xe8] sm:$0xff]
      %v447 = vld [vmem:[%s408 + $0xf0] sm:$0xff]
      %v448 = vld [vmem:[%s408 + $0xf8] sm:$0xff]
      %vm449 = vcmask 261120
      %v450 = vsel %vm449, %v417, 0.0
      %v451 = vsel %vm449, %v418, 0.0
      %v452 = vadd.f32 %v450, %v451
      %v453 = vsel %vm449, %v419, 0.0
      %v454 = vadd.f32 %v452, %v453
      %v455 = vsel %vm449, %v420, 0.0
      %v456 = vadd.f32 %v454, %v455
      %v457 = vsel %vm449, %v421, 0.0
      %v458 = vadd.f32 %v456, %v457
      %v459 = vsel %vm449, %v422, 0.0
      %v460 = vadd.f32 %v458, %v459
      %v461 = vsel %vm449, %v423, 0.0
      %v462 = vadd.f32 %v460, %v461
      %v463 = vsel %vm449, %v424, 0.0
      %v464 = vadd.f32 %v462, %v463
      %v465 = vsel %vm449, %v425, 0.0
      %v466 = vadd.f32 %v464, %v465
      %v467 = vsel %vm449, %v426, 0.0
      %v468 = vadd.f32 %v466, %v467
      %v469 = vsel %vm449, %v427, 0.0
      %v470 = vadd.f32 %v468, %v469
      %v471 = vsel %vm449, %v428, 0.0
      %v472 = vadd.f32 %v470, %v471
      %v473 = vsel %vm449, %v429, 0.0
      %v474 = vadd.f32 %v472, %v473
      %v475 = vsel %vm449, %v430, 0.0
      %v476 = vadd.f32 %v474, %v475
      %v477 = vsel %vm449, %v431, 0.0
      %v478 = vadd.f32 %v476, %v477
      %v479 = vsel %vm449, %v432, 0.0
      %v480 = vadd.f32 %v478, %v479
      %v481 = vsel %vm449, %v433, 0.0
      %v482 = vadd.f32 %v480, %v481
      %v483 = vsel %vm449, %v434, 0.0
      %v484 = vadd.f32 %v482, %v483
      %v485 = vsel %vm449, %v435, 0.0
      %v486 = vadd.f32 %v484, %v485
      %v487 = vsel %vm449, %v436, 0.0
      %v488 = vadd.f32 %v486, %v487
      %v489 = vsel %vm449, %v437, 0.0
      %v490 = vadd.f32 %v488, %v489
      %v491 = vsel %vm449, %v438, 0.0
      %v492 = vadd.f32 %v490, %v491
      %v493 = vsel %vm449, %v439, 0.0
      %v494 = vadd.f32 %v492, %v493
      %v495 = vsel %vm449, %v440, 0.0
      %v496 = vadd.f32 %v494, %v495
      %v497 = vsel %vm449, %v441, 0.0
      %v498 = vadd.f32 %v496, %v497
      %v499 = vsel %vm449, %v442, 0.0
      %v500 = vadd.f32 %v498, %v499
      %v501 = vsel %vm449, %v443, 0.0
      %v502 = vadd.f32 %v500, %v501
      %v503 = vsel %vm449, %v444, 0.0
      %v504 = vadd.f32 %v502, %v503
      %v505 = vsel %vm449, %v445, 0.0
      %v506 = vadd.f32 %v504, %v505
      %v507 = vsel %vm449, %v446, 0.0
      %v508 = vadd.f32 %v506, %v507
      %v509 = vsel %vm449, %v447, 0.0
      %v510 = vadd.f32 %v508, %v509
      %v511 = vsel %vm449, %v448, 0.0
      %v512 = vadd.f32 %v510, %v511
      %v513 = vrot.slane %v512, 4
      %v514 = vadd.f32 %v512, %v513
      %v515 = vrot.slane %v514, 2
      %v516 = vadd.f32 %v514, %v515
      %v517 = vrot.slane %v516, 1
      %v518 = vadd.f32 %v516, %v517
      %v519 = vmul.f32 %v417, %v417
      %v520 = vmul.f32 %v418, %v418
      %v521 = vmul.f32 %v419, %v419
      %v522 = vmul.f32 %v420, %v420
      %v523 = vmul.f32 %v421, %v421
      %v524 = vmul.f32 %v422, %v422
      %v525 = vmul.f32 %v423, %v423
      %v526 = vmul.f32 %v424, %v424
      %v527 = vmul.f32 %v425, %v425
      %v528 = vmul.f32 %v426, %v426
      %v529 = vmul.f32 %v427, %v427
      %v530 = vmul.f32 %v428, %v428
      %v531 = vmul.f32 %v429, %v429
      %v532 = vmul.f32 %v430, %v430
      %v533 = vmul.f32 %v431, %v431
      %v534 = vmul.f32 %v432, %v432
      %v535 = vmul.f32 %v433, %v433
      %v536 = vmul.f32 %v434, %v434
      %v537 = vmul.f32 %v435, %v435
      %v538 = vmul.f32 %v436, %v436
      %v539 = vmul.f32 %v437, %v437
      %v540 = vmul.f32 %v438, %v438
      %v541 = vmul.f32 %v439, %v439
      %v542 = vmul.f32 %v440, %v440
      %v543 = vmul.f32 %v441, %v441
      %v544 = vmul.f32 %v442, %v442
      %v545 = vmul.f32 %v443, %v443
      %v546 = vmul.f32 %v444, %v444
      %v547 = vmul.f32 %v445, %v445
      %v548 = vmul.f32 %v446, %v446
      %v549 = vmul.f32 %v447, %v447
      %v550 = vmul.f32 %v448, %v448
      %v551 = vsel %vm449, %v519, 0.0
      %v552 = vsel %vm449, %v520, 0.0
      %v553 = vadd.f32 %v551, %v552
      %v554 = vsel %vm449, %v521, 0.0
      %v555 = vadd.f32 %v553, %v554
      %v556 = vsel %vm449, %v522, 0.0
      %v557 = vadd.f32 %v555, %v556
      %v558 = vsel %vm449, %v523, 0.0
      %v559 = vadd.f32 %v557, %v558
      %v560 = vsel %vm449, %v524, 0.0
      %v561 = vadd.f32 %v559, %v560
      %v562 = vsel %vm449, %v525, 0.0
      %v563 = vadd.f32 %v561, %v562
      %v564 = vsel %vm449, %v526, 0.0
      %v565 = vadd.f32 %v563, %v564
      %v566 = vsel %vm449, %v527, 0.0
      %v567 = vadd.f32 %v565, %v566
      %v568 = vsel %vm449, %v528, 0.0
      %v569 = vadd.f32 %v567, %v568
      %v570 = vsel %vm449, %v529, 0.0
      %v571 = vadd.f32 %v569, %v570
      %v572 = vsel %vm449, %v530, 0.0
      %v573 = vadd.f32 %v571, %v572
      %v574 = vsel %vm449, %v531, 0.0
      %v575 = vadd.f32 %v573, %v574
      %v576 = vsel %vm449, %v532, 0.0
      %v577 = vadd.f32 %v575, %v576
      %v578 = vsel %vm449, %v533, 0.0
      %v579 = vadd.f32 %v577, %v578
      %v580 = vsel %vm449, %v534, 0.0
      %v581 = vadd.f32 %v579, %v580
      %v582 = vsel %vm449, %v535, 0.0
      %v583 = vadd.f32 %v581, %v582
      %v584 = vsel %vm449, %v536, 0.0
      %v585 = vadd.f32 %v583, %v584
      %v586 = vsel %vm449, %v537, 0.0
      %v587 = vadd.f32 %v585, %v586
      %v588 = vsel %vm449, %v538, 0.0
      %v589 = vadd.f32 %v587, %v588
      %v590 = vsel %vm449, %v539, 0.0
      %v591 = vadd.f32 %v589, %v590
      %v592 = vsel %vm449, %v540, 0.0
      %v593 = vadd.f32 %v591, %v592
      %v594 = vsel %vm449, %v541, 0.0
      %v595 = vadd.f32 %v593, %v594
      %v596 = vsel %vm449, %v542, 0.0
      %v597 = vadd.f32 %v595, %v596
      %v598 = vsel %vm449, %v543, 0.0
      %v599 = vadd.f32 %v597, %v598
      %v600 = vsel %vm449, %v544, 0.0
      %v601 = vadd.f32 %v599, %v600
      %v602 = vsel %vm449, %v545, 0.0
      %v603 = vadd.f32 %v601, %v602
      %v604 = vsel %vm449, %v546, 0.0
      %v605 = vadd.f32 %v603, %v604
      %v606 = vsel %vm449, %v547, 0.0
      %v607 = vadd.f32 %v605, %v606
      %v608 = vsel %vm449, %v548, 0.0
      %v609 = vadd.f32 %v607, %v608
      %v610 = vsel %vm449, %v549, 0.0
      %v611 = vadd.f32 %v609, %v610
      %v612 = vsel %vm449, %v550, 0.0
      %v613 = vadd.f32 %v611, %v612
      %v614 = vrot.slane %v613, 4
      %v615 = vadd.f32 %v613, %v614
      %v616 = vrot.slane %v615, 2
      %v617 = vadd.f32 %v615, %v616
      %v618 = vrot.slane %v617, 1
      %v619 = vadd.f32 %v617, %v618
      %v620 = vmul.f32 %v518, 0.00390625
      %v621 = vmul.f32 %v619, 0.00390625
      %v622 = vmul.f32 %v620, %v620
      %v623 = vsub.f32 %v621, %v622
      %v624 = vld [vmem:[%s1] sm:$0x1]
      %v625 = vadd.f32 %v623, 1e-05
      %v626 = vrsqrt.pop %v625
      %v627 = vmul.f32 %v624, %v626
      %v628 = vld [vmem:[%s2] sm:$0x1]
      %v629 = vmul.f32 %v620, %v627
      %v630 = vsub.f32 %v628, %v629
      %v632 = vlaneseq
      %v633 = vshrl.u32 %v632, 7
      %v634 = vsub.s32 0, %v633
      %v635 = vrot.slane %v627, %v634
      %v637 = vmul.f32 %v417, %v635
      %v638 = vmul.f32 %v418, %v635
      %v639 = vmul.f32 %v419, %v635
      %v640 = vmul.f32 %v420, %v635
      %v641 = vmul.f32 %v421, %v635
      %v642 = vmul.f32 %v422, %v635
      %v643 = vmul.f32 %v423, %v635
      %v644 = vmul.f32 %v424, %v635
      %v645 = vmul.f32 %v425, %v635
      %v646 = vmul.f32 %v426, %v635
      %v647 = vmul.f32 %v427, %v635
      %v648 = vmul.f32 %v428, %v635
      %v649 = vmul.f32 %v429, %v635
      %v650 = vmul.f32 %v430, %v635
      %v651 = vmul.f32 %v431, %v635
      %v652 = vmul.f32 %v432, %v635
      %v653 = vmul.f32 %v433, %v635
      %v654 = vmul.f32 %v434, %v635
      %v655 = vmul.f32 %v435, %v635
      %v656 = vmul.f32 %v436, %v635
      %v657 = vmul.f32 %v437, %v635
      %v658 = vmul.f32 %v438, %v635
      %v659 = vmul.f32 %v439, %v635
      %v660 = vmul.f32 %v440, %v635
      %v661 = vmul.f32 %v441, %v635
      %v662 = vmul.f32 %v442, %v635
      %v663 = vmul.f32 %v443, %v635
      %v664 = vmul.f32 %v444, %v635
      %v665 = vmul.f32 %v445, %v635
      %v666 = vmul.f32 %v446, %v635
      %v667 = vmul.f32 %v447, %v635
      %v668 = vmul.f32 %v448, %v635
      %v670 = vlaneseq
      %v671 = vshrl.u32 %v670, 7
      %v672 = vsub.s32 0, %v671
      %v673 = vrot.slane %v630, %v672
      %v675 = vadd.f32 %v637, %v673
      %v676 = vadd.f32 %v638, %v673
      %v677 = vadd.f32 %v639, %v673
      %v678 = vadd.f32 %v640, %v673
      %v679 = vadd.f32 %v641, %v673
      %v680 = vadd.f32 %v642, %v673
      %v681 = vadd.f32 %v643, %v673
      %v682 = vadd.f32 %v644, %v673
      %v683 = vadd.f32 %v645, %v673
      %v684 = vadd.f32 %v646, %v673
      %v685 = vadd.f32 %v647, %v673
      %v686 = vadd.f32 %v648, %v673
      %v687 = vadd.f32 %v649, %v673
      %v688 = vadd.f32 %v650, %v673
      %v689 = vadd.f32 %v651, %v673
      %v690 = vadd.f32 %v652, %v673
      %v691 = vadd.f32 %v653, %v673
      %v692 = vadd.f32 %v654, %v673
      %v693 = vadd.f32 %v655, %v673
      %v694 = vadd.f32 %v656, %v673
      %v695 = vadd.f32 %v657, %v673
      %v696 = vadd.f32 %v658, %v673
      %v697 = vadd.f32 %v659, %v673
      %v698 = vadd.f32 %v660, %v673
      %v699 = vadd.f32 %v661, %v673
      %v700 = vadd.f32 %v662, %v673
      %v701 = vadd.f32 %v663, %v673
      %v702 = vadd.f32 %v664, %v673
      %v703 = vadd.f32 %v665, %v673
      %v704 = vadd.f32 %v666, %v673
      %v705 = vadd.f32 %v667, %v673
      %v706 = vadd.f32 %v668, %v673
      %v707 = vmax.f32 %v675, 0.0
      %v708 = vmax.f32 %v676, 0.0
      %v709 = vmax.f32 %v677, 0.0
      %v710 = vmax.f32 %v678, 0.0
      %v711 = vmax.f32 %v679, 0.0
      %v712 = vmax.f32 %v680, 0.0
      %v713 = vmax.f32 %v681, 0.0
      %v714 = vmax.f32 %v682, 0.0
      %v715 = vmax.f32 %v683, 0.0
      %v716 = vmax.f32 %v684, 0.0
      %v717 = vmax.f32 %v685, 0.0
      %v718 = vmax.f32 %v686, 0.0
      %v719 = vmax.f32 %v687, 0.0
      %v720 = vmax.f32 %v688, 0.0
      %v721 = vmax.f32 %v689, 0.0
      %v722 = vmax.f32 %v690, 0.0
      %v723 = vmax.f32 %v691, 0.0
      %v724 = vmax.f32 %v692, 0.0
      %v725 = vmax.f32 %v693, 0.0
      %v726 = vmax.f32 %v694, 0.0
      %v727 = vmax.f32 %v695, 0.0
      %v728 = vmax.f32 %v696, 0.0
      %v729 = vmax.f32 %v697, 0.0
      %v730 = vmax.f32 %v698, 0.0
      %v731 = vmax.f32 %v699, 0.0
      %v732 = vmax.f32 %v700, 0.0
      %v733 = vmax.f32 %v701, 0.0
      %v734 = vmax.f32 %v702, 0.0
      %v735 = vmax.f32 %v703, 0.0
      %v736 = vmax.f32 %v704, 0.0
      %v737 = vmax.f32 %v705, 0.0
      %v738 = vmax.f32 %v706, 0.0
      %v739 = vpack.c.bf16 %v708, %v707
      %v740 = vpack.c.bf16 %v710, %v709
      %v741 = vpack.c.bf16 %v712, %v711
      %v742 = vpack.c.bf16 %v714, %v713
      %v743 = vpack.c.bf16 %v716, %v715
      %v744 = vpack.c.bf16 %v718, %v717
      %v745 = vpack.c.bf16 %v720, %v719
      %v746 = vpack.c.bf16 %v722, %v721
      %v747 = vpack.c.bf16 %v724, %v723
      %v748 = vpack.c.bf16 %v726, %v725
      %v749 = vpack.c.bf16 %v728, %v727
      %v750 = vpack.c.bf16 %v730, %v729
      %v751 = vpack.c.bf16 %v732, %v731
      %v752 = vpack.c.bf16 %v734, %v733
      %v753 = vpack.c.bf16 %v736, %v735
      %v754 = vpack.c.bf16 %v738, %v737
      %v755 = vld [vmem:[%s3] sm:$0xf]
      %v756 = vld [vmem:[%s3 + $0x4] sm:$0xf]
      %v757 = vld [vmem:[%s3 + $0x8] sm:$0xf]
      %v758 = vld [vmem:[%s3 + $0xc] sm:$0xf]
      %v763 = vunpack.c.l.b16 %v755
      %v764 = vunpack.c.l.b16 %v756
      %v765 = vunpack.c.l.b16 %v757
      %v766 = vunpack.c.l.b16 %v758
      %v767 = vpack.c.b16 %v764, %v763
      %v768 = vpack.c.b16 %v766, %v765
      %v772 = vsel %vm449, %v739, 0
      %v775 = vsel %vm449, %v740, 0
      %v778 = vsel %vm449, %v741, 0
      %v781 = vsel %vm449, %v742, 0
      %v784 = vsel %vm449, %v743, 0
      %v787 = vsel %vm449, %v744, 0
      %v790 = vsel %vm449, %v745, 0
      %v793 = vsel %vm449, %v746, 0
      %v796 = vsel %vm449, %v747, 0
      %v799 = vsel %vm449, %v748, 0
      %v802 = vsel %vm449, %v749, 0
      %v805 = vsel %vm449, %v750, 0
      %v808 = vsel %vm449, %v751, 0
      %v811 = vsel %vm449, %v752, 0
      %v814 = vsel %vm449, %v753, 0
      %v817 = vsel %vm449, %v754, 0
      %819 = vmatprep.subr.bf16.mxu0 0
      %820 = vmatpush1.bf16.msra.mxu0 %v767
      %821 = vmatprep.subr.bf16.mxu0 0
      %822 = vmatpush1.bf16.msra.mxu0 %v768
      %823 = vmatprep.subr.bf16.mxu0 0
      %824 = vmatpush1.bf16.msra.mxu0 0
      %825 = vmatprep.subr.bf16.mxu0 0
      %826 = vmatpush1.bf16.msra.mxu0 0
      %827 = vmatprep.subr.bf16.mxu0 0
      %828 = vmatpush1.bf16.msra.mxu0 0
      %829 = vmatprep.subr.bf16.mxu0 0
      %830 = vmatpush1.bf16.msra.mxu0 0
      %831 = vmatprep.subr.bf16.mxu0 0
      %832 = vmatpush1.bf16.msra.mxu0 0
      %833 = vmatprep.subr.bf16.mxu0 0
      %834 = vmatpush1.bf16.msra.mxu0 0
      %835 = vmatprep.subr.bf16.mxu0 0
      %836 = vmatpush1.bf16.msra.mxu0 0
      %837 = vmatprep.subr.bf16.mxu0 0
      %838 = vmatpush1.bf16.msra.mxu0 0
      %839 = vmatprep.subr.bf16.mxu0 0
      %840 = vmatpush1.bf16.msra.mxu0 0
      %841 = vmatprep.subr.bf16.mxu0 0
      %842 = vmatpush1.bf16.msra.mxu0 0
      %843 = vmatprep.subr.bf16.mxu0 0
      %844 = vmatpush1.bf16.msra.mxu0 0
      %845 = vmatprep.subr.bf16.mxu0 0
      %846 = vmatpush1.bf16.msra.mxu0 0
      %847 = vmatprep.subr.bf16.mxu0 0
      %848 = vmatpush1.bf16.msra.mxu0 0
      %849 = vmatprep.subr.bf16.mxu0 0
      %850 = vmatpush1.bf16.msra.mxu0 0
      %851 = vmatprep.mubr.bf16.mxu0 0
      %852 = vmatmul.mubr.bf16.gmra.mrb[0].mxu0 %v772
      %v853 = vpop.f32.mrb[0].mxu0
      %v854 = vadd.f32 0.0, %v853
      %v855 = vpop.f32.mrb[0].mxu0
      %v856 = vpop.f32.mrb[0].mxu0
      %v857 = vadd.f32 0.0, %v856
      %v858 = vpop.f32.mrb[0].mxu0
      %859 = vmatprep.mubr.bf16.mxu0 0
      %860 = vmatmul.mubr.bf16.gmra.mrb[0].mxu0 %v775
      %v861 = vpop.f32.mrb[0].mxu0
      %v862 = vadd.f32 0.0, %v861
      %v863 = vpop.f32.mrb[0].mxu0
      %v864 = vpop.f32.mrb[0].mxu0
      %v865 = vadd.f32 0.0, %v864
      %v866 = vpop.f32.mrb[0].mxu0
      %867 = vmatprep.mubr.bf16.mxu0 0
      %868 = vmatmul.mubr.bf16.gmra.mrb[0].mxu0 %v778
      %v869 = vpop.f32.mrb[0].mxu0
      %v870 = vadd.f32 0.0, %v869
      %v871 = vpop.f32.mrb[0].mxu0
      %v872 = vpop.f32.mrb[0].mxu0
      %v873 = vadd.f32 0.0, %v872
      %v874 = vpop.f32.mrb[0].mxu0
      %875 = vmatprep.mubr.bf16.mxu0 0
      %876 = vmatmul.mubr.bf16.gmra.mrb[0].mxu0 %v781
      %v877 = vpop.f32.mrb[0].mxu0
      %v878 = vadd.f32 0.0, %v877
      %v879 = vpop.f32.mrb[0].mxu0
      %v880 = vpop.f32.mrb[0].mxu0
      %v881 = vadd.f32 0.0, %v880
      %v882 = vpop.f32.mrb[0].mxu0
      %883 = vmatprep.mubr.bf16.mxu0 0
      %884 = vmatmul.mubr.bf16.gmra.mrb[0].mxu0 %v784
      %v885 = vpop.f32.mrb[0].mxu0
      %v886 = vadd.f32 0.0, %v885
      %v887 = vpop.f32.mrb[0].mxu0
      %v888 = vpop.f32.mrb[0].mxu0
      %v889 = vadd.f32 0.0, %v888
      %v890 = vpop.f32.mrb[0].mxu0
      %891 = vmatprep.mubr.bf16.mxu0 0
      %892 = vmatmul.mubr.bf16.gmra.mrb[0].mxu0 %v787
      %v893 = vpop.f32.mrb[0].mxu0
      %v894 = vadd.f32 0.0, %v893
      %v895 = vpop.f32.mrb[0].mxu0
      %v896 = vpop.f32.mrb[0].mxu0
      %v897 = vadd.f32 0.0, %v896
      %v898 = vpop.f32.mrb[0].mxu0
      %899 = vmatprep.mubr.bf16.mxu0 0
      %900 = vmatmul.mubr.bf16.gmra.mrb[0].mxu0 %v790
      %v901 = vpop.f32.mrb[0].mxu0
      %v902 = vadd.f32 0.0, %v901
      %v903 = vpop.f32.mrb[0].mxu0
      %v904 = vpop.f32.mrb[0].mxu0
      %v905 = vadd.f32 0.0, %v904
      %v906 = vpop.f32.mrb[0].mxu0
      %907 = vmatprep.mubr.bf16.mxu0 0
      %908 = vmatmul.mubr.bf16.gmra.mrb[0].mxu0 %v793
      %v909 = vpop.f32.mrb[0].mxu0
      %v910 = vadd.f32 0.0, %v909
      %v911 = vpop.f32.mrb[0].mxu0
      %v912 = vpop.f32.mrb[0].mxu0
      %v913 = vadd.f32 0.0, %v912
      %v914 = vpop.f32.mrb[0].mxu0
      %915 = vmatprep.mubr.bf16.mxu0 0
      %916 = vmatmul.mubr.bf16.gmra.mrb[0].mxu0 %v796
      %v917 = vpop.f32.mrb[0].mxu0
      %v918 = vadd.f32 0.0, %v917
      %v919 = vpop.f32.mrb[0].mxu0
      %v920 = vpop.f32.mrb[0].mxu0
      %v921 = vadd.f32 0.0, %v920
      %v922 = vpop.f32.mrb[0].mxu0
      %923 = vmatprep.mubr.bf16.mxu0 0
      %924 = vmatmul.mubr.bf16.gmra.mrb[0].mxu0 %v799
      %v925 = vpop.f32.mrb[0].mxu0
      %v926 = vadd.f32 0.0, %v925
      %v927 = vpop.f32.mrb[0].mxu0
      %v928 = vpop.f32.mrb[0].mxu0
      %v929 = vadd.f32 0.0, %v928
      %v930 = vpop.f32.mrb[0].mxu0
      %931 = vmatprep.mubr.bf16.mxu0 0
      %932 = vmatmul.mubr.bf16.gmra.mrb[0].mxu0 %v802
      %v933 = vpop.f32.mrb[0].mxu0
      %v934 = vadd.f32 0.0, %v933
      %v935 = vpop.f32.mrb[0].mxu0
      %v936 = vpop.f32.mrb[0].mxu0
      %v937 = vadd.f32 0.0, %v936
      %v938 = vpop.f32.mrb[0].mxu0
      %939 = vmatprep.mubr.bf16.mxu0 0
      %940 = vmatmul.mubr.bf16.gmra.mrb[0].mxu0 %v805
      %v941 = vpop.f32.mrb[0].mxu0
      %v942 = vadd.f32 0.0, %v941
      %v943 = vpop.f32.mrb[0].mxu0
      %v944 = vpop.f32.mrb[0].mxu0
      %v945 = vadd.f32 0.0, %v944
      %v946 = vpop.f32.mrb[0].mxu0
      %947 = vmatprep.mubr.bf16.mxu0 0
      %948 = vmatmul.mubr.bf16.gmra.mrb[0].mxu0 %v808
      %v949 = vpop.f32.mrb[0].mxu0
      %v950 = vadd.f32 0.0, %v949
      %v951 = vpop.f32.mrb[0].mxu0
      %v952 = vpop.f32.mrb[0].mxu0
      %v953 = vadd.f32 0.0, %v952
      %v954 = vpop.f32.mrb[0].mxu0
      %955 = vmatprep.mubr.bf16.mxu0 0
      %956 = vmatmul.mubr.bf16.gmra.mrb[0].mxu0 %v811
      %v957 = vpop.f32.mrb[0].mxu0
      %v958 = vadd.f32 0.0, %v957
      %v959 = vpop.f32.mrb[0].mxu0
      %v960 = vpop.f32.mrb[0].mxu0
      %v961 = vadd.f32 0.0, %v960
      %v962 = vpop.f32.mrb[0].mxu0
      %963 = vmatprep.mubr.bf16.mxu0 0
      %964 = vmatmul.mubr.bf16.gmra.mrb[0].mxu0 %v814
      %v965 = vpop.f32.mrb[0].mxu0
      %v966 = vadd.f32 0.0, %v965
      %v967 = vpop.f32.mrb[0].mxu0
      %v968 = vpop.f32.mrb[0].mxu0
      %v969 = vadd.f32 0.0, %v968
      %v970 = vpop.f32.mrb[0].mxu0
      %971 = vmatprep.mubr.bf16.mxu0 0
      %972 = vmatmul.mubr.bf16.gmra.mrb[0].mxu0 %v817
      %v973 = vpop.f32.mrb[0].mxu0
      %v974 = vadd.f32 0.0, %v973
      %v975 = vpop.f32.mrb[0].mxu0
      %v976 = vpop.f32.mrb[0].mxu0
      %v977 = vadd.f32 0.0, %v976
      %v978 = vpop.f32.mrb[0].mxu0
      %979 = vdwg.mxu0
      %v980 = vld [vmem:[%s4] sm:$0x1]
      %v981 = vld [vmem:[%s5] sm:$0x1]
      %vm982 = vcmask 64512
      %v983 = vsel %vm982, %v854, 0.0
      %v984 = vsel %vm982, %v857, 0.0
      %v985 = vadd.f32 %v983, %v984
      %v986 = vsel %vm982, %v862, 0.0
      %v987 = vadd.f32 %v985, %v986
      %v988 = vsel %vm982, %v865, 0.0
      %v989 = vadd.f32 %v987, %v988
      %v990 = vsel %vm982, %v870, 0.0
      %v991 = vadd.f32 %v989, %v990
      %v992 = vsel %vm982, %v873, 0.0
      %v993 = vadd.f32 %v991, %v992
      %v994 = vsel %vm982, %v878, 0.0
      %v995 = vadd.f32 %v993, %v994
      %v996 = vsel %vm982, %v881, 0.0
      %v997 = vadd.f32 %v995, %v996
      %v998 = vsel %vm982, %v886, 0.0
      %v999 = vadd.f32 %v997, %v998
      %v1000 = vsel %vm982, %v889, 0.0
      %v1001 = vadd.f32 %v999, %v1000
      %v1002 = vsel %vm982, %v894, 0.0
      %v1003 = vadd.f32 %v1001, %v1002
      %v1004 = vsel %vm982, %v897, 0.0
      %v1005 = vadd.f32 %v1003, %v1004
      %v1006 = vsel %vm982, %v902, 0.0
      %v1007 = vadd.f32 %v1005, %v1006
      %v1008 = vsel %vm982, %v905, 0.0
      %v1009 = vadd.f32 %v1007, %v1008
      %v1010 = vsel %vm982, %v910, 0.0
      %v1011 = vadd.f32 %v1009, %v1010
      %v1012 = vsel %vm982, %v913, 0.0
      %v1013 = vadd.f32 %v1011, %v1012
      %v1014 = vsel %vm982, %v918, 0.0
      %v1015 = vadd.f32 %v1013, %v1014
      %v1016 = vsel %vm982, %v921, 0.0
      %v1017 = vadd.f32 %v1015, %v1016
      %v1018 = vsel %vm982, %v926, 0.0
      %v1019 = vadd.f32 %v1017, %v1018
      %v1020 = vsel %vm982, %v929, 0.0
      %v1021 = vadd.f32 %v1019, %v1020
      %v1022 = vsel %vm982, %v934, 0.0
      %v1023 = vadd.f32 %v1021, %v1022
      %v1024 = vsel %vm982, %v937, 0.0
      %v1025 = vadd.f32 %v1023, %v1024
      %v1026 = vsel %vm982, %v942, 0.0
      %v1027 = vadd.f32 %v1025, %v1026
      %v1028 = vsel %vm982, %v945, 0.0
      %v1029 = vadd.f32 %v1027, %v1028
      %v1030 = vsel %vm982, %v950, 0.0
      %v1031 = vadd.f32 %v1029, %v1030
      %v1032 = vsel %vm982, %v953, 0.0
      %v1033 = vadd.f32 %v1031, %v1032
      %v1034 = vsel %vm982, %v958, 0.0
      %v1035 = vadd.f32 %v1033, %v1034
      %v1036 = vsel %vm982, %v961, 0.0
      %v1037 = vadd.f32 %v1035, %v1036
      %v1038 = vsel %vm982, %v966, 0.0
      %v1039 = vadd.f32 %v1037, %v1038
      %v1040 = vsel %vm982, %v969, 0.0
      %v1041 = vadd.f32 %v1039, %v1040
      %v1042 = vsel %vm982, %v974, 0.0
      %v1043 = vadd.f32 %v1041, %v1042
      %v1044 = vsel %vm982, %v977, 0.0
      %v1045 = vadd.f32 %v1043, %v1044
      %v1046 = vrot.slane %v1045, 4
      %v1047 = vadd.f32 %v1045, %v1046
      %v1048 = vrot.slane %v1047, 2
      %v1049 = vadd.f32 %v1047, %v1048
      %v1050 = vrot.slane %v1049, 1
      %v1051 = vadd.f32 %v1049, %v1050
      %v1052 = vmul.f32 %v854, %v854
      %v1053 = vmul.f32 %v857, %v857
      %v1054 = vmul.f32 %v862, %v862
      %v1055 = vmul.f32 %v865, %v865
      %v1056 = vmul.f32 %v870, %v870
      %v1057 = vmul.f32 %v873, %v873
      %v1058 = vmul.f32 %v878, %v878
      %v1059 = vmul.f32 %v881, %v881
      %v1060 = vmul.f32 %v886, %v886
      %v1061 = vmul.f32 %v889, %v889
      %v1062 = vmul.f32 %v894, %v894
      %v1063 = vmul.f32 %v897, %v897
      %v1064 = vmul.f32 %v902, %v902
      %v1065 = vmul.f32 %v905, %v905
      %v1066 = vmul.f32 %v910, %v910
      %v1067 = vmul.f32 %v913, %v913
      %v1068 = vmul.f32 %v918, %v918
      %v1069 = vmul.f32 %v921, %v921
      %v1070 = vmul.f32 %v926, %v926
      %v1071 = vmul.f32 %v929, %v929
      %v1072 = vmul.f32 %v934, %v934
      %v1073 = vmul.f32 %v937, %v937
      %v1074 = vmul.f32 %v942, %v942
      %v1075 = vmul.f32 %v945, %v945
      %v1076 = vmul.f32 %v950, %v950
      %v1077 = vmul.f32 %v953, %v953
      %v1078 = vmul.f32 %v958, %v958
      %v1079 = vmul.f32 %v961, %v961
      %v1080 = vmul.f32 %v966, %v966
      %v1081 = vmul.f32 %v969, %v969
      %v1082 = vmul.f32 %v974, %v974
      %v1083 = vmul.f32 %v977, %v977
      %v1084 = vsel %vm982, %v1052, 0.0
      %v1085 = vsel %vm982, %v1053, 0.0
      %v1086 = vadd.f32 %v1084, %v1085
      %v1087 = vsel %vm982, %v1054, 0.0
      %v1088 = vadd.f32 %v1086, %v1087
      %v1089 = vsel %vm982, %v1055, 0.0
      %v1090 = vadd.f32 %v1088, %v1089
      %v1091 = vsel %vm982, %v1056, 0.0
      %v1092 = vadd.f32 %v1090, %v1091
      %v1093 = vsel %vm982, %v1057, 0.0
      %v1094 = vadd.f32 %v1092, %v1093
      %v1095 = vsel %vm982, %v1058, 0.0
      %v1096 = vadd.f32 %v1094, %v1095
      %v1097 = vsel %vm982, %v1059, 0.0
      %v1098 = vadd.f32 %v1096, %v1097
      %v1099 = vsel %vm982, %v1060, 0.0
      %v1100 = vadd.f32 %v1098, %v1099
      %v1101 = vsel %vm982, %v1061, 0.0
      %v1102 = vadd.f32 %v1100, %v1101
      %v1103 = vsel %vm982, %v1062, 0.0
      %v1104 = vadd.f32 %v1102, %v1103
      %v1105 = vsel %vm982, %v1063, 0.0
      %v1106 = vadd.f32 %v1104, %v1105
      %v1107 = vsel %vm982, %v1064, 0.0
      %v1108 = vadd.f32 %v1106, %v1107
      %v1109 = vsel %vm982, %v1065, 0.0
      %v1110 = vadd.f32 %v1108, %v1109
      %v1111 = vsel %vm982, %v1066, 0.0
      %v1112 = vadd.f32 %v1110, %v1111
      %v1113 = vsel %vm982, %v1067, 0.0
      %v1114 = vadd.f32 %v1112, %v1113
      %v1115 = vsel %vm982, %v1068, 0.0
      %v1116 = vadd.f32 %v1114, %v1115
      %v1117 = vsel %vm982, %v1069, 0.0
      %v1118 = vadd.f32 %v1116, %v1117
      %v1119 = vsel %vm982, %v1070, 0.0
      %v1120 = vadd.f32 %v1118, %v1119
      %v1121 = vsel %vm982, %v1071, 0.0
      %v1122 = vadd.f32 %v1120, %v1121
      %v1123 = vsel %vm982, %v1072, 0.0
      %v1124 = vadd.f32 %v1122, %v1123
      %v1125 = vsel %vm982, %v1073, 0.0
      %v1126 = vadd.f32 %v1124, %v1125
      %v1127 = vsel %vm982, %v1074, 0.0
      %v1128 = vadd.f32 %v1126, %v1127
      %v1129 = vsel %vm982, %v1075, 0.0
      %v1130 = vadd.f32 %v1128, %v1129
      %v1131 = vsel %vm982, %v1076, 0.0
      %v1132 = vadd.f32 %v1130, %v1131
      %v1133 = vsel %vm982, %v1077, 0.0
      %v1134 = vadd.f32 %v1132, %v1133
      %v1135 = vsel %vm982, %v1078, 0.0
      %v1136 = vadd.f32 %v1134, %v1135
      %v1137 = vsel %vm982, %v1079, 0.0
      %v1138 = vadd.f32 %v1136, %v1137
      %v1139 = vsel %vm982, %v1080, 0.0
      %v1140 = vadd.f32 %v1138, %v1139
      %v1141 = vsel %vm982, %v1081, 0.0
      %v1142 = vadd.f32 %v1140, %v1141
      %v1143 = vsel %vm982, %v1082, 0.0
      %v1144 = vadd.f32 %v1142, %v1143
      %v1145 = vsel %vm982, %v1083, 0.0
      %v1146 = vadd.f32 %v1144, %v1145
      %v1147 = vrot.slane %v1146, 4
      %v1148 = vadd.f32 %v1146, %v1147
      %v1149 = vrot.slane %v1148, 2
      %v1150 = vadd.f32 %v1148, %v1149
      %v1151 = vrot.slane %v1150, 1
      %v1152 = vadd.f32 %v1150, %v1151
      %vm1153 = vcmask 15360
      %v1154 = vsel %vm1153, %v1051, 0.0
      %1155 = vadd.xlane.f32.xlu0 %v1154
      %v1156 = vpop.xlane.xlu0 %1155
      %v1157 = vmul.f32 %v1156, 0.001953125
      %v1158 = vsel %vm1153, %v1152, 0.0
      %1159 = vadd.xlane.f32.xlu0 %v1158
      %v1160 = vpop.xlane.xlu0 %1159
      %v1161 = vmul.f32 %v1160, 0.001953125
      %v1162 = vmul.f32 %v1157, %v1157
      %v1163 = vsub.f32 %v1161, %v1162
      %v1164 = vadd.f32 %v1163, 1e-05
      %v1165 = vrsqrt.pop %v1164
      %v1166 = vmul.f32 %v980, %v1165
      %v1167 = vmul.f32 %v1157, %v1166
      %v1168 = vsub.f32 %v981, %v1167
      %1170 = vrot.lane.b32.xlu0 %v1051, 126
      %v1171 = vpop.permute.xlu0 %1170
      %v1173 = vsel %vm1153, %v1171, 0.0
      %1174 = vadd.xlane.f32.xlu0 %v1173
      %v1175 = vpop.xlane.xlu0 %1174
      %v1176 = vmul.f32 %v1175, 0.001953125
      %1178 = vrot.lane.b32.xlu0 %v1152, 126
      %v1179 = vpop.permute.xlu0 %1178
      %v1181 = vsel %vm1153, %v1179, 0.0
      %1182 = vadd.xlane.f32.xlu0 %v1181
      %v1183 = vpop.xlane.xlu0 %1182
      %v1184 = vmul.f32 %v1183, 0.001953125
      %v1185 = vmul.f32 %v1176, %v1176
      %v1186 = vsub.f32 %v1184, %v1185
      %v1187 = vadd.f32 %v1186, 1e-05
      %v1188 = vrsqrt.pop %v1187
      %v1189 = vmul.f32 %v980, %v1188
      %v1190 = vmul.f32 %v1176, %v1189
      %v1191 = vsub.f32 %v981, %v1190
      %1192 = vrot.lane.b32.xlu0 %v1051, 124
      %v1193 = vpop.permute.xlu0 %1192
      %v1195 = vsel %vm1153, %v1193, 0.0
      %1196 = vadd.xlane.f32.xlu0 %v1195
      %v1197 = vpop.xlane.xlu0 %1196
      %v1198 = vmul.f32 %v1197, 0.001953125
      %1199 = vrot.lane.b32.xlu0 %v1152, 124
      %v1200 = vpop.permute.xlu0 %1199
      %v1202 = vsel %vm1153, %v1200, 0.0
      %1203 = vadd.xlane.f32.xlu0 %v1202
      %v1204 = vpop.xlane.xlu0 %1203
      %v1205 = vmul.f32 %v1204, 0.001953125
      %v1206 = vmul.f32 %v1198, %v1198
      %v1207 = vsub.f32 %v1205, %v1206
      %v1208 = vadd.f32 %v1207, 1e-05
      %v1209 = vrsqrt.pop %v1208
      %v1210 = vmul.f32 %v980, %v1209
      %v1211 = vmul.f32 %v1198, %v1210
      %v1212 = vsub.f32 %v981, %v1211
      %1213 = vrot.lane.b32.xlu0 %v1051, 122
      %v1214 = vpop.permute.xlu0 %1213
      %v1216 = vsel %vm1153, %v1214, 0.0
      %1217 = vadd.xlane.f32.xlu0 %v1216
      %v1218 = vpop.xlane.xlu0 %1217
      %v1219 = vmul.f32 %v1218, 0.001953125
      %1220 = vrot.lane.b32.xlu0 %v1152, 122
      %v1221 = vpop.permute.xlu0 %1220
      %v1223 = vsel %vm1153, %v1221, 0.0
      %1224 = vadd.xlane.f32.xlu0 %v1223
      %v1225 = vpop.xlane.xlu0 %1224
      %v1226 = vmul.f32 %v1225, 0.001953125
      %v1227 = vmul.f32 %v1219, %v1219
      %v1228 = vsub.f32 %v1226, %v1227
      %v1229 = vadd.f32 %v1228, 1e-05
      %v1230 = vrsqrt.pop %v1229
      %v1231 = vmul.f32 %v980, %v1230
      %v1232 = vmul.f32 %v1219, %v1231
      %v1233 = vsub.f32 %v981, %v1232
      %v1234 = vsel %vm1153, %v1166, %v1189
      %vm1235 = vcmask 31744
      %v1236 = vsel %vm1235, %v1234, %v1210
      %vm1237 = vcmask 48128
      %v1238 = vsel %vm1237, %v1236, %v1231
      %v1239 = vsel %vm1153, %v1168, %v1191
      %v1240 = vsel %vm1235, %v1239, %v1212
      %v1241 = vsel %vm1237, %v1240, %v1233
      %v1242 = vlaneseq
      %v1243 = vshrl.u32 %v1242, 7
      %v1244 = vsub.s32 0, %v1243
      %v1245 = vrot.slane %v1238, %v1244
      %v1246 = vmul.f32 %v854, %v1245
      %v1247 = vmul.f32 %v857, %v1245
      %v1248 = vmul.f32 %v862, %v1245
      %v1249 = vmul.f32 %v865, %v1245
      %v1250 = vmul.f32 %v870, %v1245
      %v1251 = vmul.f32 %v873, %v1245
      %v1252 = vmul.f32 %v878, %v1245
      %v1253 = vmul.f32 %v881, %v1245
      %v1254 = vmul.f32 %v886, %v1245
      %v1255 = vmul.f32 %v889, %v1245
      %v1256 = vmul.f32 %v894, %v1245
      %v1257 = vmul.f32 %v897, %v1245
      %v1258 = vmul.f32 %v902, %v1245
      %v1259 = vmul.f32 %v905, %v1245
      %v1260 = vmul.f32 %v910, %v1245
      %v1261 = vmul.f32 %v913, %v1245
      %v1262 = vmul.f32 %v918, %v1245
      %v1263 = vmul.f32 %v921, %v1245
      %v1264 = vmul.f32 %v926, %v1245
      %v1265 = vmul.f32 %v929, %v1245
      %v1266 = vmul.f32 %v934, %v1245
      %v1267 = vmul.f32 %v937, %v1245
      %v1268 = vmul.f32 %v942, %v1245
      %v1269 = vmul.f32 %v945, %v1245
      %v1270 = vmul.f32 %v950, %v1245
      %v1271 = vmul.f32 %v953, %v1245
      %v1272 = vmul.f32 %v958, %v1245
      %v1273 = vmul.f32 %v961, %v1245
      %v1274 = vmul.f32 %v966, %v1245
      %v1275 = vmul.f32 %v969, %v1245
      %v1276 = vmul.f32 %v974, %v1245
      %v1277 = vmul.f32 %v977, %v1245
      %v1278 = vlaneseq
      %v1279 = vshrl.u32 %v1278, 7
      %v1280 = vsub.s32 0, %v1279
      %v1281 = vrot.slane %v1241, %v1280
      %v1282 = vadd.f32 %v1246, %v1281
      %v1283 = vadd.f32 %v1247, %v1281
      %v1284 = vadd.f32 %v1248, %v1281
      %v1285 = vadd.f32 %v1249, %v1281
      %v1286 = vadd.f32 %v1250, %v1281
      %v1287 = vadd.f32 %v1251, %v1281
      %v1288 = vadd.f32 %v1252, %v1281
      %v1289 = vadd.f32 %v1253, %v1281
      %v1290 = vadd.f32 %v1254, %v1281
      %v1291 = vadd.f32 %v1255, %v1281
      %v1292 = vadd.f32 %v1256, %v1281
      %v1293 = vadd.f32 %v1257, %v1281
      %v1294 = vadd.f32 %v1258, %v1281
      %v1295 = vadd.f32 %v1259, %v1281
      %v1296 = vadd.f32 %v1260, %v1281
      %v1297 = vadd.f32 %v1261, %v1281
      %v1298 = vadd.f32 %v1262, %v1281
      %v1299 = vadd.f32 %v1263, %v1281
      %v1300 = vadd.f32 %v1264, %v1281
      %v1301 = vadd.f32 %v1265, %v1281
      %v1302 = vadd.f32 %v1266, %v1281
      %v1303 = vadd.f32 %v1267, %v1281
      %v1304 = vadd.f32 %v1268, %v1281
      %v1305 = vadd.f32 %v1269, %v1281
      %v1306 = vadd.f32 %v1270, %v1281
      %v1307 = vadd.f32 %v1271, %v1281
      %v1308 = vadd.f32 %v1272, %v1281
      %v1309 = vadd.f32 %v1273, %v1281
      %v1310 = vadd.f32 %v1274, %v1281
      %v1311 = vadd.f32 %v1275, %v1281
      %v1312 = vadd.f32 %v1276, %v1281
      %v1313 = vadd.f32 %v1277, %v1281
      %v1314 = vlaneseq
      %v1315 = vshrl.u32 %v1314, 7
      %v1316 = vadd.s32 %v1315, 8
      %v1317 = vadd.s32 %v1315, 16
      %v1318 = vadd.s32 %v1315, 24
      %v1319 = vadd.s32 %v1315, 32
      %v1320 = vadd.s32 %v1315, 40
      %v1321 = vadd.s32 %v1315, 48
      %v1322 = vadd.s32 %v1315, 56
      %v1323 = vadd.s32 %v1315, 64
      %v1324 = vadd.s32 %v1315, 72
      %v1325 = vadd.s32 %v1315, 80
      %v1326 = vadd.s32 %v1315, 88
      %v1327 = vadd.s32 %v1315, 96
      %v1328 = vadd.s32 %v1315, 104
      %v1329 = vadd.s32 %v1315, 112
      %v1330 = vadd.s32 %v1315, 120
      %v1331 = vadd.s32 %v1315, 128
      %v1332 = vadd.s32 %v1315, 136
      %v1333 = vadd.s32 %v1315, 144
      %v1334 = vadd.s32 %v1315, 152
      %v1335 = vadd.s32 %v1315, 160
      %v1336 = vadd.s32 %v1315, 168
      %v1337 = vadd.s32 %v1315, 176
      %v1338 = vadd.s32 %v1315, 184
      %v1339 = vadd.s32 %v1315, 192
      %v1340 = vadd.s32 %v1315, 200
      %v1341 = vadd.s32 %v1315, 208
      %v1342 = vadd.s32 %v1315, 216
      %v1343 = vadd.s32 %v1315, 224
      %v1344 = vadd.s32 %v1315, 232
      %v1345 = vadd.s32 %v1315, 240
      %v1346 = vadd.s32 %v1315, 248
      %vm1347 = vcmp.lt.s32.totalorder %v1315, 0
      %v1348 = vsub.s32 0, %v1315
      %v1349 = vsel %vm1347, %v1348, %v1315
      %v1350 = vshrl.u32 %v1349, 4
      %v1351 = vand.u32 %v1349, 15
      %v1352 = vsub.s32 0, %v1351
      %v1353 = vsel %vm1347, %v1352, %v1351
      %vm1354 = vcmp.lt.s32.totalorder %v1316, 0
      %v1355 = vsub.s32 0, %v1316
      %v1356 = vsel %vm1354, %v1355, %v1316
      %v1357 = vshrl.u32 %v1356, 4
      %v1358 = vand.u32 %v1356, 15
      %v1359 = vsub.s32 0, %v1358
      %v1360 = vsel %vm1354, %v1359, %v1358
      %vm1361 = vcmp.lt.s32.totalorder %v1317, 0
      %v1362 = vsub.s32 0, %v1317
      %v1363 = vsel %vm1361, %v1362, %v1317
      %v1364 = vshrl.u32 %v1363, 4
      %v1365 = vand.u32 %v1363, 15
      %v1366 = vsub.s32 0, %v1365
      %v1367 = vsel %vm1361, %v1366, %v1365
      %vm1368 = vcmp.lt.s32.totalorder %v1318, 0
      %v1369 = vsub.s32 0, %v1318
      %v1370 = vsel %vm1368, %v1369, %v1318
      %v1371 = vshrl.u32 %v1370, 4
      %v1372 = vand.u32 %v1370, 15
      %v1373 = vsub.s32 0, %v1372
      %v1374 = vsel %vm1368, %v1373, %v1372
      %vm1375 = vcmp.lt.s32.totalorder %v1319, 0
      %v1376 = vsub.s32 0, %v1319
      %v1377 = vsel %vm1375, %v1376, %v1319
      %v1378 = vshrl.u32 %v1377, 4
      %v1379 = vand.u32 %v1377, 15
      %v1380 = vsub.s32 0, %v1379
      %v1381 = vsel %vm1375, %v1380, %v1379
      %vm1382 = vcmp.lt.s32.totalorder %v1320, 0
      %v1383 = vsub.s32 0, %v1320
      %v1384 = vsel %vm1382, %v1383, %v1320
      %v1385 = vshrl.u32 %v1384, 4
      %v1386 = vand.u32 %v1384, 15
      %v1387 = vsub.s32 0, %v1386
      %v1388 = vsel %vm1382, %v1387, %v1386
      %vm1389 = vcmp.lt.s32.totalorder %v1321, 0
      %v1390 = vsub.s32 0, %v1321
      %v1391 = vsel %vm1389, %v1390, %v1321
      %v1392 = vshrl.u32 %v1391, 4
      %v1393 = vand.u32 %v1391, 15
      %v1394 = vsub.s32 0, %v1393
      %v1395 = vsel %vm1389, %v1394, %v1393
      %vm1396 = vcmp.lt.s32.totalorder %v1322, 0
      %v1397 = vsub.s32 0, %v1322
      %v1398 = vsel %vm1396, %v1397, %v1322
      %v1399 = vshrl.u32 %v1398, 4
      %v1400 = vand.u32 %v1398, 15
      %v1401 = vsub.s32 0, %v1400
      %v1402 = vsel %vm1396, %v1401, %v1400
      %vm1403 = vcmp.lt.s32.totalorder %v1323, 0
      %v1404 = vsub.s32 0, %v1323
      %v1405 = vsel %vm1403, %v1404, %v1323
      %v1406 = vshrl.u32 %v1405, 4
      %v1407 = vand.u32 %v1405, 15
      %v1408 = vsub.s32 0, %v1407
      %v1409 = vsel %vm1403, %v1408, %v1407
      %vm1410 = vcmp.lt.s32.totalorder %v1324, 0
      %v1411 = vsub.s32 0, %v1324
      %v1412 = vsel %vm1410, %v1411, %v1324
      %v1413 = vshrl.u32 %v1412, 4
      %v1414 = vand.u32 %v1412, 15
      %v1415 = vsub.s32 0, %v1414
      %v1416 = vsel %vm1410, %v1415, %v1414
      %vm1417 = vcmp.lt.s32.totalorder %v1325, 0
      %v1418 = vsub.s32 0, %v1325
      %v1419 = vsel %vm1417, %v1418, %v1325
      %v1420 = vshrl.u32 %v1419, 4
      %v1421 = vand.u32 %v1419, 15
      %v1422 = vsub.s32 0, %v1421
      %v1423 = vsel %vm1417, %v1422, %v1421
      %vm1424 = vcmp.lt.s32.totalorder %v1326, 0
      %v1425 = vsub.s32 0, %v1326
      %v1426 = vsel %vm1424, %v1425, %v1326
      %v1427 = vshrl.u32 %v1426, 4
      %v1428 = vand.u32 %v1426, 15
      %v1429 = vsub.s32 0, %v1428
      %v1430 = vsel %vm1424, %v1429, %v1428
      %vm1431 = vcmp.lt.s32.totalorder %v1327, 0
      %v1432 = vsub.s32 0, %v1327
      %v1433 = vsel %vm1431, %v1432, %v1327
      %v1434 = vshrl.u32 %v1433, 4
      %v1435 = vand.u32 %v1433, 15
      %v1436 = vsub.s32 0, %v1435
      %v1437 = vsel %vm1431, %v1436, %v1435
      %vm1438 = vcmp.lt.s32.totalorder %v1328, 0
      %v1439 = vsub.s32 0, %v1328
      %v1440 = vsel %vm1438, %v1439, %v1328
      %v1441 = vshrl.u32 %v1440, 4
      %v1442 = vand.u32 %v1440, 15
      %v1443 = vsub.s32 0, %v1442
      %v1444 = vsel %vm1438, %v1443, %v1442
      %vm1445 = vcmp.lt.s32.totalorder %v1329, 0
      %v1446 = vsub.s32 0, %v1329
      %v1447 = vsel %vm1445, %v1446, %v1329
      %v1448 = vshrl.u32 %v1447, 4
      %v1449 = vand.u32 %v1447, 15
      %v1450 = vsub.s32 0, %v1449
      %v1451 = vsel %vm1445, %v1450, %v1449
      %vm1452 = vcmp.lt.s32.totalorder %v1330, 0
      %v1453 = vsub.s32 0, %v1330
      %v1454 = vsel %vm1452, %v1453, %v1330
      %v1455 = vshrl.u32 %v1454, 4
      %v1456 = vand.u32 %v1454, 15
      %v1457 = vsub.s32 0, %v1456
      %v1458 = vsel %vm1452, %v1457, %v1456
      %vm1459 = vcmp.lt.s32.totalorder %v1331, 0
      %v1460 = vsub.s32 0, %v1331
      %v1461 = vsel %vm1459, %v1460, %v1331
      %v1462 = vshrl.u32 %v1461, 4
      %v1463 = vand.u32 %v1461, 15
      %v1464 = vsub.s32 0, %v1463
      %v1465 = vsel %vm1459, %v1464, %v1463
      %vm1466 = vcmp.lt.s32.totalorder %v1332, 0
      %v1467 = vsub.s32 0, %v1332
      %v1468 = vsel %vm1466, %v1467, %v1332
      %v1469 = vshrl.u32 %v1468, 4
      %v1470 = vand.u32 %v1468, 15
      %v1471 = vsub.s32 0, %v1470
      %v1472 = vsel %vm1466, %v1471, %v1470
      %vm1473 = vcmp.lt.s32.totalorder %v1333, 0
      %v1474 = vsub.s32 0, %v1333
      %v1475 = vsel %vm1473, %v1474, %v1333
      %v1476 = vshrl.u32 %v1475, 4
      %v1477 = vand.u32 %v1475, 15
      %v1478 = vsub.s32 0, %v1477
      %v1479 = vsel %vm1473, %v1478, %v1477
      %vm1480 = vcmp.lt.s32.totalorder %v1334, 0
      %v1481 = vsub.s32 0, %v1334
      %v1482 = vsel %vm1480, %v1481, %v1334
      %v1483 = vshrl.u32 %v1482, 4
      %v1484 = vand.u32 %v1482, 15
      %v1485 = vsub.s32 0, %v1484
      %v1486 = vsel %vm1480, %v1485, %v1484
      %vm1487 = vcmp.lt.s32.totalorder %v1335, 0
      %v1488 = vsub.s32 0, %v1335
      %v1489 = vsel %vm1487, %v1488, %v1335
      %v1490 = vshrl.u32 %v1489, 4
      %v1491 = vand.u32 %v1489, 15
      %v1492 = vsub.s32 0, %v1491
      %v1493 = vsel %vm1487, %v1492, %v1491
      %vm1494 = vcmp.lt.s32.totalorder %v1336, 0
      %v1495 = vsub.s32 0, %v1336
      %v1496 = vsel %vm1494, %v1495, %v1336
      %v1497 = vshrl.u32 %v1496, 4
      %v1498 = vand.u32 %v1496, 15
      %v1499 = vsub.s32 0, %v1498
      %v1500 = vsel %vm1494, %v1499, %v1498
      %vm1501 = vcmp.lt.s32.totalorder %v1337, 0
      %v1502 = vsub.s32 0, %v1337
      %v1503 = vsel %vm1501, %v1502, %v1337
      %v1504 = vshrl.u32 %v1503, 4
      %v1505 = vand.u32 %v1503, 15
      %v1506 = vsub.s32 0, %v1505
      %v1507 = vsel %vm1501, %v1506, %v1505
      %vm1508 = vcmp.lt.s32.totalorder %v1338, 0
      %v1509 = vsub.s32 0, %v1338
      %v1510 = vsel %vm1508, %v1509, %v1338
      %v1511 = vshrl.u32 %v1510, 4
      %v1512 = vand.u32 %v1510, 15
      %v1513 = vsub.s32 0, %v1512
      %v1514 = vsel %vm1508, %v1513, %v1512
      %vm1515 = vcmp.lt.s32.totalorder %v1339, 0
      %v1516 = vsub.s32 0, %v1339
      %v1517 = vsel %vm1515, %v1516, %v1339
      %v1518 = vshrl.u32 %v1517, 4
      %v1519 = vand.u32 %v1517, 15
      %v1520 = vsub.s32 0, %v1519
      %v1521 = vsel %vm1515, %v1520, %v1519
      %vm1522 = vcmp.lt.s32.totalorder %v1340, 0
      %v1523 = vsub.s32 0, %v1340
      %v1524 = vsel %vm1522, %v1523, %v1340
      %v1525 = vshrl.u32 %v1524, 4
      %v1526 = vand.u32 %v1524, 15
      %v1527 = vsub.s32 0, %v1526
      %v1528 = vsel %vm1522, %v1527, %v1526
      %vm1529 = vcmp.lt.s32.totalorder %v1341, 0
      %v1530 = vsub.s32 0, %v1341
      %v1531 = vsel %vm1529, %v1530, %v1341
      %v1532 = vshrl.u32 %v1531, 4
      %v1533 = vand.u32 %v1531, 15
      %v1534 = vsub.s32 0, %v1533
      %v1535 = vsel %vm1529, %v1534, %v1533
      %vm1536 = vcmp.lt.s32.totalorder %v1342, 0
      %v1537 = vsub.s32 0, %v1342
      %v1538 = vsel %vm1536, %v1537, %v1342
      %v1539 = vshrl.u32 %v1538, 4
      %v1540 = vand.u32 %v1538, 15
      %v1541 = vsub.s32 0, %v1540
      %v1542 = vsel %vm1536, %v1541, %v1540
      %vm1543 = vcmp.lt.s32.totalorder %v1343, 0
      %v1544 = vsub.s32 0, %v1343
      %v1545 = vsel %vm1543, %v1544, %v1343
      %v1546 = vshrl.u32 %v1545, 4
      %v1547 = vand.u32 %v1545, 15
      %v1548 = vsub.s32 0, %v1547
      %v1549 = vsel %vm1543, %v1548, %v1547
      %vm1550 = vcmp.lt.s32.totalorder %v1344, 0
      %v1551 = vsub.s32 0, %v1344
      %v1552 = vsel %vm1550, %v1551, %v1344
      %v1553 = vshrl.u32 %v1552, 4
      %v1554 = vand.u32 %v1552, 15
      %v1555 = vsub.s32 0, %v1554
      %v1556 = vsel %vm1550, %v1555, %v1554
      %vm1557 = vcmp.lt.s32.totalorder %v1345, 0
      %v1558 = vsub.s32 0, %v1345
      %v1559 = vsel %vm1557, %v1558, %v1345
      %v1560 = vshrl.u32 %v1559, 4
      %v1561 = vand.u32 %v1559, 15
      %v1562 = vsub.s32 0, %v1561
      %v1563 = vsel %vm1557, %v1562, %v1561
      %vm1564 = vcmp.lt.s32.totalorder %v1346, 0
      %v1565 = vsub.s32 0, %v1346
      %v1566 = vsel %vm1564, %v1565, %v1346
      %v1567 = vshrl.u32 %v1566, 4
      %v1568 = vand.u32 %v1566, 15
      %v1569 = vsub.s32 0, %v1568
      %v1570 = vsel %vm1564, %v1569, %v1568
      %vm1571 = vcmp.ne.s32.totalorder %v1353, 0
      %vm1572 = vcmp.ne.s32.totalorder %v1360, 0
      %vm1573 = vcmp.ne.s32.totalorder %v1367, 0
      %vm1574 = vcmp.ne.s32.totalorder %v1374, 0
      %vm1575 = vcmp.ne.s32.totalorder %v1381, 0
      %vm1576 = vcmp.ne.s32.totalorder %v1388, 0
      %vm1577 = vcmp.ne.s32.totalorder %v1395, 0
      %vm1578 = vcmp.ne.s32.totalorder %v1402, 0
      %vm1579 = vcmp.ne.s32.totalorder %v1409, 0
      %vm1580 = vcmp.ne.s32.totalorder %v1416, 0
      %vm1581 = vcmp.ne.s32.totalorder %v1423, 0
      %vm1582 = vcmp.ne.s32.totalorder %v1430, 0
      %vm1583 = vcmp.ne.s32.totalorder %v1437, 0
      %vm1584 = vcmp.ne.s32.totalorder %v1444, 0
      %vm1585 = vcmp.ne.s32.totalorder %v1451, 0
      %vm1586 = vcmp.ne.s32.totalorder %v1458, 0
      %vm1587 = vcmp.ne.s32.totalorder %v1465, 0
      %vm1588 = vcmp.ne.s32.totalorder %v1472, 0
      %vm1589 = vcmp.ne.s32.totalorder %v1479, 0
      %vm1590 = vcmp.ne.s32.totalorder %v1486, 0
      %vm1591 = vcmp.ne.s32.totalorder %v1493, 0
      %vm1592 = vcmp.ne.s32.totalorder %v1500, 0
      %vm1593 = vcmp.ne.s32.totalorder %v1507, 0
      %vm1594 = vcmp.ne.s32.totalorder %v1514, 0
      %vm1595 = vcmp.ne.s32.totalorder %v1521, 0
      %vm1596 = vcmp.ne.s32.totalorder %v1528, 0
      %vm1597 = vcmp.ne.s32.totalorder %v1535, 0
      %vm1598 = vcmp.ne.s32.totalorder %v1542, 0
      %vm1599 = vcmp.ne.s32.totalorder %v1549, 0
      %vm1600 = vcmp.ne.s32.totalorder %v1556, 0
      %vm1601 = vcmp.ne.s32.totalorder %v1563, 0
      %vm1602 = vcmp.ne.s32.totalorder %v1570, 0
      %vm1603 = vcmp.lt.s32.totalorder %v1353, 0
      %vm1604 = vcmp.lt.s32.totalorder %v1360, 0
      %vm1605 = vcmp.lt.s32.totalorder %v1367, 0
      %vm1606 = vcmp.lt.s32.totalorder %v1374, 0
      %vm1607 = vcmp.lt.s32.totalorder %v1381, 0
      %vm1608 = vcmp.lt.s32.totalorder %v1388, 0
      %vm1609 = vcmp.lt.s32.totalorder %v1395, 0
      %vm1610 = vcmp.lt.s32.totalorder %v1402, 0
      %vm1611 = vcmp.lt.s32.totalorder %v1409, 0
      %vm1612 = vcmp.lt.s32.totalorder %v1416, 0
      %vm1613 = vcmp.lt.s32.totalorder %v1423, 0
      %vm1614 = vcmp.lt.s32.totalorder %v1430, 0
      %vm1615 = vcmp.lt.s32.totalorder %v1437, 0
      %vm1616 = vcmp.lt.s32.totalorder %v1444, 0
      %vm1617 = vcmp.lt.s32.totalorder %v1451, 0
      %vm1618 = vcmp.lt.s32.totalorder %v1458, 0
      %vm1619 = vcmp.lt.s32.totalorder %v1465, 0
      %vm1620 = vcmp.lt.s32.totalorder %v1472, 0
      %vm1621 = vcmp.lt.s32.totalorder %v1479, 0
      %vm1622 = vcmp.lt.s32.totalorder %v1486, 0
      %vm1623 = vcmp.lt.s32.totalorder %v1493, 0
      %vm1624 = vcmp.lt.s32.totalorder %v1500, 0
      %vm1625 = vcmp.lt.s32.totalorder %v1507, 0
      %vm1626 = vcmp.lt.s32.totalorder %v1514, 0
      %vm1627 = vcmp.lt.s32.totalorder %v1521, 0
      %vm1628 = vcmp.lt.s32.totalorder %v1528, 0
      %vm1629 = vcmp.lt.s32.totalorder %v1535, 0
      %vm1630 = vcmp.lt.s32.totalorder %v1542, 0
      %vm1631 = vcmp.lt.s32.totalorder %v1549, 0
      %vm1632 = vcmp.lt.s32.totalorder %v1556, 0
      %vm1633 = vcmp.lt.s32.totalorder %v1563, 0
      %vm1634 = vcmp.lt.s32.totalorder %v1570, 0
      %vm1635 = vmand %vm1603, %vm1571
      %vm1636 = vmand %vm1604, %vm1572
      %vm1637 = vmand %vm1605, %vm1573
      %vm1638 = vmand %vm1606, %vm1574
      %vm1639 = vmand %vm1607, %vm1575
      %vm1640 = vmand %vm1608, %vm1576
      %vm1641 = vmand %vm1609, %vm1577
      %vm1642 = vmand %vm1610, %vm1578
      %vm1643 = vmand %vm1611, %vm1579
      %vm1644 = vmand %vm1612, %vm1580
      %vm1645 = vmand %vm1613, %vm1581
      %vm1646 = vmand %vm1614, %vm1582
      %vm1647 = vmand %vm1615, %vm1583
      %vm1648 = vmand %vm1616, %vm1584
      %vm1649 = vmand %vm1617, %vm1585
      %vm1650 = vmand %vm1618, %vm1586
      %vm1651 = vmand %vm1619, %vm1587
      %vm1652 = vmand %vm1620, %vm1588
      %vm1653 = vmand %vm1621, %vm1589
      %vm1654 = vmand %vm1622, %vm1590
      %vm1655 = vmand %vm1623, %vm1591
      %vm1656 = vmand %vm1624, %vm1592
      %vm1657 = vmand %vm1625, %vm1593
      %vm1658 = vmand %vm1626, %vm1594
      %vm1659 = vmand %vm1627, %vm1595
      %vm1660 = vmand %vm1628, %vm1596
      %vm1661 = vmand %vm1629, %vm1597
      %vm1662 = vmand %vm1630, %vm1598
      %vm1663 = vmand %vm1631, %vm1599
      %vm1664 = vmand %vm1632, %vm1600
      %vm1665 = vmand %vm1633, %vm1601
      %vm1666 = vmand %vm1634, %vm1602
      %v1667 = vadd.s32 %v1353, 16
      %v1668 = vadd.s32 %v1360, 16
      %v1669 = vadd.s32 %v1367, 16
      %v1670 = vadd.s32 %v1374, 16
      %v1671 = vadd.s32 %v1381, 16
      %v1672 = vadd.s32 %v1388, 16
      %v1673 = vadd.s32 %v1395, 16
      %v1674 = vadd.s32 %v1402, 16
      %v1675 = vadd.s32 %v1409, 16
      %v1676 = vadd.s32 %v1416, 16
      %v1677 = vadd.s32 %v1423, 16
      %v1678 = vadd.s32 %v1430, 16
      %v1679 = vadd.s32 %v1437, 16
      %v1680 = vadd.s32 %v1444, 16
      %v1681 = vadd.s32 %v1451, 16
      %v1682 = vadd.s32 %v1458, 16
      %v1683 = vadd.s32 %v1465, 16
      %v1684 = vadd.s32 %v1472, 16
      %v1685 = vadd.s32 %v1479, 16
      %v1686 = vadd.s32 %v1486, 16
      %v1687 = vadd.s32 %v1493, 16
      %v1688 = vadd.s32 %v1500, 16
      %v1689 = vadd.s32 %v1507, 16
      %v1690 = vadd.s32 %v1514, 16
      %v1691 = vadd.s32 %v1521, 16
      %v1692 = vadd.s32 %v1528, 16
      %v1693 = vadd.s32 %v1535, 16
      %v1694 = vadd.s32 %v1542, 16
      %v1695 = vadd.s32 %v1549, 16
      %v1696 = vadd.s32 %v1556, 16
      %v1697 = vadd.s32 %v1563, 16
      %v1698 = vadd.s32 %v1570, 16
      %v1699 = vsel %vm1635, %v1667, %v1353
      %v1700 = vsel %vm1636, %v1668, %v1360
      %v1701 = vsel %vm1637, %v1669, %v1367
      %v1702 = vsel %vm1638, %v1670, %v1374
      %v1703 = vsel %vm1639, %v1671, %v1381
      %v1704 = vsel %vm1640, %v1672, %v1388
      %v1705 = vsel %vm1641, %v1673, %v1395
      %v1706 = vsel %vm1642, %v1674, %v1402
      %v1707 = vsel %vm1643, %v1675, %v1409
      %v1708 = vsel %vm1644, %v1676, %v1416
      %v1709 = vsel %vm1645, %v1677, %v1423
      %v1710 = vsel %vm1646, %v1678, %v1430
      %v1711 = vsel %vm1647, %v1679, %v1437
      %v1712 = vsel %vm1648, %v1680, %v1444
      %v1713 = vsel %vm1649, %v1681, %v1451
      %v1714 = vsel %vm1650, %v1682, %v1458
      %v1715 = vsel %vm1651, %v1683, %v1465
      %v1716 = vsel %vm1652, %v1684, %v1472
      %v1717 = vsel %vm1653, %v1685, %v1479
      %v1718 = vsel %vm1654, %v1686, %v1486
      %v1719 = vsel %vm1655, %v1687, %v1493
      %v1720 = vsel %vm1656, %v1688, %v1500
      %v1721 = vsel %vm1657, %v1689, %v1507
      %v1722 = vsel %vm1658, %v1690, %v1514
      %v1723 = vsel %vm1659, %v1691, %v1521
      %v1724 = vsel %vm1660, %v1692, %v1528
      %v1725 = vsel %vm1661, %v1693, %v1535
      %v1726 = vsel %vm1662, %v1694, %v1542
      %v1727 = vsel %vm1663, %v1695, %v1549
      %v1728 = vsel %vm1664, %v1696, %v1556
      %v1729 = vsel %vm1665, %v1697, %v1563
      %v1730 = vsel %vm1666, %v1698, %v1570
      %v1731 = vpack.c.bf16 %v1283, %v1282
      %v1732 = vpack.c.bf16 %v1285, %v1284
      %v1733 = vpack.c.bf16 %v1287, %v1286
      %v1734 = vpack.c.bf16 %v1289, %v1288
      %v1735 = vpack.c.bf16 %v1291, %v1290
      %v1736 = vpack.c.bf16 %v1293, %v1292
      %v1737 = vpack.c.bf16 %v1295, %v1294
      %v1738 = vpack.c.bf16 %v1297, %v1296
      %v1739 = vpack.c.bf16 %v1299, %v1298
      %v1740 = vpack.c.bf16 %v1301, %v1300
      %v1741 = vpack.c.bf16 %v1303, %v1302
      %v1742 = vpack.c.bf16 %v1305, %v1304
      %v1743 = vpack.c.bf16 %v1307, %v1306
      %v1744 = vpack.c.bf16 %v1309, %v1308
      %v1745 = vpack.c.bf16 %v1311, %v1310
      %v1746 = vpack.c.bf16 %v1313, %v1312
      %vm1747 = vcmp.gt.s32.totalorder %v1699, 0
      %vm1748 = vcmp.gt.s32.totalorder %v1700, 0
      %vm1749 = vcmp.gt.s32.totalorder %v1701, 0
      %vm1750 = vcmp.gt.s32.totalorder %v1702, 0
      %vm1751 = vcmp.gt.s32.totalorder %v1703, 0
      %vm1752 = vcmp.gt.s32.totalorder %v1704, 0
      %vm1753 = vcmp.gt.s32.totalorder %v1705, 0
      %vm1754 = vcmp.gt.s32.totalorder %v1706, 0
      %vm1755 = vcmp.gt.s32.totalorder %v1707, 0
      %vm1756 = vcmp.gt.s32.totalorder %v1708, 0
      %vm1757 = vcmp.gt.s32.totalorder %v1709, 0
      %vm1758 = vcmp.gt.s32.totalorder %v1710, 0
      %vm1759 = vcmp.gt.s32.totalorder %v1711, 0
      %vm1760 = vcmp.gt.s32.totalorder %v1712, 0
      %vm1761 = vcmp.gt.s32.totalorder %v1713, 0
      %vm1762 = vcmp.gt.s32.totalorder %v1714, 0
      %vm1763 = vcmp.gt.s32.totalorder %v1715, 0
      %vm1764 = vcmp.gt.s32.totalorder %v1716, 0
      %vm1765 = vcmp.gt.s32.totalorder %v1717, 0
      %vm1766 = vcmp.gt.s32.totalorder %v1718, 0
      %vm1767 = vcmp.gt.s32.totalorder %v1719, 0
      %vm1768 = vcmp.gt.s32.totalorder %v1720, 0
      %vm1769 = vcmp.gt.s32.totalorder %v1721, 0
      %vm1770 = vcmp.gt.s32.totalorder %v1722, 0
      %vm1771 = vcmp.gt.s32.totalorder %v1723, 0
      %vm1772 = vcmp.gt.s32.totalorder %v1724, 0
      %vm1773 = vcmp.gt.s32.totalorder %v1725, 0
      %vm1774 = vcmp.gt.s32.totalorder %v1726, 0
      %vm1775 = vcmp.gt.s32.totalorder %v1727, 0
      %vm1776 = vcmp.gt.s32.totalorder %v1728, 0
      %vm1777 = vcmp.gt.s32.totalorder %v1729, 0
      %vm1778 = vcmp.gt.s32.totalorder %v1730, 0
      %v1780 = vshrl.u32 %v1746, 16
      %v1782 = vrot.slane %v1780, 7
      %vm1784 = vsmask.f32 256
      %v1786 = vshrl.u32 %v1731, 16
      %v1788 = vrot.slane %v1786, 7
      %v1789 = vshll.u32 %v1731, 16
      %v1791 = vor.u32 %v1788, %v1789
      %v1793 = vshrl.u32 %v1732, 16
      %v1795 = vrot.slane %v1793, 7
      %v1796 = vshll.u32 %v1732, 16
      %v1798 = vor.u32 %v1795, %v1796
      %v1799 = vsel %vm1784, %v1788, %v1798
      %v1801 = vshrl.u32 %v1733, 16
      %v1803 = vrot.slane %v1801, 7
      %v1804 = vshll.u32 %v1733, 16
      %v1806 = vor.u32 %v1803, %v1804
      %v1807 = vsel %vm1784, %v1795, %v1806
      %v1809 = vshrl.u32 %v1734, 16
      %v1811 = vrot.slane %v1809, 7
      %v1812 = vshll.u32 %v1734, 16
      %v1814 = vor.u32 %v1811, %v1812
      %v1815 = vsel %vm1784, %v1803, %v1814
      %v1817 = vshrl.u32 %v1735, 16
      %v1819 = vrot.slane %v1817, 7
      %v1820 = vshll.u32 %v1735, 16
      %v1822 = vor.u32 %v1819, %v1820
      %v1823 = vsel %vm1784, %v1811, %v1822
      %v1825 = vshrl.u32 %v1736, 16
      %v1827 = vrot.slane %v1825, 7
      %v1828 = vshll.u32 %v1736, 16
      %v1830 = vor.u32 %v1827, %v1828
      %v1831 = vsel %vm1784, %v1819, %v1830
      %v1833 = vshrl.u32 %v1737, 16
      %v1835 = vrot.slane %v1833, 7
      %v1836 = vshll.u32 %v1737, 16
      %v1838 = vor.u32 %v1835, %v1836
      %v1839 = vsel %vm1784, %v1827, %v1838
      %v1841 = vshrl.u32 %v1738, 16
      %v1843 = vrot.slane %v1841, 7
      %v1844 = vshll.u32 %v1738, 16
      %v1846 = vor.u32 %v1843, %v1844
      %v1847 = vsel %vm1784, %v1835, %v1846
      %v1849 = vshrl.u32 %v1739, 16
      %v1851 = vrot.slane %v1849, 7
      %v1852 = vshll.u32 %v1739, 16
      %v1854 = vor.u32 %v1851, %v1852
      %v1855 = vsel %vm1784, %v1843, %v1854
      %v1857 = vshrl.u32 %v1740, 16
      %v1859 = vrot.slane %v1857, 7
      %v1860 = vshll.u32 %v1740, 16
      %v1862 = vor.u32 %v1859, %v1860
      %v1863 = vsel %vm1784, %v1851, %v1862
      %v1865 = vshrl.u32 %v1741, 16
      %v1867 = vrot.slane %v1865, 7
      %v1868 = vshll.u32 %v1741, 16
      %v1870 = vor.u32 %v1867, %v1868
      %v1871 = vsel %vm1784, %v1859, %v1870
      %v1873 = vshrl.u32 %v1742, 16
      %v1875 = vrot.slane %v1873, 7
      %v1876 = vshll.u32 %v1742, 16
      %v1878 = vor.u32 %v1875, %v1876
      %v1879 = vsel %vm1784, %v1867, %v1878
      %v1881 = vshrl.u32 %v1743, 16
      %v1883 = vrot.slane %v1881, 7
      %v1884 = vshll.u32 %v1743, 16
      %v1886 = vor.u32 %v1883, %v1884
      %v1887 = vsel %vm1784, %v1875, %v1886
      %v1889 = vshrl.u32 %v1744, 16
      %v1891 = vrot.slane %v1889, 7
      %v1892 = vshll.u32 %v1744, 16
      %v1894 = vor.u32 %v1891, %v1892
      %v1895 = vsel %vm1784, %v1883, %v1894
      %v1897 = vshrl.u32 %v1745, 16
      %v1899 = vrot.slane %v1897, 7
      %v1900 = vshll.u32 %v1745, 16
      %v1902 = vor.u32 %v1899, %v1900
      %v1903 = vsel %vm1784, %v1891, %v1902
      %v1904 = vshll.u32 %v1746, 16
      %v1906 = vor.u32 %v1782, %v1904
      %v1907 = vsel %vm1784, %v1899, %v1906
      %vm1924 = vcmask 1040384
      %vm1925 = vmand %vm1924, %vm1784
      %v1926 = vsel %vm1925, %v1782, %v1791
      %v1927 = vsel %vm1747, 1, 0
      %v1928 = vsel %vm1748, 1, 0
      %v1929 = vsel %vm1749, 1, 0
      %v1930 = vsel %vm1750, 1, 0
      %v1931 = vsel %vm1751, 1, 0
      %v1932 = vsel %vm1752, 1, 0
      %v1933 = vsel %vm1753, 1, 0
      %v1934 = vsel %vm1754, 1, 0
      %v1935 = vsel %vm1755, 1, 0
      %v1936 = vsel %vm1756, 1, 0
      %v1937 = vsel %vm1757, 1, 0
      %v1938 = vsel %vm1758, 1, 0
      %v1939 = vsel %vm1759, 1, 0
      %v1940 = vsel %vm1760, 1, 0
      %v1941 = vsel %vm1761, 1, 0
      %v1942 = vsel %vm1762, 1, 0
      %v1943 = vsel %vm1763, 1, 0
      %v1944 = vsel %vm1764, 1, 0
      %v1945 = vsel %vm1765, 1, 0
      %v1946 = vsel %vm1766, 1, 0
      %v1947 = vsel %vm1767, 1, 0
      %v1948 = vsel %vm1768, 1, 0
      %v1949 = vsel %vm1769, 1, 0
      %v1950 = vsel %vm1770, 1, 0
      %v1951 = vsel %vm1771, 1, 0
      %v1952 = vsel %vm1772, 1, 0
      %v1953 = vsel %vm1773, 1, 0
      %v1954 = vsel %vm1774, 1, 0
      %v1955 = vsel %vm1775, 1, 0
      %v1956 = vsel %vm1776, 1, 0
      %v1957 = vsel %vm1777, 1, 0
      %v1958 = vsel %vm1778, 1, 0
      %vm1959 = vcmp.eq.s32.totalorder %v1927, 1
      %vm1960 = vcmp.eq.s32.totalorder %v1928, 1
      %vm1961 = vcmp.eq.s32.totalorder %v1929, 1
      %vm1962 = vcmp.eq.s32.totalorder %v1930, 1
      %vm1963 = vcmp.eq.s32.totalorder %v1931, 1
      %vm1964 = vcmp.eq.s32.totalorder %v1932, 1
      %vm1965 = vcmp.eq.s32.totalorder %v1933, 1
      %vm1966 = vcmp.eq.s32.totalorder %v1934, 1
      %vm1967 = vcmp.eq.s32.totalorder %v1935, 1
      %vm1968 = vcmp.eq.s32.totalorder %v1936, 1
      %vm1969 = vcmp.eq.s32.totalorder %v1937, 1
      %vm1970 = vcmp.eq.s32.totalorder %v1938, 1
      %vm1971 = vcmp.eq.s32.totalorder %v1939, 1
      %vm1972 = vcmp.eq.s32.totalorder %v1940, 1
      %vm1973 = vcmp.eq.s32.totalorder %v1941, 1
      %vm1974 = vcmp.eq.s32.totalorder %v1942, 1
      %vm1975 = vcmp.eq.s32.totalorder %v1943, 1
      %vm1976 = vcmp.eq.s32.totalorder %v1944, 1
      %vm1977 = vcmp.eq.s32.totalorder %v1945, 1
      %vm1978 = vcmp.eq.s32.totalorder %v1946, 1
      %vm1979 = vcmp.eq.s32.totalorder %v1947, 1
      %vm1980 = vcmp.eq.s32.totalorder %v1948, 1
      %vm1981 = vcmp.eq.s32.totalorder %v1949, 1
      %vm1982 = vcmp.eq.s32.totalorder %v1950, 1
      %vm1983 = vcmp.eq.s32.totalorder %v1951, 1
      %vm1984 = vcmp.eq.s32.totalorder %v1952, 1
      %vm1985 = vcmp.eq.s32.totalorder %v1953, 1
      %vm1986 = vcmp.eq.s32.totalorder %v1954, 1
      %vm1987 = vcmp.eq.s32.totalorder %v1955, 1
      %vm1988 = vcmp.eq.s32.totalorder %v1956, 1
      %vm1989 = vcmp.eq.s32.totalorder %v1957, 1
      %vm1990 = vcmp.eq.s32.totalorder %v1958, 1
      %vm1991 = vmpackc.low %vm1959, %vm1959
      %vm1992 = vmpackc.low %vm1960, %vm1960
      %vm1993 = vmpackc.low %vm1961, %vm1961
      %vm1994 = vmpackc.low %vm1962, %vm1962
      %vm1995 = vmpackc.low %vm1963, %vm1963
      %vm1996 = vmpackc.low %vm1964, %vm1964
      %vm1997 = vmpackc.low %vm1965, %vm1965
      %vm1998 = vmpackc.low %vm1966, %vm1966
      %vm1999 = vmpackc.low %vm1967, %vm1967
      %vm2000 = vmpackc.low %vm1968, %vm1968
      %vm2001 = vmpackc.low %vm1969, %vm1969
      %vm2002 = vmpackc.low %vm1970, %vm1970
      %vm2003 = vmpackc.low %vm1971, %vm1971
      %vm2004 = vmpackc.low %vm1972, %vm1972
      %vm2005 = vmpackc.low %vm1973, %vm1973
      %vm2006 = vmpackc.low %vm1974, %vm1974
      %vm2007 = vmpackc.low %vm1975, %vm1975
      %vm2008 = vmpackc.low %vm1976, %vm1976
      %vm2009 = vmpackc.low %vm1977, %vm1977
      %vm2010 = vmpackc.low %vm1978, %vm1978
      %vm2011 = vmpackc.low %vm1979, %vm1979
      %vm2012 = vmpackc.low %vm1980, %vm1980
      %vm2013 = vmpackc.low %vm1981, %vm1981
      %vm2014 = vmpackc.low %vm1982, %vm1982
      %vm2015 = vmpackc.low %vm1983, %vm1983
      %vm2016 = vmpackc.low %vm1984, %vm1984
      %vm2017 = vmpackc.low %vm1985, %vm1985
      %vm2018 = vmpackc.low %vm1986, %vm1986
      %vm2019 = vmpackc.low %vm1987, %vm1987
      %vm2020 = vmpackc.low %vm1988, %vm1988
      %vm2021 = vmpackc.low %vm1989, %vm1989
      %vm2022 = vmpackc.low %vm1990, %vm1990
      %v2023 = vsel %vm1991, 65537, 0
      %v2024 = vsel %vm1992, 65537, 0
      %v2025 = vsel %vm1993, 65537, 0
      %v2026 = vsel %vm1994, 65537, 0
      %v2027 = vsel %vm1995, 65537, 0
      %v2028 = vsel %vm1996, 65537, 0
      %v2029 = vsel %vm1997, 65537, 0
      %v2030 = vsel %vm1998, 65537, 0
      %v2031 = vsel %vm1999, 65537, 0
      %v2032 = vsel %vm2000, 65537, 0
      %v2033 = vsel %vm2001, 65537, 0
      %v2034 = vsel %vm2002, 65537, 0
      %v2035 = vsel %vm2003, 65537, 0
      %v2036 = vsel %vm2004, 65537, 0
      %v2037 = vsel %vm2005, 65537, 0
      %v2038 = vsel %vm2006, 65537, 0
      %v2039 = vsel %vm2007, 65537, 0
      %v2040 = vsel %vm2008, 65537, 0
      %v2041 = vsel %vm2009, 65537, 0
      %v2042 = vsel %vm2010, 65537, 0
      %v2043 = vsel %vm2011, 65537, 0
      %v2044 = vsel %vm2012, 65537, 0
      %v2045 = vsel %vm2013, 65537, 0
      %v2046 = vsel %vm2014, 65537, 0
      %v2047 = vsel %vm2015, 65537, 0
      %v2048 = vsel %vm2016, 65537, 0
      %v2049 = vsel %vm2017, 65537, 0
      %v2050 = vsel %vm2018, 65537, 0
      %v2051 = vsel %vm2019, 65537, 0
      %v2052 = vsel %vm2020, 65537, 0
      %v2053 = vsel %vm2021, 65537, 0
      %v2054 = vsel %vm2022, 65537, 0
      %v2055 = vunpack.c.l.b16 %v2023
      %v2056 = vunpack.c.l.b16 %v2024
      %v2057 = vunpack.c.l.b16 %v2025
      %v2058 = vunpack.c.l.b16 %v2026
      %v2059 = vunpack.c.l.b16 %v2027
      %v2060 = vunpack.c.l.b16 %v2028
      %v2061 = vunpack.c.l.b16 %v2029
      %v2062 = vunpack.c.l.b16 %v2030
      %v2063 = vunpack.c.l.b16 %v2031
      %v2064 = vunpack.c.l.b16 %v2032
      %v2065 = vunpack.c.l.b16 %v2033
      %v2066 = vunpack.c.l.b16 %v2034
      %v2067 = vunpack.c.l.b16 %v2035
      %v2068 = vunpack.c.l.b16 %v2036
      %v2069 = vunpack.c.l.b16 %v2037
      %v2070 = vunpack.c.l.b16 %v2038
      %v2071 = vunpack.c.l.b16 %v2039
      %v2072 = vunpack.c.l.b16 %v2040
      %v2073 = vunpack.c.l.b16 %v2041
      %v2074 = vunpack.c.l.b16 %v2042
      %v2075 = vunpack.c.l.b16 %v2043
      %v2076 = vunpack.c.l.b16 %v2044
      %v2077 = vunpack.c.l.b16 %v2045
      %v2078 = vunpack.c.l.b16 %v2046
      %v2079 = vunpack.c.l.b16 %v2047
      %v2080 = vunpack.c.l.b16 %v2048
      %v2081 = vunpack.c.l.b16 %v2049
      %v2082 = vunpack.c.l.b16 %v2050
      %v2083 = vunpack.c.l.b16 %v2051
      %v2084 = vunpack.c.l.b16 %v2052
      %v2085 = vunpack.c.l.b16 %v2053
      %v2086 = vunpack.c.l.b16 %v2054
      %v2087 = vpack.c.b16 %v2056, %v2055
      %v2088 = vpack.c.b16 %v2058, %v2057
      %v2089 = vpack.c.b16 %v2060, %v2059
      %v2090 = vpack.c.b16 %v2062, %v2061
      %v2091 = vpack.c.b16 %v2064, %v2063
      %v2092 = vpack.c.b16 %v2066, %v2065
      %v2093 = vpack.c.b16 %v2068, %v2067
      %v2094 = vpack.c.b16 %v2070, %v2069
      %v2095 = vpack.c.b16 %v2072, %v2071
      %v2096 = vpack.c.b16 %v2074, %v2073
      %v2097 = vpack.c.b16 %v2076, %v2075
      %v2098 = vpack.c.b16 %v2078, %v2077
      %v2099 = vpack.c.b16 %v2080, %v2079
      %v2100 = vpack.c.b16 %v2082, %v2081
      %v2101 = vpack.c.b16 %v2084, %v2083
      %v2102 = vpack.c.b16 %v2086, %v2085
      %vm2103 = vcmp.ne.s16.totalorder %v2087, 0
      %vm2104 = vcmp.ne.s16.totalorder %v2088, 0
      %vm2105 = vcmp.ne.s16.totalorder %v2089, 0
      %vm2106 = vcmp.ne.s16.totalorder %v2090, 0
      %vm2107 = vcmp.ne.s16.totalorder %v2091, 0
      %vm2108 = vcmp.ne.s16.totalorder %v2092, 0
      %vm2109 = vcmp.ne.s16.totalorder %v2093, 0
      %vm2110 = vcmp.ne.s16.totalorder %v2094, 0
      %vm2111 = vcmp.ne.s16.totalorder %v2095, 0
      %vm2112 = vcmp.ne.s16.totalorder %v2096, 0
      %vm2113 = vcmp.ne.s16.totalorder %v2097, 0
      %vm2114 = vcmp.ne.s16.totalorder %v2098, 0
      %vm2115 = vcmp.ne.s16.totalorder %v2099, 0
      %vm2116 = vcmp.ne.s16.totalorder %v2100, 0
      %vm2117 = vcmp.ne.s16.totalorder %v2101, 0
      %vm2118 = vcmp.ne.s16.totalorder %v2102, 0
      %v2119 = vsel %vm2103, %v1926, 0
      %v2120 = vsel %vm2104, %v1799, 0
      %v2121 = vsel %vm2105, %v1807, 0
      %v2122 = vsel %vm2106, %v1815, 0
      %v2123 = vsel %vm2107, %v1823, 0
      %v2124 = vsel %vm2108, %v1831, 0
      %v2125 = vsel %vm2109, %v1839, 0
      %v2126 = vsel %vm2110, %v1847, 0
      %v2127 = vsel %vm2111, %v1855, 0
      %v2128 = vsel %vm2112, %v1863, 0
      %v2129 = vsel %vm2113, %v1871, 0
      %v2130 = vsel %vm2114, %v1879, 0
      %v2131 = vsel %vm2115, %v1887, 0
      %v2132 = vsel %vm2116, %v1895, 0
      %v2133 = vsel %vm2117, %v1903, 0
      %v2134 = vsel %vm2118, %v1907, 0
      %vm2135 = vcmp.lt.s32.totalorder %v1699, 15
      %vm2136 = vcmp.lt.s32.totalorder %v1700, 15
      %vm2137 = vcmp.lt.s32.totalorder %v1701, 15
      %vm2138 = vcmp.lt.s32.totalorder %v1702, 15
      %vm2139 = vcmp.lt.s32.totalorder %v1703, 15
      %vm2140 = vcmp.lt.s32.totalorder %v1704, 15
      %vm2141 = vcmp.lt.s32.totalorder %v1705, 15
      %vm2142 = vcmp.lt.s32.totalorder %v1706, 15
      %vm2143 = vcmp.lt.s32.totalorder %v1707, 15
      %vm2144 = vcmp.lt.s32.totalorder %v1708, 15
      %vm2145 = vcmp.lt.s32.totalorder %v1709, 15
      %vm2146 = vcmp.lt.s32.totalorder %v1710, 15
      %vm2147 = vcmp.lt.s32.totalorder %v1711, 15
      %vm2148 = vcmp.lt.s32.totalorder %v1712, 15
      %vm2149 = vcmp.lt.s32.totalorder %v1713, 15
      %vm2150 = vcmp.lt.s32.totalorder %v1714, 15
      %vm2151 = vcmp.lt.s32.totalorder %v1715, 15
      %vm2152 = vcmp.lt.s32.totalorder %v1716, 15
      %vm2153 = vcmp.lt.s32.totalorder %v1717, 15
      %vm2154 = vcmp.lt.s32.totalorder %v1718, 15
      %vm2155 = vcmp.lt.s32.totalorder %v1719, 15
      %vm2156 = vcmp.lt.s32.totalorder %v1720, 15
      %vm2157 = vcmp.lt.s32.totalorder %v1721, 15
      %vm2158 = vcmp.lt.s32.totalorder %v1722, 15
      %vm2159 = vcmp.lt.s32.totalorder %v1723, 15
      %vm2160 = vcmp.lt.s32.totalorder %v1724, 15
      %vm2161 = vcmp.lt.s32.totalorder %v1725, 15
      %vm2162 = vcmp.lt.s32.totalorder %v1726, 15
      %vm2163 = vcmp.lt.s32.totalorder %v1727, 15
      %vm2164 = vcmp.lt.s32.totalorder %v1728, 15
      %vm2165 = vcmp.lt.s32.totalorder %v1729, 15
      %vm2166 = vcmp.lt.s32.totalorder %v1730, 15
      %vm2167 = vsmask.f32 7424
      %v2168 = vrot.slane %v1789, 1
      %v2169 = vor.u32 %v1786, %v2168
      %v2170 = vrot.slane %v1796, 1
      %v2171 = vsel %vm2167, %v2169, %v2170
      %v2172 = vor.u32 %v1793, %v2170
      %v2173 = vrot.slane %v1804, 1
      %v2174 = vsel %vm2167, %v2172, %v2173
      %v2175 = vor.u32 %v1801, %v2173
      %v2176 = vrot.slane %v1812, 1
      %v2177 = vsel %vm2167, %v2175, %v2176
      %v2178 = vor.u32 %v1809, %v2176
      %v2179 = vrot.slane %v1820, 1
      %v2180 = vsel %vm2167, %v2178, %v2179
      %v2181 = vor.u32 %v1817, %v2179
      %v2182 = vrot.slane %v1828, 1
      %v2183 = vsel %vm2167, %v2181, %v2182
      %v2184 = vor.u32 %v1825, %v2182
      %v2185 = vrot.slane %v1836, 1
      %v2186 = vsel %vm2167, %v2184, %v2185
      %v2187 = vor.u32 %v1833, %v2185
      %v2188 = vrot.slane %v1844, 1
      %v2189 = vsel %vm2167, %v2187, %v2188
      %v2190 = vor.u32 %v1841, %v2188
      %v2191 = vrot.slane %v1852, 1
      %v2192 = vsel %vm2167, %v2190, %v2191
      %v2193 = vor.u32 %v1849, %v2191
      %v2194 = vrot.slane %v1860, 1
      %v2195 = vsel %vm2167, %v2193, %v2194
      %v2196 = vor.u32 %v1857, %v2194
      %v2197 = vrot.slane %v1868, 1
      %v2198 = vsel %vm2167, %v2196, %v2197
      %v2199 = vor.u32 %v1865, %v2197
      %v2200 = vrot.slane %v1876, 1
      %v2201 = vsel %vm2167, %v2199, %v2200
      %v2202 = vor.u32 %v1873, %v2200
      %v2203 = vrot.slane %v1884, 1
      %v2204 = vsel %vm2167, %v2202, %v2203
      %v2205 = vor.u32 %v1881, %v2203
      %v2206 = vrot.slane %v1892, 1
      %v2207 = vsel %vm2167, %v2205, %v2206
      %v2208 = vor.u32 %v1889, %v2206
      %v2209 = vrot.slane %v1900, 1
      %v2210 = vsel %vm2167, %v2208, %v2209
      %v2211 = vor.u32 %v1897, %v2209
      %v2212 = vrot.slane %v1904, 1
      %v2213 = vsel %vm2167, %v2211, %v2212
      %v2214 = vor.u32 %v1780, %v2212
      %vm2232 = vcmask 1047552
      %vm2233 = vmand %vm2232, %vm2167
      %v2234 = vsel %vm2233, %v2214, %v2168
      %v2235 = vsel %vm2135, 1, 0
      %v2236 = vsel %vm2136, 1, 0
      %v2237 = vsel %vm2137, 1, 0
      %v2238 = vsel %vm2138, 1, 0
      %v2239 = vsel %vm2139, 1, 0
      %v2240 = vsel %vm2140, 1, 0
      %v2241 = vsel %vm2141, 1, 0
      %v2242 = vsel %vm2142, 1, 0
      %v2243 = vsel %vm2143, 1, 0
      %v2244 = vsel %vm2144, 1, 0
      %v2245 = vsel %vm2145, 1, 0
      %v2246 = vsel %vm2146, 1, 0
      %v2247 = vsel %vm2147, 1, 0
      %v2248 = vsel %vm2148, 1, 0
      %v2249 = vsel %vm2149, 1, 0
      %v2250 = vsel %vm2150, 1, 0
      %v2251 = vsel %vm2151, 1, 0
      %v2252 = vsel %vm2152, 1, 0
      %v2253 = vsel %vm2153, 1, 0
      %v2254 = vsel %vm2154, 1, 0
      %v2255 = vsel %vm2155, 1, 0
      %v2256 = vsel %vm2156, 1, 0
      %v2257 = vsel %vm2157, 1, 0
      %v2258 = vsel %vm2158, 1, 0
      %v2259 = vsel %vm2159, 1, 0
      %v2260 = vsel %vm2160, 1, 0
      %v2261 = vsel %vm2161, 1, 0
      %v2262 = vsel %vm2162, 1, 0
      %v2263 = vsel %vm2163, 1, 0
      %v2264 = vsel %vm2164, 1, 0
      %v2265 = vsel %vm2165, 1, 0
      %v2266 = vsel %vm2166, 1, 0
      %vm2267 = vcmp.eq.s32.totalorder %v2235, 1
      %vm2268 = vcmp.eq.s32.totalorder %v2236, 1
      %vm2269 = vcmp.eq.s32.totalorder %v2237, 1
      %vm2270 = vcmp.eq.s32.totalorder %v2238, 1
      %vm2271 = vcmp.eq.s32.totalorder %v2239, 1
      %vm2272 = vcmp.eq.s32.totalorder %v2240, 1
      %vm2273 = vcmp.eq.s32.totalorder %v2241, 1
      %vm2274 = vcmp.eq.s32.totalorder %v2242, 1
      %vm2275 = vcmp.eq.s32.totalorder %v2243, 1
      %vm2276 = vcmp.eq.s32.totalorder %v2244, 1
      %vm2277 = vcmp.eq.s32.totalorder %v2245, 1
      %vm2278 = vcmp.eq.s32.totalorder %v2246, 1
      %vm2279 = vcmp.eq.s32.totalorder %v2247, 1
      %vm2280 = vcmp.eq.s32.totalorder %v2248, 1
      %vm2281 = vcmp.eq.s32.totalorder %v2249, 1
      %vm2282 = vcmp.eq.s32.totalorder %v2250, 1
      %vm2283 = vcmp.eq.s32.totalorder %v2251, 1
      %vm2284 = vcmp.eq.s32.totalorder %v2252, 1
      %vm2285 = vcmp.eq.s32.totalorder %v2253, 1
      %vm2286 = vcmp.eq.s32.totalorder %v2254, 1
      %vm2287 = vcmp.eq.s32.totalorder %v2255, 1
      %vm2288 = vcmp.eq.s32.totalorder %v2256, 1
      %vm2289 = vcmp.eq.s32.totalorder %v2257, 1
      %vm2290 = vcmp.eq.s32.totalorder %v2258, 1
      %vm2291 = vcmp.eq.s32.totalorder %v2259, 1
      %vm2292 = vcmp.eq.s32.totalorder %v2260, 1
      %vm2293 = vcmp.eq.s32.totalorder %v2261, 1
      %vm2294 = vcmp.eq.s32.totalorder %v2262, 1
      %vm2295 = vcmp.eq.s32.totalorder %v2263, 1
      %vm2296 = vcmp.eq.s32.totalorder %v2264, 1
      %vm2297 = vcmp.eq.s32.totalorder %v2265, 1
      %vm2298 = vcmp.eq.s32.totalorder %v2266, 1
      %vm2299 = vmpackc.low %vm2267, %vm2267
      %vm2300 = vmpackc.low %vm2268, %vm2268
      %vm2301 = vmpackc.low %vm2269, %vm2269
      %vm2302 = vmpackc.low %vm2270, %vm2270
      %vm2303 = vmpackc.low %vm2271, %vm2271
      %vm2304 = vmpackc.low %vm2272, %vm2272
      %vm2305 = vmpackc.low %vm2273, %vm2273
      %vm2306 = vmpackc.low %vm2274, %vm2274
      %vm2307 = vmpackc.low %vm2275, %vm2275
      %vm2308 = vmpackc.low %vm2276, %vm2276
      %vm2309 = vmpackc.low %vm2277, %vm2277
      %vm2310 = vmpackc.low %vm2278, %vm2278
      %vm2311 = vmpackc.low %vm2279, %vm2279
      %vm2312 = vmpackc.low %vm2280, %vm2280
      %vm2313 = vmpackc.low %vm2281, %vm2281
      %vm2314 = vmpackc.low %vm2282, %vm2282
      %vm2315 = vmpackc.low %vm2283, %vm2283
      %vm2316 = vmpackc.low %vm2284, %vm2284
      %vm2317 = vmpackc.low %vm2285, %vm2285
      %vm2318 = vmpackc.low %vm2286, %vm2286
      %vm2319 = vmpackc.low %vm2287, %vm2287
      %vm2320 = vmpackc.low %vm2288, %vm2288
      %vm2321 = vmpackc.low %vm2289, %vm2289
      %vm2322 = vmpackc.low %vm2290, %vm2290
      %vm2323 = vmpackc.low %vm2291, %vm2291
      %vm2324 = vmpackc.low %vm2292, %vm2292
      %vm2325 = vmpackc.low %vm2293, %vm2293
      %vm2326 = vmpackc.low %vm2294, %vm2294
      %vm2327 = vmpackc.low %vm2295, %vm2295
      %vm2328 = vmpackc.low %vm2296, %vm2296
      %vm2329 = vmpackc.low %vm2297, %vm2297
      %vm2330 = vmpackc.low %vm2298, %vm2298
      %v2331 = vsel %vm2299, 65537, 0
      %v2332 = vsel %vm2300, 65537, 0
      %v2333 = vsel %vm2301, 65537, 0
      %v2334 = vsel %vm2302, 65537, 0
      %v2335 = vsel %vm2303, 65537, 0
      %v2336 = vsel %vm2304, 65537, 0
      %v2337 = vsel %vm2305, 65537, 0
      %v2338 = vsel %vm2306, 65537, 0
      %v2339 = vsel %vm2307, 65537, 0
      %v2340 = vsel %vm2308, 65537, 0
      %v2341 = vsel %vm2309, 65537, 0
      %v2342 = vsel %vm2310, 65537, 0
      %v2343 = vsel %vm2311, 65537, 0
      %v2344 = vsel %vm2312, 65537, 0
      %v2345 = vsel %vm2313, 65537, 0
      %v2346 = vsel %vm2314, 65537, 0
      %v2347 = vsel %vm2315, 65537, 0
      %v2348 = vsel %vm2316, 65537, 0
      %v2349 = vsel %vm2317, 65537, 0
      %v2350 = vsel %vm2318, 65537, 0
      %v2351 = vsel %vm2319, 65537, 0
      %v2352 = vsel %vm2320, 65537, 0
      %v2353 = vsel %vm2321, 65537, 0
      %v2354 = vsel %vm2322, 65537, 0
      %v2355 = vsel %vm2323, 65537, 0
      %v2356 = vsel %vm2324, 65537, 0
      %v2357 = vsel %vm2325, 65537, 0
      %v2358 = vsel %vm2326, 65537, 0
      %v2359 = vsel %vm2327, 65537, 0
      %v2360 = vsel %vm2328, 65537, 0
      %v2361 = vsel %vm2329, 65537, 0
      %v2362 = vsel %vm2330, 65537, 0
      %v2363 = vunpack.c.l.b16 %v2331
      %v2364 = vunpack.c.l.b16 %v2332
      %v2365 = vunpack.c.l.b16 %v2333
      %v2366 = vunpack.c.l.b16 %v2334
      %v2367 = vunpack.c.l.b16 %v2335
      %v2368 = vunpack.c.l.b16 %v2336
      %v2369 = vunpack.c.l.b16 %v2337
      %v2370 = vunpack.c.l.b16 %v2338
      %v2371 = vunpack.c.l.b16 %v2339
      %v2372 = vunpack.c.l.b16 %v2340
      %v2373 = vunpack.c.l.b16 %v2341
      %v2374 = vunpack.c.l.b16 %v2342
      %v2375 = vunpack.c.l.b16 %v2343
      %v2376 = vunpack.c.l.b16 %v2344
      %v2377 = vunpack.c.l.b16 %v2345
      %v2378 = vunpack.c.l.b16 %v2346
      %v2379 = vunpack.c.l.b16 %v2347
      %v2380 = vunpack.c.l.b16 %v2348
      %v2381 = vunpack.c.l.b16 %v2349
      %v2382 = vunpack.c.l.b16 %v2350
      %v2383 = vunpack.c.l.b16 %v2351
      %v2384 = vunpack.c.l.b16 %v2352
      %v2385 = vunpack.c.l.b16 %v2353
      %v2386 = vunpack.c.l.b16 %v2354
      %v2387 = vunpack.c.l.b16 %v2355
      %v2388 = vunpack.c.l.b16 %v2356
      %v2389 = vunpack.c.l.b16 %v2357
      %v2390 = vunpack.c.l.b16 %v2358
      %v2391 = vunpack.c.l.b16 %v2359
      %v2392 = vunpack.c.l.b16 %v2360
      %v2393 = vunpack.c.l.b16 %v2361
      %v2394 = vunpack.c.l.b16 %v2362
      %v2395 = vpack.c.b16 %v2364, %v2363
      %v2396 = vpack.c.b16 %v2366, %v2365
      %v2397 = vpack.c.b16 %v2368, %v2367
      %v2398 = vpack.c.b16 %v2370, %v2369
      %v2399 = vpack.c.b16 %v2372, %v2371
      %v2400 = vpack.c.b16 %v2374, %v2373
      %v2401 = vpack.c.b16 %v2376, %v2375
      %v2402 = vpack.c.b16 %v2378, %v2377
      %v2403 = vpack.c.b16 %v2380, %v2379
      %v2404 = vpack.c.b16 %v2382, %v2381
      %v2405 = vpack.c.b16 %v2384, %v2383
      %v2406 = vpack.c.b16 %v2386, %v2385
      %v2407 = vpack.c.b16 %v2388, %v2387
      %v2408 = vpack.c.b16 %v2390, %v2389
      %v2409 = vpack.c.b16 %v2392, %v2391
      %v2410 = vpack.c.b16 %v2394, %v2393
      %vm2411 = vcmp.ne.s16.totalorder %v2395, 0
      %vm2412 = vcmp.ne.s16.totalorder %v2396, 0
      %vm2413 = vcmp.ne.s16.totalorder %v2397, 0
      %vm2414 = vcmp.ne.s16.totalorder %v2398, 0
      %vm2415 = vcmp.ne.s16.totalorder %v2399, 0
      %vm2416 = vcmp.ne.s16.totalorder %v2400, 0
      %vm2417 = vcmp.ne.s16.totalorder %v2401, 0
      %vm2418 = vcmp.ne.s16.totalorder %v2402, 0
      %vm2419 = vcmp.ne.s16.totalorder %v2403, 0
      %vm2420 = vcmp.ne.s16.totalorder %v2404, 0
      %vm2421 = vcmp.ne.s16.totalorder %v2405, 0
      %vm2422 = vcmp.ne.s16.totalorder %v2406, 0
      %vm2423 = vcmp.ne.s16.totalorder %v2407, 0
      %vm2424 = vcmp.ne.s16.totalorder %v2408, 0
      %vm2425 = vcmp.ne.s16.totalorder %v2409, 0
      %vm2426 = vcmp.ne.s16.totalorder %v2410, 0
      %v2427 = vsel %vm2411, %v2171, 0
      %v2428 = vsel %vm2412, %v2174, 0
      %v2429 = vsel %vm2413, %v2177, 0
      %v2430 = vsel %vm2414, %v2180, 0
      %v2431 = vsel %vm2415, %v2183, 0
      %v2432 = vsel %vm2416, %v2186, 0
      %v2433 = vsel %vm2417, %v2189, 0
      %v2434 = vsel %vm2418, %v2192, 0
      %v2435 = vsel %vm2419, %v2195, 0
      %v2436 = vsel %vm2420, %v2198, 0
      %v2437 = vsel %vm2421, %v2201, 0
      %v2438 = vsel %vm2422, %v2204, 0
      %v2439 = vsel %vm2423, %v2207, 0
      %v2440 = vsel %vm2424, %v2210, 0
      %v2441 = vsel %vm2425, %v2213, 0
      %v2442 = vsel %vm2426, %v2234, 0
      %2459 = vrot.lane.b32.xlu0 %v1731, 8
      %v2460 = vpop.permute.xlu0 %2459
      %2461 = vrot.lane.b32.xlu0 %v1732, 8
      %v2462 = vpop.permute.xlu0 %2461
      %2463 = vrot.lane.b32.xlu0 %v1733, 8
      %v2464 = vpop.permute.xlu0 %2463
      %2465 = vrot.lane.b32.xlu0 %v1734, 8
      %v2466 = vpop.permute.xlu0 %2465
      %2467 = vrot.lane.b32.xlu0 %v1735, 8
      %v2468 = vpop.permute.xlu0 %2467
      %2469 = vrot.lane.b32.xlu0 %v1736, 8
      %v2470 = vpop.permute.xlu0 %2469
      %2471 = vrot.lane.b32.xlu0 %v1737, 8
      %v2472 = vpop.permute.xlu0 %2471
      %2473 = vrot.lane.b32.xlu0 %v1738, 8
      %v2474 = vpop.permute.xlu0 %2473
      %2475 = vrot.lane.b32.xlu0 %v1739, 8
      %v2476 = vpop.permute.xlu0 %2475
      %2477 = vrot.lane.b32.xlu0 %v1740, 8
      %v2478 = vpop.permute.xlu0 %2477
      %2479 = vrot.lane.b32.xlu0 %v1741, 8
      %v2480 = vpop.permute.xlu0 %2479
      %2481 = vrot.lane.b32.xlu0 %v1742, 8
      %v2482 = vpop.permute.xlu0 %2481
      %2483 = vrot.lane.b32.xlu0 %v1743, 8
      %v2484 = vpop.permute.xlu0 %2483
      %2485 = vrot.lane.b32.xlu0 %v1744, 8
      %v2486 = vpop.permute.xlu0 %2485
      %2487 = vrot.lane.b32.xlu0 %v1745, 8
      %v2488 = vpop.permute.xlu0 %2487
      %2489 = vrot.lane.b32.xlu0 %v1746, 8
      %v2490 = vpop.permute.xlu0 %2489
      %2507 = vrot.lane.b32.xlu0 %v2427, 16
      %v2508 = vpop.permute.xlu0 %2507
      %2509 = vrot.lane.b32.xlu0 %v2428, 16
      %v2510 = vpop.permute.xlu0 %2509
      %2511 = vrot.lane.b32.xlu0 %v2429, 16
      %v2512 = vpop.permute.xlu0 %2511
      %2513 = vrot.lane.b32.xlu0 %v2430, 16
      %v2514 = vpop.permute.xlu0 %2513
      %2515 = vrot.lane.b32.xlu0 %v2431, 16
      %v2516 = vpop.permute.xlu0 %2515
      %2517 = vrot.lane.b32.xlu0 %v2432, 16
      %v2518 = vpop.permute.xlu0 %2517
      %2519 = vrot.lane.b32.xlu0 %v2433, 16
      %v2520 = vpop.permute.xlu0 %2519
      %2521 = vrot.lane.b32.xlu0 %v2434, 16
      %v2522 = vpop.permute.xlu0 %2521
      %2523 = vrot.lane.b32.xlu0 %v2435, 16
      %v2524 = vpop.permute.xlu0 %2523
      %2525 = vrot.lane.b32.xlu0 %v2436, 16
      %v2526 = vpop.permute.xlu0 %2525
      %2527 = vrot.lane.b32.xlu0 %v2437, 16
      %v2528 = vpop.permute.xlu0 %2527
      %2529 = vrot.lane.b32.xlu0 %v2438, 16
      %v2530 = vpop.permute.xlu0 %2529
      %2531 = vrot.lane.b32.xlu0 %v2439, 16
      %v2532 = vpop.permute.xlu0 %2531
      %2533 = vrot.lane.b32.xlu0 %v2440, 16
      %v2534 = vpop.permute.xlu0 %2533
      %2535 = vrot.lane.b32.xlu0 %v2441, 16
      %v2536 = vpop.permute.xlu0 %2535
      %2537 = vrot.lane.b32.xlu0 %v2442, 16
      %v2538 = vpop.permute.xlu0 %2537
      %v2541 = vsel %vm982, %v2119, %v2460
      %v2544 = vsel %vm982, %v2120, %v2462
      %v2547 = vsel %vm982, %v2121, %v2464
      %v2550 = vsel %vm982, %v2122, %v2466
      %v2553 = vsel %vm982, %v2123, %v2468
      %v2556 = vsel %vm982, %v2124, %v2470
      %v2559 = vsel %vm982, %v2125, %v2472
      %v2562 = vsel %vm982, %v2126, %v2474
      %v2565 = vsel %vm982, %v2127, %v2476
      %v2568 = vsel %vm982, %v2128, %v2478
      %v2571 = vsel %vm982, %v2129, %v2480
      %v2574 = vsel %vm982, %v2130, %v2482
      %v2577 = vsel %vm982, %v2131, %v2484
      %v2580 = vsel %vm982, %v2132, %v2486
      %v2583 = vsel %vm982, %v2133, %v2488
      %v2586 = vsel %vm982, %v2134, %v2490
      %vm2587 = vcmask 130048
      %v2589 = vsel %vm2587, %v2541, %v2508
      %v2592 = vsel %vm2587, %v2544, %v2510
      %v2595 = vsel %vm2587, %v2547, %v2512
      %v2598 = vsel %vm2587, %v2550, %v2514
      %v2601 = vsel %vm2587, %v2553, %v2516
      %v2604 = vsel %vm2587, %v2556, %v2518
      %v2607 = vsel %vm2587, %v2559, %v2520
      %v2610 = vsel %vm2587, %v2562, %v2522
      %v2613 = vsel %vm2587, %v2565, %v2524
      %v2616 = vsel %vm2587, %v2568, %v2526
      %v2619 = vsel %vm2587, %v2571, %v2528
      %v2622 = vsel %vm2587, %v2574, %v2530
      %v2625 = vsel %vm2587, %v2577, %v2532
      %v2628 = vsel %vm2587, %v2580, %v2534
      %v2631 = vsel %vm2587, %v2583, %v2536
      %v2634 = vsel %vm2587, %v2586, %v2538
      %vm2636 = vcmask 195584
      %2637 = vst.msk [vmem:[#allocation2] sm:$0xff] %vm2636, 0
      %2638 = vst.msk [vmem:[#allocation2 + $0x88] sm:$0xff] %vm2636, 0
      %2639 = vst.msk [vmem:[#allocation2 + $0x8] sm:$0xff] %vm2636, %v2589
      %2640 = vst.msk [vmem:[#allocation2 + $0x10] sm:$0xff] %vm2636, %v2592
      %2641 = vst.msk [vmem:[#allocation2 + $0x18] sm:$0xff] %vm2636, %v2595
      %2642 = vst.msk [vmem:[#allocation2 + $0x20] sm:$0xff] %vm2636, %v2598
      %2643 = vst.msk [vmem:[#allocation2 + $0x28] sm:$0xff] %vm2636, %v2601
      %2644 = vst.msk [vmem:[#allocation2 + $0x30] sm:$0xff] %vm2636, %v2604
      %2645 = vst.msk [vmem:[#allocation2 + $0x38] sm:$0xff] %vm2636, %v2607
      %2646 = vst.msk [vmem:[#allocation2 + $0x40] sm:$0xff] %vm2636, %v2610
      %2647 = vst.msk [vmem:[#allocation2 + $0x48] sm:$0xff] %vm2636, %v2613
      %2648 = vst.msk [vmem:[#allocation2 + $0x50] sm:$0xff] %vm2636, %v2616
      %2649 = vst.msk [vmem:[#allocation2 + $0x58] sm:$0xff] %vm2636, %v2619
      %2650 = vst.msk [vmem:[#allocation2 + $0x60] sm:$0xff] %vm2636, %v2622
      %2651 = vst.msk [vmem:[#allocation2 + $0x68] sm:$0xff] %vm2636, %v2625
      %2652 = vst.msk [vmem:[#allocation2 + $0x70] sm:$0xff] %vm2636, %v2628
      %2653 = vst.msk [vmem:[#allocation2 + $0x78] sm:$0xff] %vm2636, %v2631
      %2654 = vst.msk [vmem:[#allocation2 + $0x80] sm:$0xff] %vm2636, %v2634
      %v2655 = vld [vmem:[#allocation2] sm:$0xff]
      %v2656 = vld [vmem:[#allocation2 + $0x8] sm:$0xff]
      %v2657 = vld [vmem:[#allocation2 + $0x10] sm:$0xff]
      %v2658 = vld [vmem:[#allocation2 + $0x18] sm:$0xff]
      %v2659 = vld [vmem:[#allocation2 + $0x20] sm:$0xff]
      %v2660 = vld [vmem:[#allocation2 + $0x28] sm:$0xff]
      %v2661 = vld [vmem:[#allocation2 + $0x30] sm:$0xff]
      %v2662 = vld [vmem:[#allocation2 + $0x38] sm:$0xff]
      %v2663 = vld [vmem:[#allocation2 + $0x40] sm:$0xff]
      %v2664 = vld [vmem:[#allocation2 + $0x48] sm:$0xff]
      %v2665 = vld [vmem:[#allocation2 + $0x50] sm:$0xff]
      %v2666 = vld [vmem:[#allocation2 + $0x58] sm:$0xff]
      %v2667 = vld [vmem:[#allocation2 + $0x60] sm:$0xff]
      %v2668 = vld [vmem:[#allocation2 + $0x68] sm:$0xff]
      %v2669 = vld [vmem:[#allocation2 + $0x70] sm:$0xff]
      %v2670 = vld [vmem:[#allocation2 + $0x78] sm:$0xff]
      %v2671 = vld [vmem:[%s6] sm:$0xf]
      %v2672 = vld [vmem:[%s6 + $0x4] sm:$0xf]
      %v2673 = vld [vmem:[%s6 + $0x8] sm:$0xf]
      %v2674 = vld [vmem:[#allocation2 + $0x80] sm:$0xff]
      %s2675 = scalar_lea.vmem %s6, 12
      %v2676 = vld [vmem:[%s2675] sm:$0xf]
      %v2677 = vld [vmem:[%s2675 + $0x4] sm:$0xf]
      %v2678 = vld [vmem:[%s2675 + $0x8] sm:$0xf]
      %v2682 = vunpack.c.l.b16 %v2676
      %v2683 = vunpack.c.l.b16 %v2677
      %v2684 = vunpack.c.l.b16 %v2678
      %v2685 = vpack.c.b16 %v2683, %v2682
      %v2686 = vpack.c.b16 %v2684, %v2684
      %v2689 = vsel %vm2636, %v2656, 0
      %v2692 = vsel %vm2636, %v2657, 0
      %v2695 = vsel %vm2636, %v2658, 0
      %v2698 = vsel %vm2636, %v2659, 0
      %v2701 = vsel %vm2636, %v2660, 0
      %v2704 = vsel %vm2636, %v2661, 0
      %v2707 = vsel %vm2636, %v2662, 0
      %v2710 = vsel %vm2636, %v2663, 0
      %v2713 = vsel %vm2636, %v2664, 0
      %v2716 = vsel %vm2636, %v2665, 0
      %v2719 = vsel %vm2636, %v2666, 0
      %v2722 = vsel %vm2636, %v2667, 0
      %v2725 = vsel %vm2636, %v2668, 0
      %v2728 = vsel %vm2636, %v2669, 0
      %v2731 = vsel %vm2636, %v2670, 0
      %v2734 = vsel %vm2636, %v2674, 0
      %vm2736 = vcmask 1043456
      %v2738 = vsel %vm2736, %v2686, 0
      %2740 = vmatprep.subr.bf16.mxu0 0
      %2741 = vmatpush1.bf16.msra.mxu0 %v2685
      %2742 = vmatprep.subr.bf16.mxu0 0
      %2743 = vmatpush1.bf16.msra.mxu0 %v2738
      %2744 = vmatprep.subr.bf16.mxu0 0
      %2745 = vmatpush1.bf16.msra.mxu0 0
      %2746 = vmatprep.subr.bf16.mxu0 0
      %2747 = vmatpush1.bf16.msra.mxu0 0
      %2748 = vmatprep.subr.bf16.mxu0 0
      %2749 = vmatpush1.bf16.msra.mxu0 0
      %2750 = vmatprep.subr.bf16.mxu0 0
      %2751 = vmatpush1.bf16.msra.mxu0 0
      %2752 = vmatprep.subr.bf16.mxu0 0
      %2753 = vmatpush1.bf16.msra.mxu0 0
      %2754 = vmatprep.subr.bf16.mxu0 0
      %2755 = vmatpush1.bf16.msra.mxu0 0
      %2756 = vmatprep.subr.bf16.mxu0 0
      %2757 = vmatpush1.bf16.msra.mxu0 0
      %2758 = vmatprep.subr.bf16.mxu0 0
      %2759 = vmatpush1.bf16.msra.mxu0 0
      %2760 = vmatprep.subr.bf16.mxu0 0
      %2761 = vmatpush1.bf16.msra.mxu0 0
      %2762 = vmatprep.subr.bf16.mxu0 0
      %2763 = vmatpush1.bf16.msra.mxu0 0
      %2764 = vmatprep.subr.bf16.mxu0 0
      %2765 = vmatpush1.bf16.msra.mxu0 0
      %2766 = vmatprep.subr.bf16.mxu0 0
      %2767 = vmatpush1.bf16.msra.mxu0 0
      %2768 = vmatprep.subr.bf16.mxu0 0
      %2769 = vmatpush1.bf16.msra.mxu0 0
      %2770 = vmatprep.subr.bf16.mxu0 0
      %2771 = vmatpush1.bf16.msra.mxu0 0
      %2772 = vmatprep.mubr.bf16.mxu0 0
      %2773 = vmatmul.mubr.bf16.gmra.mrb[0].mxu0 %v2689
      %v2774 = vpop.f32.mrb[0].mxu0
      %v2775 = vadd.f32 0.0, %v2774
      %v2776 = vpop.f32.mrb[0].mxu0
      %v2777 = vpop.f32.mrb[0].mxu0
      %v2778 = vadd.f32 0.0, %v2777
      %v2779 = vpop.f32.mrb[0].mxu0
      %2780 = vmatprep.mubr.bf16.mxu0 0
      %2781 = vmatmul.mubr.bf16.gmra.mrb[0].mxu0 %v2692
      %v2782 = vpop.f32.mrb[0].mxu0
      %v2783 = vadd.f32 0.0, %v2782
      %v2784 = vpop.f32.mrb[0].mxu0
      %v2785 = vpop.f32.mrb[0].mxu0
      %v2786 = vadd.f32 0.0, %v2785
      %v2787 = vpop.f32.mrb[0].mxu0
      %2788 = vmatprep.mubr.bf16.mxu0 0
      %2789 = vmatmul.mubr.bf16.gmra.mrb[0].mxu0 %v2695
      %v2790 = vpop.f32.mrb[0].mxu0
      %v2791 = vadd.f32 0.0, %v2790
      %v2792 = vpop.f32.mrb[0].mxu0
      %v2793 = vpop.f32.mrb[0].mxu0
      %v2794 = vadd.f32 0.0, %v2793
      %v2795 = vpop.f32.mrb[0].mxu0
      %2796 = vmatprep.mubr.bf16.mxu0 0
      %2797 = vmatmul.mubr.bf16.gmra.mrb[0].mxu0 %v2698
      %v2798 = vpop.f32.mrb[0].mxu0
      %v2799 = vadd.f32 0.0, %v2798
      %v2800 = vpop.f32.mrb[0].mxu0
      %v2801 = vpop.f32.mrb[0].mxu0
      %v2802 = vadd.f32 0.0, %v2801
      %v2803 = vpop.f32.mrb[0].mxu0
      %2804 = vmatprep.mubr.bf16.mxu0 0
      %2805 = vmatmul.mubr.bf16.gmra.mrb[0].mxu0 %v2701
      %v2806 = vpop.f32.mrb[0].mxu0
      %v2807 = vadd.f32 0.0, %v2806
      %v2808 = vpop.f32.mrb[0].mxu0
      %v2809 = vpop.f32.mrb[0].mxu0
      %v2810 = vadd.f32 0.0, %v2809
      %v2811 = vpop.f32.mrb[0].mxu0
      %2812 = vmatprep.mubr.bf16.mxu0 0
      %2813 = vmatmul.mubr.bf16.gmra.mrb[0].mxu0 %v2704
      %v2814 = vpop.f32.mrb[0].mxu0
      %v2815 = vadd.f32 0.0, %v2814
      %v2816 = vpop.f32.mrb[0].mxu0
      %v2817 = vpop.f32.mrb[0].mxu0
      %v2818 = vadd.f32 0.0, %v2817
      %v2819 = vpop.f32.mrb[0].mxu0
      %2820 = vmatprep.mubr.bf16.mxu0 0
      %2821 = vmatmul.mubr.bf16.gmra.mrb[0].mxu0 %v2707
      %v2822 = vpop.f32.mrb[0].mxu0
      %v2823 = vadd.f32 0.0, %v2822
      %v2824 = vpop.f32.mrb[0].mxu0
      %v2825 = vpop.f32.mrb[0].mxu0
      %v2826 = vadd.f32 0.0, %v2825
      %v2827 = vpop.f32.mrb[0].mxu0
      %2828 = vmatprep.mubr.bf16.mxu0 0
      %2829 = vmatmul.mubr.bf16.gmra.mrb[0].mxu0 %v2710
      %v2830 = vpop.f32.mrb[0].mxu0
      %v2831 = vadd.f32 0.0, %v2830
      %v2832 = vpop.f32.mrb[0].mxu0
      %v2833 = vpop.f32.mrb[0].mxu0
      %v2834 = vadd.f32 0.0, %v2833
      %v2835 = vpop.f32.mrb[0].mxu0
      %2836 = vmatprep.mubr.bf16.mxu0 0
      %2837 = vmatmul.mubr.bf16.gmra.mrb[0].mxu0 %v2713
      %v2838 = vpop.f32.mrb[0].mxu0
      %v2839 = vadd.f32 0.0, %v2838
      %v2840 = vpop.f32.mrb[0].mxu0
      %v2841 = vpop.f32.mrb[0].mxu0
      %v2842 = vadd.f32 0.0, %v2841
      %v2843 = vpop.f32.mrb[0].mxu0
      %2844 = vmatprep.mubr.bf16.mxu0 0
      %2845 = vmatmul.mubr.bf16.gmra.mrb[0].mxu0 %v2716
      %v2846 = vpop.f32.mrb[0].mxu0
      %v2847 = vadd.f32 0.0, %v2846
      %v2848 = vpop.f32.mrb[0].mxu0
      %v2849 = vpop.f32.mrb[0].mxu0
      %v2850 = vadd.f32 0.0, %v2849
      %v2851 = vpop.f32.mrb[0].mxu0
      %2852 = vmatprep.mubr.bf16.mxu0 0
      %2853 = vmatmul.mubr.bf16.gmra.mrb[0].mxu0 %v2719
      %v2854 = vpop.f32.mrb[0].mxu0
      %v2855 = vadd.f32 0.0, %v2854
      %v2856 = vpop.f32.mrb[0].mxu0
      %v2857 = vpop.f32.mrb[0].mxu0
      %v2858 = vadd.f32 0.0, %v2857
      %v2859 = vpop.f32.mrb[0].mxu0
      %2860 = vmatprep.mubr.bf16.mxu0 0
      %2861 = vmatmul.mubr.bf16.gmra.mrb[0].mxu0 %v2722
      %v2862 = vpop.f32.mrb[0].mxu0
      %v2863 = vadd.f32 0.0, %v2862
      %v2864 = vpop.f32.mrb[0].mxu0
      %v2865 = vpop.f32.mrb[0].mxu0
      %v2866 = vadd.f32 0.0, %v2865
      %v2867 = vpop.f32.mrb[0].mxu0
      %2868 = vmatprep.mubr.bf16.mxu0 0
      %2869 = vmatmul.mubr.bf16.gmra.mrb[0].mxu0 %v2725
      %v2870 = vpop.f32.mrb[0].mxu0
      %v2871 = vadd.f32 0.0, %v2870
      %v2872 = vpop.f32.mrb[0].mxu0
      %v2873 = vpop.f32.mrb[0].mxu0
      %v2874 = vadd.f32 0.0, %v2873
      %v2875 = vpop.f32.mrb[0].mxu0
      %2876 = vmatprep.mubr.bf16.mxu0 0
      %2877 = vmatmul.mubr.bf16.gmra.mrb[0].mxu0 %v2728
      %v2878 = vpop.f32.mrb[0].mxu0
      %v2879 = vadd.f32 0.0, %v2878
      %v2880 = vpop.f32.mrb[0].mxu0
      %v2881 = vpop.f32.mrb[0].mxu0
      %v2882 = vadd.f32 0.0, %v2881
      %v2883 = vpop.f32.mrb[0].mxu0
      %2884 = vmatprep.mubr.bf16.mxu0 0
      %2885 = vmatmul.mubr.bf16.gmra.mrb[0].mxu0 %v2731
      %v2886 = vpop.f32.mrb[0].mxu0
      %v2887 = vadd.f32 0.0, %v2886
      %v2888 = vpop.f32.mrb[0].mxu0
      %v2889 = vpop.f32.mrb[0].mxu0
      %v2890 = vadd.f32 0.0, %v2889
      %v2891 = vpop.f32.mrb[0].mxu0
      %2892 = vmatprep.mubr.bf16.mxu0 0
      %2893 = vmatmul.mubr.bf16.gmra.mrb[0].mxu0 %v2734
      %v2894 = vpop.f32.mrb[0].mxu0
      %v2895 = vadd.f32 0.0, %v2894
      %v2896 = vpop.f32.mrb[0].mxu0
      %v2897 = vpop.f32.mrb[0].mxu0
      %v2898 = vadd.f32 0.0, %v2897
      %v2899 = vpop.f32.mrb[0].mxu0
      %2900 = vdwg.mxu0
      %v2904 = vunpack.c.l.b16 %v2671
      %v2905 = vunpack.c.l.b16 %v2672
      %v2906 = vunpack.c.l.b16 %v2673
      %v2907 = vpack.c.b16 %v2905, %v2904
      %v2908 = vpack.c.b16 %v2906, %v2906
      %v2911 = vsel %vm2636, %v2655, 0
      %v2914 = vsel %vm2736, %v2908, 0
      %2916 = vmatprep.subr.bf16.mxu0 0
      %2917 = vmatpush1.bf16.msra.mxu0 %v2907
      %2918 = vmatprep.subr.bf16.mxu0 0
      %2919 = vmatpush1.bf16.msra.mxu0 %v2914
      %2920 = vmatprep.subr.bf16.mxu0 0
      %2921 = vmatpush1.bf16.msra.mxu0 0
      %2922 = vmatprep.subr.bf16.mxu0 0
      %2923 = vmatpush1.bf16.msra.mxu0 0
      %2924 = vmatprep.subr.bf16.mxu0 0
      %2925 = vmatpush1.bf16.msra.mxu0 0
      %2926 = vmatprep.subr.bf16.mxu0 0
      %2927 = vmatpush1.bf16.msra.mxu0 0
      %2928 = vmatprep.subr.bf16.mxu0 0
      %2929 = vmatpush1.bf16.msra.mxu0 0
      %2930 = vmatprep.subr.bf16.mxu0 0
      %2931 = vmatpush1.bf16.msra.mxu0 0
      %2932 = vmatprep.subr.bf16.mxu0 0
      %2933 = vmatpush1.bf16.msra.mxu0 0
      %2934 = vmatprep.subr.bf16.mxu0 0
      %2935 = vmatpush1.bf16.msra.mxu0 0
      %2936 = vmatprep.subr.bf16.mxu0 0
      %2937 = vmatpush1.bf16.msra.mxu0 0
      %2938 = vmatprep.subr.bf16.mxu0 0
      %2939 = vmatpush1.bf16.msra.mxu0 0
      %2940 = vmatprep.subr.bf16.mxu0 0
      %2941 = vmatpush1.bf16.msra.mxu0 0
      %2942 = vmatprep.subr.bf16.mxu0 0
      %2943 = vmatpush1.bf16.msra.mxu0 0
      %2944 = vmatprep.subr.bf16.mxu0 0
      %2945 = vmatpush1.bf16.msra.mxu0 0
      %2946 = vmatprep.subr.bf16.mxu0 0
      %2947 = vmatpush1.bf16.msra.mxu0 0
      %2948 = vmatprep.mubr.bf16.mxu0 0
      %2949 = vmatmul.mubr.bf16.gmra.mrb[0].mxu0 %v2911
      %v2950 = vpop.f32.mrb[0].mxu0
      %v2951 = vadd.f32 %v2775, %v2950
      %v2952 = vpop.f32.mrb[0].mxu0
      %v2953 = vpop.f32.mrb[0].mxu0
      %v2954 = vadd.f32 %v2778, %v2953
      %v2955 = vpop.f32.mrb[0].mxu0
      %2956 = vmatprep.mubr.bf16.mxu0 0
      %2957 = vmatmul.mubr.bf16.gmra.mrb[0].mxu0 %v2689
      %v2958 = vpop.f32.mrb[0].mxu0
      %v2959 = vadd.f32 %v2783, %v2958
      %v2960 = vpop.f32.mrb[0].mxu0
      %v2961 = vpop.f32.mrb[0].mxu0
      %v2962 = vadd.f32 %v2786, %v2961
      %v2963 = vpop.f32.mrb[0].mxu0
      %2964 = vmatprep.mubr.bf16.mxu0 0
      %2965 = vmatmul.mubr.bf16.gmra.mrb[0].mxu0 %v2692
      %v2966 = vpop.f32.mrb[0].mxu0
      %v2967 = vadd.f32 %v2791, %v2966
      %v2968 = vpop.f32.mrb[0].mxu0
      %v2969 = vpop.f32.mrb[0].mxu0
      %v2970 = vadd.f32 %v2794, %v2969
      %v2971 = vpop.f32.mrb[0].mxu0
      %2972 = vmatprep.mubr.bf16.mxu0 0
      %2973 = vmatmul.mubr.bf16.gmra.mrb[0].mxu0 %v2695
      %v2974 = vpop.f32.mrb[0].mxu0
      %v2975 = vadd.f32 %v2799, %v2974
      %v2976 = vpop.f32.mrb[0].mxu0
      %v2977 = vpop.f32.mrb[0].mxu0
      %v2978 = vadd.f32 %v2802, %v2977
      %v2979 = vpop.f32.mrb[0].mxu0
      %2980 = vmatprep.mubr.bf16.mxu0 0
      %2981 = vmatmul.mubr.bf16.gmra.mrb[0].mxu0 %v2698
      %v2982 = vpop.f32.mrb[0].mxu0
      %v2983 = vadd.f32 %v2807, %v2982
      %v2984 = vpop.f32.mrb[0].mxu0
      %v2985 = vpop.f32.mrb[0].mxu0
      %v2986 = vadd.f32 %v2810, %v2985
      %v2987 = vpop.f32.mrb[0].mxu0
      %2988 = vmatprep.mubr.bf16.mxu0 0
      %2989 = vmatmul.mubr.bf16.gmra.mrb[0].mxu0 %v2701
      %v2990 = vpop.f32.mrb[0].mxu0
      %v2991 = vadd.f32 %v2815, %v2990
      %v2992 = vpop.f32.mrb[0].mxu0
      %v2993 = vpop.f32.mrb[0].mxu0
      %v2994 = vadd.f32 %v2818, %v2993
      %v2995 = vpop.f32.mrb[0].mxu0
      %2996 = vmatprep.mubr.bf16.mxu0 0
      %2997 = vmatmul.mubr.bf16.gmra.mrb[0].mxu0 %v2704
      %v2998 = vpop.f32.mrb[0].mxu0
      %v2999 = vadd.f32 %v2823, %v2998
      %v3000 = vpop.f32.mrb[0].mxu0
      %v3001 = vpop.f32.mrb[0].mxu0
      %v3002 = vadd.f32 %v2826, %v3001
      %v3003 = vpop.f32.mrb[0].mxu0
      %3004 = vmatprep.mubr.bf16.mxu0 0
      %3005 = vmatmul.mubr.bf16.gmra.mrb[0].mxu0 %v2707
      %v3006 = vpop.f32.mrb[0].mxu0
      %v3007 = vadd.f32 %v2831, %v3006
      %v3008 = vpop.f32.mrb[0].mxu0
      %v3009 = vpop.f32.mrb[0].mxu0
      %v3010 = vadd.f32 %v2834, %v3009
      %v3011 = vpop.f32.mrb[0].mxu0
      %3012 = vmatprep.mubr.bf16.mxu0 0
      %3013 = vmatmul.mubr.bf16.gmra.mrb[0].mxu0 %v2710
      %v3014 = vpop.f32.mrb[0].mxu0
      %v3015 = vadd.f32 %v2839, %v3014
      %v3016 = vpop.f32.mrb[0].mxu0
      %v3017 = vpop.f32.mrb[0].mxu0
      %v3018 = vadd.f32 %v2842, %v3017
      %v3019 = vpop.f32.mrb[0].mxu0
      %3020 = vmatprep.mubr.bf16.mxu0 0
      %3021 = vmatmul.mubr.bf16.gmra.mrb[0].mxu0 %v2713
      %v3022 = vpop.f32.mrb[0].mxu0
      %v3023 = vadd.f32 %v2847, %v3022
      %v3024 = vpop.f32.mrb[0].mxu0
      %v3025 = vpop.f32.mrb[0].mxu0
      %v3026 = vadd.f32 %v2850, %v3025
      %v3027 = vpop.f32.mrb[0].mxu0
      %3028 = vmatprep.mubr.bf16.mxu0 0
      %3029 = vmatmul.mubr.bf16.gmra.mrb[0].mxu0 %v2716
      %v3030 = vpop.f32.mrb[0].mxu0
      %v3031 = vadd.f32 %v2855, %v3030
      %v3032 = vpop.f32.mrb[0].mxu0
      %v3033 = vpop.f32.mrb[0].mxu0
      %v3034 = vadd.f32 %v2858, %v3033
      %v3035 = vpop.f32.mrb[0].mxu0
      %3036 = vmatprep.mubr.bf16.mxu0 0
      %3037 = vmatmul.mubr.bf16.gmra.mrb[0].mxu0 %v2719
      %v3038 = vpop.f32.mrb[0].mxu0
      %v3039 = vadd.f32 %v2863, %v3038
      %v3040 = vpop.f32.mrb[0].mxu0
      %v3041 = vpop.f32.mrb[0].mxu0
      %v3042 = vadd.f32 %v2866, %v3041
      %v3043 = vpop.f32.mrb[0].mxu0
      %3044 = vmatprep.mubr.bf16.mxu0 0
      %3045 = vmatmul.mubr.bf16.gmra.mrb[0].mxu0 %v2722
      %v3046 = vpop.f32.mrb[0].mxu0
      %v3047 = vadd.f32 %v2871, %v3046
      %v3048 = vpop.f32.mrb[0].mxu0
      %v3049 = vpop.f32.mrb[0].mxu0
      %v3050 = vadd.f32 %v2874, %v3049
      %v3051 = vpop.f32.mrb[0].mxu0
      %3052 = vmatprep.mubr.bf16.mxu0 0
      %3053 = vmatmul.mubr.bf16.gmra.mrb[0].mxu0 %v2725
      %v3054 = vpop.f32.mrb[0].mxu0
      %v3055 = vadd.f32 %v2879, %v3054
      %v3056 = vpop.f32.mrb[0].mxu0
      %v3057 = vpop.f32.mrb[0].mxu0
      %v3058 = vadd.f32 %v2882, %v3057
      %v3059 = vpop.f32.mrb[0].mxu0
      %3060 = vmatprep.mubr.bf16.mxu0 0
      %3061 = vmatmul.mubr.bf16.gmra.mrb[0].mxu0 %v2728
      %v3062 = vpop.f32.mrb[0].mxu0
      %v3063 = vadd.f32 %v2887, %v3062
      %v3064 = vpop.f32.mrb[0].mxu0
      %v3065 = vpop.f32.mrb[0].mxu0
      %v3066 = vadd.f32 %v2890, %v3065
      %v3067 = vpop.f32.mrb[0].mxu0
      %3068 = vmatprep.mubr.bf16.mxu0 0
      %3069 = vmatmul.mubr.bf16.gmra.mrb[0].mxu0 %v2731
      %v3070 = vpop.f32.mrb[0].mxu0
      %v3071 = vadd.f32 %v2895, %v3070
      %v3072 = vpop.f32.mrb[0].mxu0
      %v3073 = vpop.f32.mrb[0].mxu0
      %v3074 = vadd.f32 %v2898, %v3073
      %v3075 = vpop.f32.mrb[0].mxu0
      %3076 = vdwg.mxu0
      %v3077 = vld [vmem:[#allocation2 + $0x10] sm:$0xff]
      %v3078 = vld [vmem:[#allocation2 + $0x18] sm:$0xff]
      %v3079 = vld [vmem:[#allocation2 + $0x20] sm:$0xff]
      %v3080 = vld [vmem:[#allocation2 + $0x28] sm:$0xff]
      %v3081 = vld [vmem:[#allocation2 + $0x30] sm:$0xff]
      %v3082 = vld [vmem:[#allocation2 + $0x38] sm:$0xff]
      %v3083 = vld [vmem:[#allocation2 + $0x40] sm:$0xff]
      %v3084 = vld [vmem:[#allocation2 + $0x48] sm:$0xff]
      %v3085 = vld [vmem:[#allocation2 + $0x50] sm:$0xff]
      %v3086 = vld [vmem:[#allocation2 + $0x58] sm:$0xff]
      %v3087 = vld [vmem:[#allocation2 + $0x60] sm:$0xff]
      %v3088 = vld [vmem:[#allocation2 + $0x68] sm:$0xff]
      %v3089 = vld [vmem:[#allocation2 + $0x70] sm:$0xff]
      %v3090 = vld [vmem:[#allocation2 + $0x78] sm:$0xff]
      %v3091 = vld [vmem:[#allocation2 + $0x80] sm:$0xff]
      %v3092 = vld [vmem:[#allocation2 + $0x88] sm:$0xff]
      %s3093 = scalar_lea.vmem %s6, 24
      %v3094 = vld [vmem:[%s3093] sm:$0xf]
      %v3095 = vld [vmem:[%s3093 + $0x4] sm:$0xf]
      %v3096 = vld [vmem:[%s3093 + $0x8] sm:$0xf]
      %v3100 = vunpack.c.l.b16 %v3094
      %v3101 = vunpack.c.l.b16 %v3095
      %v3102 = vunpack.c.l.b16 %v3096
      %v3103 = vpack.c.b16 %v3101, %v3100
      %v3104 = vpack.c.b16 %v3102, %v3102
      %v3107 = vsel %vm2636, %v3077, 0
      %v3110 = vsel %vm2636, %v3078, 0
      %v3113 = vsel %vm2636, %v3079, 0
      %v3116 = vsel %vm2636, %v3080, 0
      %v3119 = vsel %vm2636, %v3081, 0
      %v3122 = vsel %vm2636, %v3082, 0
      %v3125 = vsel %vm2636, %v3083, 0
      %v3128 = vsel %vm2636, %v3084, 0
      %v3131 = vsel %vm2636, %v3085, 0
      %v3134 = vsel %vm2636, %v3086, 0
      %v3137 = vsel %vm2636, %v3087, 0
      %v3140 = vsel %vm2636, %v3088, 0
      %v3143 = vsel %vm2636, %v3089, 0
      %v3146 = vsel %vm2636, %v3090, 0
      %v3149 = vsel %vm2636, %v3091, 0
      %v3152 = vsel %vm2636, %v3092, 0
      %v3155 = vsel %vm2736, %v3104, 0
      %3157 = vmatprep.subr.bf16.mxu0 0
      %3158 = vmatpush1.bf16.msra.mxu0 %v3103
      %3159 = vmatprep.subr.bf16.mxu0 0
      %3160 = vmatpush1.bf16.msra.mxu0 %v3155
      %3161 = vmatprep.subr.bf16.mxu0 0
      %3162 = vmatpush1.bf16.msra.mxu0 0
      %3163 = vmatprep.subr.bf16.mxu0 0
      %3164 = vmatpush1.bf16.msra.mxu0 0
      %3165 = vmatprep.subr.bf16.mxu0 0
      %3166 = vmatpush1.bf16.msra.mxu0 0
      %3167 = vmatprep.subr.bf16.mxu0 0
      %3168 = vmatpush1.bf16.msra.mxu0 0
      %3169 = vmatprep.subr.bf16.mxu0 0
      %3170 = vmatpush1.bf16.msra.mxu0 0
      %3171 = vmatprep.subr.bf16.mxu0 0
      %3172 = vmatpush1.bf16.msra.mxu0 0
      %3173 = vmatprep.subr.bf16.mxu0 0
      %3174 = vmatpush1.bf16.msra.mxu0 0
      %3175 = vmatprep.subr.bf16.mxu0 0
      %3176 = vmatpush1.bf16.msra.mxu0 0
      %3177 = vmatprep.subr.bf16.mxu0 0
      %3178 = vmatpush1.bf16.msra.mxu0 0
      %3179 = vmatprep.subr.bf16.mxu0 0
      %3180 = vmatpush1.bf16.msra.mxu0 0
      %3181 = vmatprep.subr.bf16.mxu0 0
      %3182 = vmatpush1.bf16.msra.mxu0 0
      %3183 = vmatprep.subr.bf16.mxu0 0
      %3184 = vmatpush1.bf16.msra.mxu0 0
      %3185 = vmatprep.subr.bf16.mxu0 0
      %3186 = vmatpush1.bf16.msra.mxu0 0
      %3187 = vmatprep.subr.bf16.mxu0 0
      %3188 = vmatpush1.bf16.msra.mxu0 0
      %3189 = vmatprep.mubr.bf16.mxu0 0
      %3190 = vmatmul.mubr.bf16.gmra.mrb[0].mxu0 %v3107
      %v3191 = vpop.f32.mrb[0].mxu0
      %v3192 = vadd.f32 0.0, %v3191
      %v3193 = vpop.f32.mrb[0].mxu0
      %v3194 = vpop.f32.mrb[0].mxu0
      %v3195 = vadd.f32 0.0, %v3194
      %v3196 = vpop.f32.mrb[0].mxu0
      %3197 = vmatprep.mubr.bf16.mxu0 0
      %3198 = vmatmul.mubr.bf16.gmra.mrb[0].mxu0 %v3110
      %v3199 = vpop.f32.mrb[0].mxu0
      %v3200 = vadd.f32 0.0, %v3199
      %v3201 = vpop.f32.mrb[0].mxu0
      %v3202 = vpop.f32.mrb[0].mxu0
      %v3203 = vadd.f32 0.0, %v3202
      %v3204 = vpop.f32.mrb[0].mxu0
      %3205 = vmatprep.mubr.bf16.mxu0 0
      %3206 = vmatmul.mubr.bf16.gmra.mrb[0].mxu0 %v3113
      %v3207 = vpop.f32.mrb[0].mxu0
      %v3208 = vadd.f32 0.0, %v3207
      %v3209 = vpop.f32.mrb[0].mxu0
      %v3210 = vpop.f32.mrb[0].mxu0
      %v3211 = vadd.f32 0.0, %v3210
      %v3212 = vpop.f32.mrb[0].mxu0
      %3213 = vmatprep.mubr.bf16.mxu0 0
      %3214 = vmatmul.mubr.bf16.gmra.mrb[0].mxu0 %v3116
      %v3215 = vpop.f32.mrb[0].mxu0
      %v3216 = vadd.f32 0.0, %v3215
      %v3217 = vpop.f32.mrb[0].mxu0
      %v3218 = vpop.f32.mrb[0].mxu0
      %v3219 = vadd.f32 0.0, %v3218
      %v3220 = vpop.f32.mrb[0].mxu0
      %3221 = vmatprep.mubr.bf16.mxu0 0
      %3222 = vmatmul.mubr.bf16.gmra.mrb[0].mxu0 %v3119
      %v3223 = vpop.f32.mrb[0].mxu0
      %v3224 = vadd.f32 0.0, %v3223
      %v3225 = vpop.f32.mrb[0].mxu0
      %v3226 = vpop.f32.mrb[0].mxu0
      %v3227 = vadd.f32 0.0, %v3226
      %v3228 = vpop.f32.mrb[0].mxu0
      %3229 = vmatprep.mubr.bf16.mxu0 0
      %3230 = vmatmul.mubr.bf16.gmra.mrb[0].mxu0 %v3122
      %v3231 = vpop.f32.mrb[0].mxu0
      %v3232 = vadd.f32 0.0, %v3231
      %v3233 = vpop.f32.mrb[0].mxu0
      %v3234 = vpop.f32.mrb[0].mxu0
      %v3235 = vadd.f32 0.0, %v3234
      %v3236 = vpop.f32.mrb[0].mxu0
      %3237 = vmatprep.mubr.bf16.mxu0 0
      %3238 = vmatmul.mubr.bf16.gmra.mrb[0].mxu0 %v3125
      %v3239 = vpop.f32.mrb[0].mxu0
      %v3240 = vadd.f32 0.0, %v3239
      %v3241 = vpop.f32.mrb[0].mxu0
      %v3242 = vpop.f32.mrb[0].mxu0
      %v3243 = vadd.f32 0.0, %v3242
      %v3244 = vpop.f32.mrb[0].mxu0
      %3245 = vmatprep.mubr.bf16.mxu0 0
      %3246 = vmatmul.mubr.bf16.gmra.mrb[0].mxu0 %v3128
      %v3247 = vpop.f32.mrb[0].mxu0
      %v3248 = vadd.f32 0.0, %v3247
      %v3249 = vpop.f32.mrb[0].mxu0
      %v3250 = vpop.f32.mrb[0].mxu0
      %v3251 = vadd.f32 0.0, %v3250
      %v3252 = vpop.f32.mrb[0].mxu0
      %3253 = vmatprep.mubr.bf16.mxu0 0
      %3254 = vmatmul.mubr.bf16.gmra.mrb[0].mxu0 %v3131
      %v3255 = vpop.f32.mrb[0].mxu0
      %v3256 = vadd.f32 0.0, %v3255
      %v3257 = vpop.f32.mrb[0].mxu0
      %v3258 = vpop.f32.mrb[0].mxu0
      %v3259 = vadd.f32 0.0, %v3258
      %v3260 = vpop.f32.mrb[0].mxu0
      %3261 = vmatprep.mubr.bf16.mxu0 0
      %3262 = vmatmul.mubr.bf16.gmra.mrb[0].mxu0 %v3134
      %v3263 = vpop.f32.mrb[0].mxu0
      %v3264 = vadd.f32 0.0, %v3263
      %v3265 = vpop.f32.mrb[0].mxu0
      %v3266 = vpop.f32.mrb[0].mxu0
      %v3267 = vadd.f32 0.0, %v3266
      %v3268 = vpop.f32.mrb[0].mxu0
      %3269 = vmatprep.mubr.bf16.mxu0 0
      %3270 = vmatmul.mubr.bf16.gmra.mrb[0].mxu0 %v3137
      %v3271 = vpop.f32.mrb[0].mxu0
      %v3272 = vadd.f32 0.0, %v3271
      %v3273 = vpop.f32.mrb[0].mxu0
      %v3274 = vpop.f32.mrb[0].mxu0
      %v3275 = vadd.f32 0.0, %v3274
      %v3276 = vpop.f32.mrb[0].mxu0
      %3277 = vmatprep.mubr.bf16.mxu0 0
      %3278 = vmatmul.mubr.bf16.gmra.mrb[0].mxu0 %v3140
      %v3279 = vpop.f32.mrb[0].mxu0
      %v3280 = vadd.f32 0.0, %v3279
      %v3281 = vpop.f32.mrb[0].mxu0
      %v3282 = vpop.f32.mrb[0].mxu0
      %v3283 = vadd.f32 0.0, %v3282
      %v3284 = vpop.f32.mrb[0].mxu0
      %3285 = vmatprep.mubr.bf16.mxu0 0
      %3286 = vmatmul.mubr.bf16.gmra.mrb[0].mxu0 %v3143
      %v3287 = vpop.f32.mrb[0].mxu0
      %v3288 = vadd.f32 0.0, %v3287
      %v3289 = vpop.f32.mrb[0].mxu0
      %v3290 = vpop.f32.mrb[0].mxu0
      %v3291 = vadd.f32 0.0, %v3290
      %v3292 = vpop.f32.mrb[0].mxu0
      %3293 = vmatprep.mubr.bf16.mxu0 0
      %3294 = vmatmul.mubr.bf16.gmra.mrb[0].mxu0 %v3146
      %v3295 = vpop.f32.mrb[0].mxu0
      %v3296 = vadd.f32 0.0, %v3295
      %v3297 = vpop.f32.mrb[0].mxu0
      %v3298 = vpop.f32.mrb[0].mxu0
      %v3299 = vadd.f32 0.0, %v3298
      %v3300 = vpop.f32.mrb[0].mxu0
      %3301 = vmatprep.mubr.bf16.mxu0 0
      %3302 = vmatmul.mubr.bf16.gmra.mrb[0].mxu0 %v3149
      %v3303 = vpop.f32.mrb[0].mxu0
      %v3304 = vadd.f32 0.0, %v3303
      %v3305 = vpop.f32.mrb[0].mxu0
      %v3306 = vpop.f32.mrb[0].mxu0
      %v3307 = vadd.f32 0.0, %v3306
      %v3308 = vpop.f32.mrb[0].mxu0
      %3309 = vmatprep.mubr.bf16.mxu0 0
      %3310 = vmatmul.mubr.bf16.gmra.mrb[0].mxu0 %v3152
      %v3311 = vpop.f32.mrb[0].mxu0
      %v3312 = vadd.f32 0.0, %v3311
      %v3313 = vpop.f32.mrb[0].mxu0
      %v3314 = vpop.f32.mrb[0].mxu0
      %v3315 = vadd.f32 0.0, %v3314
      %v3316 = vpop.f32.mrb[0].mxu0
      %3317 = vdwg.mxu0
      %v3318 = vadd.f32 %v2951, %v3192
      %v3319 = vadd.f32 %v2954, %v3195
      %v3320 = vadd.f32 %v2959, %v3200
      %v3321 = vadd.f32 %v2962, %v3203
      %v3322 = vadd.f32 %v2967, %v3208
      %v3323 = vadd.f32 %v2970, %v3211
      %v3324 = vadd.f32 %v2975, %v3216
      %v3325 = vadd.f32 %v2978, %v3219
      %v3326 = vadd.f32 %v2983, %v3224
      %v3327 = vadd.f32 %v2986, %v3227
      %v3328 = vadd.f32 %v2991, %v3232
      %v3329 = vadd.f32 %v2994, %v3235
      %v3330 = vadd.f32 %v2999, %v3240
      %v3331 = vadd.f32 %v3002, %v3243
      %v3332 = vadd.f32 %v3007, %v3248
      %v3333 = vadd.f32 %v3010, %v3251
      %v3334 = vadd.f32 %v3015, %v3256
      %v3335 = vadd.f32 %v3018, %v3259
      %v3336 = vadd.f32 %v3023, %v3264
      %v3337 = vadd.f32 %v3026, %v3267
      %v3338 = vadd.f32 %v3031, %v3272
      %v3339 = vadd.f32 %v3034, %v3275
      %v3340 = vadd.f32 %v3039, %v3280
      %v3341 = vadd.f32 %v3042, %v3283
      %v3342 = vadd.f32 %v3047, %v3288
      %v3343 = vadd.f32 %v3050, %v3291
      %v3344 = vadd.f32 %v3055, %v3296
      %v3345 = vadd.f32 %v3058, %v3299
      %v3346 = vadd.f32 %v3063, %v3304
      %v3347 = vadd.f32 %v3066, %v3307
      %v3348 = vadd.f32 %v3071, %v3312
      %v3349 = vadd.f32 %v3074, %v3315
      %v3350 = vld [vmem:[%s7] sm:$0x1]
      %v3351 = vld [vmem:[%s8] sm:$0x1]
      %v3352 = vsel %vm982, %v3318, 0.0
      %v3353 = vsel %vm982, %v3319, 0.0
      %v3354 = vadd.f32 %v3352, %v3353
      %v3355 = vsel %vm982, %v3320, 0.0
      %v3356 = vadd.f32 %v3354, %v3355
      %v3357 = vsel %vm982, %v3321, 0.0
      %v3358 = vadd.f32 %v3356, %v3357
      %v3359 = vsel %vm982, %v3322, 0.0
      %v3360 = vadd.f32 %v3358, %v3359
      %v3361 = vsel %vm982, %v3323, 0.0
      %v3362 = vadd.f32 %v3360, %v3361
      %v3363 = vsel %vm982, %v3324, 0.0
      %v3364 = vadd.f32 %v3362, %v3363
      %v3365 = vsel %vm982, %v3325, 0.0
      %v3366 = vadd.f32 %v3364, %v3365
      %v3367 = vsel %vm982, %v3326, 0.0
      %v3368 = vadd.f32 %v3366, %v3367
      %v3369 = vsel %vm982, %v3327, 0.0
      %v3370 = vadd.f32 %v3368, %v3369
      %v3371 = vsel %vm982, %v3328, 0.0
      %v3372 = vadd.f32 %v3370, %v3371
      %v3373 = vsel %vm982, %v3329, 0.0
      %v3374 = vadd.f32 %v3372, %v3373
      %v3375 = vsel %vm982, %v3330, 0.0
      %v3376 = vadd.f32 %v3374, %v3375
      %v3377 = vsel %vm982, %v3331, 0.0
      %v3378 = vadd.f32 %v3376, %v3377
      %v3379 = vsel %vm982, %v3332, 0.0
      %v3380 = vadd.f32 %v3378, %v3379
      %v3381 = vsel %vm982, %v3333, 0.0
      %v3382 = vadd.f32 %v3380, %v3381
      %v3383 = vsel %vm982, %v3334, 0.0
      %v3384 = vadd.f32 %v3382, %v3383
      %v3385 = vsel %vm982, %v3335, 0.0
      %v3386 = vadd.f32 %v3384, %v3385
      %v3387 = vsel %vm982, %v3336, 0.0
      %v3388 = vadd.f32 %v3386, %v3387
      %v3389 = vsel %vm982, %v3337, 0.0
      %v3390 = vadd.f32 %v3388, %v3389
      %v3391 = vsel %vm982, %v3338, 0.0
      %v3392 = vadd.f32 %v3390, %v3391
      %v3393 = vsel %vm982, %v3339, 0.0
      %v3394 = vadd.f32 %v3392, %v3393
      %v3395 = vsel %vm982, %v3340, 0.0
      %v3396 = vadd.f32 %v3394, %v3395
      %v3397 = vsel %vm982, %v3341, 0.0
      %v3398 = vadd.f32 %v3396, %v3397
      %v3399 = vsel %vm982, %v3342, 0.0
      %v3400 = vadd.f32 %v3398, %v3399
      %v3401 = vsel %vm982, %v3343, 0.0
      %v3402 = vadd.f32 %v3400, %v3401
      %v3403 = vsel %vm982, %v3344, 0.0
      %v3404 = vadd.f32 %v3402, %v3403
      %v3405 = vsel %vm982, %v3345, 0.0
      %v3406 = vadd.f32 %v3404, %v3405
      %v3407 = vsel %vm982, %v3346, 0.0
      %v3408 = vadd.f32 %v3406, %v3407
      %v3409 = vsel %vm982, %v3347, 0.0
      %v3410 = vadd.f32 %v3408, %v3409
      %v3411 = vsel %vm982, %v3348, 0.0
      %v3412 = vadd.f32 %v3410, %v3411
      %v3413 = vsel %vm982, %v3349, 0.0
      %v3414 = vadd.f32 %v3412, %v3413
      %v3415 = vrot.slane %v3414, 4
      %v3416 = vadd.f32 %v3414, %v3415
      %v3417 = vrot.slane %v3416, 2
      %v3418 = vadd.f32 %v3416, %v3417
      %v3419 = vrot.slane %v3418, 1
      %v3420 = vadd.f32 %v3418, %v3419
      %v3421 = vmul.f32 %v3318, %v3318
      %v3422 = vmul.f32 %v3319, %v3319
      %v3423 = vmul.f32 %v3320, %v3320
      %v3424 = vmul.f32 %v3321, %v3321
      %v3425 = vmul.f32 %v3322, %v3322
      %v3426 = vmul.f32 %v3323, %v3323
      %v3427 = vmul.f32 %v3324, %v3324
      %v3428 = vmul.f32 %v3325, %v3325
      %v3429 = vmul.f32 %v3326, %v3326
      %v3430 = vmul.f32 %v3327, %v3327
      %v3431 = vmul.f32 %v3328, %v3328
      %v3432 = vmul.f32 %v3329, %v3329
      %v3433 = vmul.f32 %v3330, %v3330
      %v3434 = vmul.f32 %v3331, %v3331
      %v3435 = vmul.f32 %v3332, %v3332
      %v3436 = vmul.f32 %v3333, %v3333
      %v3437 = vmul.f32 %v3334, %v3334
      %v3438 = vmul.f32 %v3335, %v3335
      %v3439 = vmul.f32 %v3336, %v3336
      %v3440 = vmul.f32 %v3337, %v3337
      %v3441 = vmul.f32 %v3338, %v3338
      %v3442 = vmul.f32 %v3339, %v3339
      %v3443 = vmul.f32 %v3340, %v3340
      %v3444 = vmul.f32 %v3341, %v3341
      %v3445 = vmul.f32 %v3342, %v3342
      %v3446 = vmul.f32 %v3343, %v3343
      %v3447 = vmul.f32 %v3344, %v3344
      %v3448 = vmul.f32 %v3345, %v3345
      %v3449 = vmul.f32 %v3346, %v3346
      %v3450 = vmul.f32 %v3347, %v3347
      %v3451 = vmul.f32 %v3348, %v3348
      %v3452 = vmul.f32 %v3349, %v3349
      %v3453 = vsel %vm982, %v3421, 0.0
      %v3454 = vsel %vm982, %v3422, 0.0
      %v3455 = vadd.f32 %v3453, %v3454
      %v3456 = vsel %vm982, %v3423, 0.0
      %v3457 = vadd.f32 %v3455, %v3456
      %v3458 = vsel %vm982, %v3424, 0.0
      %v3459 = vadd.f32 %v3457, %v3458
      %v3460 = vsel %vm982, %v3425, 0.0
      %v3461 = vadd.f32 %v3459, %v3460
      %v3462 = vsel %vm982, %v3426, 0.0
      %v3463 = vadd.f32 %v3461, %v3462
      %v3464 = vsel %vm982, %v3427, 0.0
      %v3465 = vadd.f32 %v3463, %v3464
      %v3466 = vsel %vm982, %v3428, 0.0
      %v3467 = vadd.f32 %v3465, %v3466
      %v3468 = vsel %vm982, %v3429, 0.0
      %v3469 = vadd.f32 %v3467, %v3468
      %v3470 = vsel %vm982, %v3430, 0.0
      %v3471 = vadd.f32 %v3469, %v3470
      %v3472 = vsel %vm982, %v3431, 0.0
      %v3473 = vadd.f32 %v3471, %v3472
      %v3474 = vsel %vm982, %v3432, 0.0
      %v3475 = vadd.f32 %v3473, %v3474
      %v3476 = vsel %vm982, %v3433, 0.0
      %v3477 = vadd.f32 %v3475, %v3476
      %v3478 = vsel %vm982, %v3434, 0.0
      %v3479 = vadd.f32 %v3477, %v3478
      %v3480 = vsel %vm982, %v3435, 0.0
      %v3481 = vadd.f32 %v3479, %v3480
      %v3482 = vsel %vm982, %v3436, 0.0
      %v3483 = vadd.f32 %v3481, %v3482
      %v3484 = vsel %vm982, %v3437, 0.0
      %v3485 = vadd.f32 %v3483, %v3484
      %v3486 = vsel %vm982, %v3438, 0.0
      %v3487 = vadd.f32 %v3485, %v3486
      %v3488 = vsel %vm982, %v3439, 0.0
      %v3489 = vadd.f32 %v3487, %v3488
      %v3490 = vsel %vm982, %v3440, 0.0
      %v3491 = vadd.f32 %v3489, %v3490
      %v3492 = vsel %vm982, %v3441, 0.0
      %v3493 = vadd.f32 %v3491, %v3492
      %v3494 = vsel %vm982, %v3442, 0.0
      %v3495 = vadd.f32 %v3493, %v3494
      %v3496 = vsel %vm982, %v3443, 0.0
      %v3497 = vadd.f32 %v3495, %v3496
      %v3498 = vsel %vm982, %v3444, 0.0
      %v3499 = vadd.f32 %v3497, %v3498
      %v3500 = vsel %vm982, %v3445, 0.0
      %v3501 = vadd.f32 %v3499, %v3500
      %v3502 = vsel %vm982, %v3446, 0.0
      %v3503 = vadd.f32 %v3501, %v3502
      %v3504 = vsel %vm982, %v3447, 0.0
      %v3505 = vadd.f32 %v3503, %v3504
      %v3506 = vsel %vm982, %v3448, 0.0
      %v3507 = vadd.f32 %v3505, %v3506
      %v3508 = vsel %vm982, %v3449, 0.0
      %v3509 = vadd.f32 %v3507, %v3508
      %v3510 = vsel %vm982, %v3450, 0.0
      %v3511 = vadd.f32 %v3509, %v3510
      %v3512 = vsel %vm982, %v3451, 0.0
      %v3513 = vadd.f32 %v3511, %v3512
      %v3514 = vsel %vm982, %v3452, 0.0
      %v3515 = vadd.f32 %v3513, %v3514
      %v3516 = vrot.slane %v3515, 4
      %v3517 = vadd.f32 %v3515, %v3516
      %v3518 = vrot.slane %v3517, 2
      %v3519 = vadd.f32 %v3517, %v3518
      %v3520 = vrot.slane %v3519, 1
      %v3521 = vadd.f32 %v3519, %v3520
      %v3522 = vsel %vm1153, %v3420, 0.0
      %3523 = vadd.xlane.f32.xlu0 %v3522
      %v3524 = vpop.xlane.xlu0 %3523
      %v3525 = vmul.f32 %v3524, 0.001953125
      %v3526 = vsel %vm1153, %v3521, 0.0
      %3527 = vadd.xlane.f32.xlu0 %v3526
      %v3528 = vpop.xlane.xlu0 %3527
      %v3529 = vmul.f32 %v3528, 0.001953125
      %v3530 = vmul.f32 %v3525, %v3525
      %v3531 = vsub.f32 %v3529, %v3530
      %v3532 = vadd.f32 %v3531, 1e-05
      %v3533 = vrsqrt.pop %v3532
      %v3534 = vmul.f32 %v3350, %v3533
      %v3535 = vmul.f32 %v3525, %v3534
      %v3536 = vsub.f32 %v3351, %v3535
      %3538 = vrot.lane.b32.xlu0 %v3420, 126
      %v3539 = vpop.permute.xlu0 %3538
      %v3541 = vsel %vm1153, %v3539, 0.0
      %3542 = vadd.xlane.f32.xlu0 %v3541
      %v3543 = vpop.xlane.xlu0 %3542
      %v3544 = vmul.f32 %v3543, 0.001953125
      %3546 = vrot.lane.b32.xlu0 %v3521, 126
      %v3547 = vpop.permute.xlu0 %3546
      %v3549 = vsel %vm1153, %v3547, 0.0
      %3550 = vadd.xlane.f32.xlu0 %v3549
      %v3551 = vpop.xlane.xlu0 %3550
      %v3552 = vmul.f32 %v3551, 0.001953125
      %v3553 = vmul.f32 %v3544, %v3544
      %v3554 = vsub.f32 %v3552, %v3553
      %v3555 = vadd.f32 %v3554, 1e-05
      %v3556 = vrsqrt.pop %v3555
      %v3557 = vmul.f32 %v3350, %v3556
      %v3558 = vmul.f32 %v3544, %v3557
      %v3559 = vsub.f32 %v3351, %v3558
      %3560 = vrot.lane.b32.xlu0 %v3420, 124
      %v3561 = vpop.permute.xlu0 %3560
      %v3563 = vsel %vm1153, %v3561, 0.0
      %3564 = vadd.xlane.f32.xlu0 %v3563
      %v3565 = vpop.xlane.xlu0 %3564
      %v3566 = vmul.f32 %v3565, 0.001953125
      %3567 = vrot.lane.b32.xlu0 %v3521, 124
      %v3568 = vpop.permute.xlu0 %3567
      %v3570 = vsel %vm1153, %v3568, 0.0
      %3571 = vadd.xlane.f32.xlu0 %v3570
      %v3572 = vpop.xlane.xlu0 %3571
      %v3573 = vmul.f32 %v3572, 0.001953125
      %v3574 = vmul.f32 %v3566, %v3566
      %v3575 = vsub.f32 %v3573, %v3574
      %v3576 = vadd.f32 %v3575, 1e-05
      %v3577 = vrsqrt.pop %v3576
      %v3578 = vmul.f32 %v3350, %v3577
      %v3579 = vmul.f32 %v3566, %v3578
      %v3580 = vsub.f32 %v3351, %v3579
      %3581 = vrot.lane.b32.xlu0 %v3420, 122
      %v3582 = vpop.permute.xlu0 %3581
      %v3584 = vsel %vm1153, %v3582, 0.0
      %3585 = vadd.xlane.f32.xlu0 %v3584
      %v3586 = vpop.xlane.xlu0 %3585
      %v3587 = vmul.f32 %v3586, 0.001953125
      %3588 = vrot.lane.b32.xlu0 %v3521, 122
      %v3589 = vpop.permute.xlu0 %3588
      %v3591 = vsel %vm1153, %v3589, 0.0
      %3592 = vadd.xlane.f32.xlu0 %v3591
      %v3593 = vpop.xlane.xlu0 %3592
      %v3594 = vmul.f32 %v3593, 0.001953125
      %v3595 = vmul.f32 %v3587, %v3587
      %v3596 = vsub.f32 %v3594, %v3595
      %v3597 = vadd.f32 %v3596, 1e-05
      %v3598 = vrsqrt.pop %v3597
      %v3599 = vmul.f32 %v3350, %v3598
      %v3600 = vmul.f32 %v3587, %v3599
      %v3601 = vsub.f32 %v3351, %v3600
      %v3602 = vsel %vm1153, %v3534, %v3557
      %v3603 = vsel %vm1235, %v3602, %v3578
      %v3604 = vsel %vm1237, %v3603, %v3599
      %v3605 = vsel %vm1153, %v3536, %v3559
      %v3606 = vsel %vm1235, %v3605, %v3580
      %v3607 = vsel %vm1237, %v3606, %v3601
      %v3608 = vlaneseq
      %v3609 = vshrl.u32 %v3608, 7
      %v3610 = vsub.s32 0, %v3609
      %v3611 = vrot.slane %v3604, %v3610
      %v3612 = vmul.f32 %v3318, %v3611
      %v3613 = vmul.f32 %v3319, %v3611
      %v3614 = vmul.f32 %v3320, %v3611
      %v3615 = vmul.f32 %v3321, %v3611
      %v3616 = vmul.f32 %v3322, %v3611
      %v3617 = vmul.f32 %v3323, %v3611
      %v3618 = vmul.f32 %v3324, %v3611
      %v3619 = vmul.f32 %v3325, %v3611
      %v3620 = vmul.f32 %v3326, %v3611
      %v3621 = vmul.f32 %v3327, %v3611
      %v3622 = vmul.f32 %v3328, %v3611
      %v3623 = vmul.f32 %v3329, %v3611
      %v3624 = vmul.f32 %v3330, %v3611
      %v3625 = vmul.f32 %v3331, %v3611
      %v3626 = vmul.f32 %v3332, %v3611
      %v3627 = vmul.f32 %v3333, %v3611
      %v3628 = vmul.f32 %v3334, %v3611
      %v3629 = vmul.f32 %v3335, %v3611
      %v3630 = vmul.f32 %v3336, %v3611
      %v3631 = vmul.f32 %v3337, %v3611
      %v3632 = vmul.f32 %v3338, %v3611
      %v3633 = vmul.f32 %v3339, %v3611
      %v3634 = vmul.f32 %v3340, %v3611
      %v3635 = vmul.f32 %v3341, %v3611
      %v3636 = vmul.f32 %v3342, %v3611
      %v3637 = vmul.f32 %v3343, %v3611
      %v3638 = vmul.f32 %v3344, %v3611
      %v3639 = vmul.f32 %v3345, %v3611
      %v3640 = vmul.f32 %v3346, %v3611
      %v3641 = vmul.f32 %v3347, %v3611
      %v3642 = vmul.f32 %v3348, %v3611
      %v3643 = vmul.f32 %v3349, %v3611
      %v3644 = vlaneseq
      %v3645 = vshrl.u32 %v3644, 7
      %v3646 = vsub.s32 0, %v3645
      %v3647 = vrot.slane %v3607, %v3646
      %v3648 = vadd.f32 %v3612, %v3647
      %v3649 = vadd.f32 %v3613, %v3647
      %v3650 = vadd.f32 %v3614, %v3647
      %v3651 = vadd.f32 %v3615, %v3647
      %v3652 = vadd.f32 %v3616, %v3647
      %v3653 = vadd.f32 %v3617, %v3647
      %v3654 = vadd.f32 %v3618, %v3647
      %v3655 = vadd.f32 %v3619, %v3647
      %v3656 = vadd.f32 %v3620, %v3647
      %v3657 = vadd.f32 %v3621, %v3647
      %v3658 = vadd.f32 %v3622, %v3647
      %v3659 = vadd.f32 %v3623, %v3647
      %v3660 = vadd.f32 %v3624, %v3647
      %v3661 = vadd.f32 %v3625, %v3647
      %v3662 = vadd.f32 %v3626, %v3647
      %v3663 = vadd.f32 %v3627, %v3647
      %v3664 = vadd.f32 %v3628, %v3647
      %v3665 = vadd.f32 %v3629, %v3647
      %v3666 = vadd.f32 %v3630, %v3647
      %v3667 = vadd.f32 %v3631, %v3647
      %v3668 = vadd.f32 %v3632, %v3647
      %v3669 = vadd.f32 %v3633, %v3647
      %v3670 = vadd.f32 %v3634, %v3647
      %v3671 = vadd.f32 %v3635, %v3647
      %v3672 = vadd.f32 %v3636, %v3647
      %v3673 = vadd.f32 %v3637, %v3647
      %v3674 = vadd.f32 %v3638, %v3647
      %v3675 = vadd.f32 %v3639, %v3647
      %v3676 = vadd.f32 %v3640, %v3647
      %v3677 = vadd.f32 %v3641, %v3647
      %v3678 = vadd.f32 %v3642, %v3647
      %v3679 = vadd.f32 %v3643, %v3647
      %v3680 = vpack.c.bf16 %v3649, %v3648
      %v3681 = vpack.c.bf16 %v3651, %v3650
      %v3682 = vpack.c.bf16 %v3653, %v3652
      %v3683 = vpack.c.bf16 %v3655, %v3654
      %v3684 = vpack.c.bf16 %v3657, %v3656
      %v3685 = vpack.c.bf16 %v3659, %v3658
      %v3686 = vpack.c.bf16 %v3661, %v3660
      %v3687 = vpack.c.bf16 %v3663, %v3662
      %v3688 = vpack.c.bf16 %v3665, %v3664
      %v3689 = vpack.c.bf16 %v3667, %v3666
      %v3690 = vpack.c.bf16 %v3669, %v3668
      %v3691 = vpack.c.bf16 %v3671, %v3670
      %v3692 = vpack.c.bf16 %v3673, %v3672
      %v3693 = vpack.c.bf16 %v3675, %v3674
      %v3694 = vpack.c.bf16 %v3677, %v3676
      %v3695 = vpack.c.bf16 %v3679, %v3678
      %v3696 = vld [vmem:[%s9] sm:$0xf]
      %v3698 = vsel %vm982, %v3680, 0
      %v3701 = vsel %vm982, %v3681, 0
      %v3704 = vsel %vm982, %v3682, 0
      %v3707 = vsel %vm982, %v3683, 0
      %v3710 = vsel %vm982, %v3684, 0
      %v3713 = vsel %vm982, %v3685, 0
      %v3716 = vsel %vm982, %v3686, 0
      %v3719 = vsel %vm982, %v3687, 0
      %v3722 = vsel %vm982, %v3688, 0
      %v3725 = vsel %vm982, %v3689, 0
      %v3728 = vsel %vm982, %v3690, 0
      %v3731 = vsel %vm982, %v3691, 0
      %v3734 = vsel %vm982, %v3692, 0
      %v3737 = vsel %vm982, %v3693, 0
      %v3740 = vsel %vm982, %v3694, 0
      %v3743 = vsel %vm982, %v3695, 0
      %v3746 = vsel %vm2736, %v3696, 0
      %3748 = vmatprep.subr.bf16.mxu0 0
      %3749 = vmatpush1.bf16.msra.mxu0 %v3746
      %3750 = vmatprep.subr.bf16.mxu0 0
      %3751 = vmatpush1.bf16.msra.mxu0 0
      %3752 = vmatprep.subr.bf16.mxu0 0
      %3753 = vmatpush1.bf16.msra.mxu0 0
      %3754 = vmatprep.subr.bf16.mxu0 0
      %3755 = vmatpush1.bf16.msra.mxu0 0
      %3756 = vmatprep.subr.bf16.mxu0 0
      %3757 = vmatpush1.bf16.msra.mxu0 0
      %3758 = vmatprep.subr.bf16.mxu0 0
      %3759 = vmatpush1.bf16.msra.mxu0 0
      %3760 = vmatprep.subr.bf16.mxu0 0
      %3761 = vmatpush1.bf16.msra.mxu0 0
      %3762 = vmatprep.subr.bf16.mxu0 0
      %3763 = vmatpush1.bf16.msra.mxu0 0
      %3764 = vmatprep.subr.bf16.mxu0 0
      %3765 = vmatpush1.bf16.msra.mxu0 0
      %3766 = vmatprep.subr.bf16.mxu0 0
      %3767 = vmatpush1.bf16.msra.mxu0 0
      %3768 = vmatprep.subr.bf16.mxu0 0
      %3769 = vmatpush1.bf16.msra.mxu0 0
      %3770 = vmatprep.subr.bf16.mxu0 0
      %3771 = vmatpush1.bf16.msra.mxu0 0
      %3772 = vmatprep.subr.bf16.mxu0 0
      %3773 = vmatpush1.bf16.msra.mxu0 0
      %3774 = vmatprep.subr.bf16.mxu0 0
      %3775 = vmatpush1.bf16.msra.mxu0 0
      %3776 = vmatprep.subr.bf16.mxu0 0
      %3777 = vmatpush1.bf16.msra.mxu0 0
      %3778 = vmatprep.subr.bf16.mxu0 0
      %3779 = vmatpush1.bf16.msra.mxu0 0
      %3780 = vmatprep.mubr.bf16.mxu0 0
      %3781 = vmatmul.mubr.bf16.gmra.mrb[0].mxu0 %v3698
      %v3782 = vpop.f32.mrb[0].mxu0
      %v3783 = vadd.f32 0.0, %v3782
      %v3784 = vpop.f32.mrb[0].mxu0
      %v3785 = vpop.f32.mrb[0].mxu0
      %v3786 = vadd.f32 0.0, %v3785
      %v3787 = vpop.f32.mrb[0].mxu0
      %3788 = vmatprep.mubr.bf16.mxu0 0
      %3789 = vmatmul.mubr.bf16.gmra.mrb[0].mxu0 %v3701
      %v3790 = vpop.f32.mrb[0].mxu0
      %v3791 = vadd.f32 0.0, %v3790
      %v3792 = vpop.f32.mrb[0].mxu0
      %v3793 = vpop.f32.mrb[0].mxu0
      %v3794 = vadd.f32 0.0, %v3793
      %v3795 = vpop.f32.mrb[0].mxu0
      %3796 = vmatprep.mubr.bf16.mxu0 0
      %3797 = vmatmul.mubr.bf16.gmra.mrb[0].mxu0 %v3704
      %v3798 = vpop.f32.mrb[0].mxu0
      %v3799 = vadd.f32 0.0, %v3798
      %v3800 = vpop.f32.mrb[0].mxu0
      %v3801 = vpop.f32.mrb[0].mxu0
      %v3802 = vadd.f32 0.0, %v3801
      %v3803 = vpop.f32.mrb[0].mxu0
      %3804 = vmatprep.mubr.bf16.mxu0 0
      %3805 = vmatmul.mubr.bf16.gmra.mrb[0].mxu0 %v3707
      %v3806 = vpop.f32.mrb[0].mxu0
      %v3807 = vadd.f32 0.0, %v3806
      %v3808 = vpop.f32.mrb[0].mxu0
      %v3809 = vpop.f32.mrb[0].mxu0
      %v3810 = vadd.f32 0.0, %v3809
      %v3811 = vpop.f32.mrb[0].mxu0
      %3812 = vmatprep.mubr.bf16.mxu0 0
      %3813 = vmatmul.mubr.bf16.gmra.mrb[0].mxu0 %v3710
      %v3814 = vpop.f32.mrb[0].mxu0
      %v3815 = vadd.f32 0.0, %v3814
      %v3816 = vpop.f32.mrb[0].mxu0
      %v3817 = vpop.f32.mrb[0].mxu0
      %v3818 = vadd.f32 0.0, %v3817
      %v3819 = vpop.f32.mrb[0].mxu0
      %3820 = vmatprep.mubr.bf16.mxu0 0
      %3821 = vmatmul.mubr.bf16.gmra.mrb[0].mxu0 %v3713
      %v3822 = vpop.f32.mrb[0].mxu0
      %v3823 = vadd.f32 0.0, %v3822
      %v3824 = vpop.f32.mrb[0].mxu0
      %v3825 = vpop.f32.mrb[0].mxu0
      %v3826 = vadd.f32 0.0, %v3825
      %v3827 = vpop.f32.mrb[0].mxu0
      %3828 = vmatprep.mubr.bf16.mxu0 0
      %3829 = vmatmul.mubr.bf16.gmra.mrb[0].mxu0 %v3716
      %v3830 = vpop.f32.mrb[0].mxu0
      %v3831 = vadd.f32 0.0, %v3830
      %v3832 = vpop.f32.mrb[0].mxu0
      %v3833 = vpop.f32.mrb[0].mxu0
      %v3834 = vadd.f32 0.0, %v3833
      %v3835 = vpop.f32.mrb[0].mxu0
      %3836 = vmatprep.mubr.bf16.mxu0 0
      %3837 = vmatmul.mubr.bf16.gmra.mrb[0].mxu0 %v3719
      %v3838 = vpop.f32.mrb[0].mxu0
      %v3839 = vadd.f32 0.0, %v3838
      %v3840 = vpop.f32.mrb[0].mxu0
      %v3841 = vpop.f32.mrb[0].mxu0
      %v3842 = vadd.f32 0.0, %v3841
      %v3843 = vpop.f32.mrb[0].mxu0
      %3844 = vmatprep.mubr.bf16.mxu0 0
      %3845 = vmatmul.mubr.bf16.gmra.mrb[0].mxu0 %v3722
      %v3846 = vpop.f32.mrb[0].mxu0
      %v3847 = vadd.f32 0.0, %v3846
      %v3848 = vpop.f32.mrb[0].mxu0
      %v3849 = vpop.f32.mrb[0].mxu0
      %v3850 = vadd.f32 0.0, %v3849
      %v3851 = vpop.f32.mrb[0].mxu0
      %3852 = vmatprep.mubr.bf16.mxu0 0
      %3853 = vmatmul.mubr.bf16.gmra.mrb[0].mxu0 %v3725
      %v3854 = vpop.f32.mrb[0].mxu0
      %v3855 = vadd.f32 0.0, %v3854
      %v3856 = vpop.f32.mrb[0].mxu0
      %v3857 = vpop.f32.mrb[0].mxu0
      %v3858 = vadd.f32 0.0, %v3857
      %v3859 = vpop.f32.mrb[0].mxu0
      %3860 = vmatprep.mubr.bf16.mxu0 0
      %3861 = vmatmul.mubr.bf16.gmra.mrb[0].mxu0 %v3728
      %v3862 = vpop.f32.mrb[0].mxu0
      %v3863 = vadd.f32 0.0, %v3862
      %v3864 = vpop.f32.mrb[0].mxu0
      %v3865 = vpop.f32.mrb[0].mxu0
      %v3866 = vadd.f32 0.0, %v3865
      %v3867 = vpop.f32.mrb[0].mxu0
      %3868 = vmatprep.mubr.bf16.mxu0 0
      %3869 = vmatmul.mubr.bf16.gmra.mrb[0].mxu0 %v3731
      %v3870 = vpop.f32.mrb[0].mxu0
      %v3871 = vadd.f32 0.0, %v3870
      %v3872 = vpop.f32.mrb[0].mxu0
      %v3873 = vpop.f32.mrb[0].mxu0
      %v3874 = vadd.f32 0.0, %v3873
      %v3875 = vpop.f32.mrb[0].mxu0
      %3876 = vmatprep.mubr.bf16.mxu0 0
      %3877 = vmatmul.mubr.bf16.gmra.mrb[0].mxu0 %v3734
      %v3878 = vpop.f32.mrb[0].mxu0
      %v3879 = vadd.f32 0.0, %v3878
      %v3880 = vpop.f32.mrb[0].mxu0
      %v3881 = vpop.f32.mrb[0].mxu0
      %v3882 = vadd.f32 0.0, %v3881
      %v3883 = vpop.f32.mrb[0].mxu0
      %3884 = vmatprep.mubr.bf16.mxu0 0
      %3885 = vmatmul.mubr.bf16.gmra.mrb[0].mxu0 %v3737
      %v3886 = vpop.f32.mrb[0].mxu0
      %v3887 = vadd.f32 0.0, %v3886
      %v3888 = vpop.f32.mrb[0].mxu0
      %v3889 = vpop.f32.mrb[0].mxu0
      %v3890 = vadd.f32 0.0, %v3889
      %v3891 = vpop.f32.mrb[0].mxu0
      %3892 = vmatprep.mubr.bf16.mxu0 0
      %3893 = vmatmul.mubr.bf16.gmra.mrb[0].mxu0 %v3740
      %v3894 = vpop.f32.mrb[0].mxu0
      %v3895 = vadd.f32 0.0, %v3894
      %v3896 = vpop.f32.mrb[0].mxu0
      %v3897 = vpop.f32.mrb[0].mxu0
      %v3898 = vadd.f32 0.0, %v3897
      %v3899 = vpop.f32.mrb[0].mxu0
      %3900 = vmatprep.mubr.bf16.mxu0 0
      %3901 = vmatmul.mubr.bf16.gmra.mrb[0].mxu0 %v3743
      %v3902 = vpop.f32.mrb[0].mxu0
      %v3903 = vadd.f32 0.0, %v3902
      %v3904 = vpop.f32.mrb[0].mxu0
      %v3905 = vpop.f32.mrb[0].mxu0
      %v3906 = vadd.f32 0.0, %v3905
      %v3907 = vpop.f32.mrb[0].mxu0
      %3908 = vdwg.mxu0
      %v3909 = vld [vmem:[%s10] sm:$0x1]
      %v3910 = vld [vmem:[%s11] sm:$0x1]
      %v3911 = vsel %vm449, %v3783, 0.0
      %v3912 = vsel %vm449, %v3786, 0.0
      %v3913 = vadd.f32 %v3911, %v3912
      %v3914 = vsel %vm449, %v3791, 0.0
      %v3915 = vadd.f32 %v3913, %v3914
      %v3916 = vsel %vm449, %v3794, 0.0
      %v3917 = vadd.f32 %v3915, %v3916
      %v3918 = vsel %vm449, %v3799, 0.0
      %v3919 = vadd.f32 %v3917, %v3918
      %v3920 = vsel %vm449, %v3802, 0.0
      %v3921 = vadd.f32 %v3919, %v3920
      %v3922 = vsel %vm449, %v3807, 0.0
      %v3923 = vadd.f32 %v3921, %v3922
      %v3924 = vsel %vm449, %v3810, 0.0
      %v3925 = vadd.f32 %v3923, %v3924
      %v3926 = vsel %vm449, %v3815, 0.0
      %v3927 = vadd.f32 %v3925, %v3926
      %v3928 = vsel %vm449, %v3818, 0.0
      %v3929 = vadd.f32 %v3927, %v3928
      %v3930 = vsel %vm449, %v3823, 0.0
      %v3931 = vadd.f32 %v3929, %v3930
      %v3932 = vsel %vm449, %v3826, 0.0
      %v3933 = vadd.f32 %v3931, %v3932
      %v3934 = vsel %vm449, %v3831, 0.0
      %v3935 = vadd.f32 %v3933, %v3934
      %v3936 = vsel %vm449, %v3834, 0.0
      %v3937 = vadd.f32 %v3935, %v3936
      %v3938 = vsel %vm449, %v3839, 0.0
      %v3939 = vadd.f32 %v3937, %v3938
      %v3940 = vsel %vm449, %v3842, 0.0
      %v3941 = vadd.f32 %v3939, %v3940
      %v3942 = vsel %vm449, %v3847, 0.0
      %v3943 = vadd.f32 %v3941, %v3942
      %v3944 = vsel %vm449, %v3850, 0.0
      %v3945 = vadd.f32 %v3943, %v3944
      %v3946 = vsel %vm449, %v3855, 0.0
      %v3947 = vadd.f32 %v3945, %v3946
      %v3948 = vsel %vm449, %v3858, 0.0
      %v3949 = vadd.f32 %v3947, %v3948
      %v3950 = vsel %vm449, %v3863, 0.0
      %v3951 = vadd.f32 %v3949, %v3950
      %v3952 = vsel %vm449, %v3866, 0.0
      %v3953 = vadd.f32 %v3951, %v3952
      %v3954 = vsel %vm449, %v3871, 0.0
      %v3955 = vadd.f32 %v3953, %v3954
      %v3956 = vsel %vm449, %v3874, 0.0
      %v3957 = vadd.f32 %v3955, %v3956
      %v3958 = vsel %vm449, %v3879, 0.0
      %v3959 = vadd.f32 %v3957, %v3958
      %v3960 = vsel %vm449, %v3882, 0.0
      %v3961 = vadd.f32 %v3959, %v3960
      %v3962 = vsel %vm449, %v3887, 0.0
      %v3963 = vadd.f32 %v3961, %v3962
      %v3964 = vsel %vm449, %v3890, 0.0
      %v3965 = vadd.f32 %v3963, %v3964
      %v3966 = vsel %vm449, %v3895, 0.0
      %v3967 = vadd.f32 %v3965, %v3966
      %v3968 = vsel %vm449, %v3898, 0.0
      %v3969 = vadd.f32 %v3967, %v3968
      %v3970 = vsel %vm449, %v3903, 0.0
      %v3971 = vadd.f32 %v3969, %v3970
      %v3972 = vsel %vm449, %v3906, 0.0
      %v3973 = vadd.f32 %v3971, %v3972
      %v3974 = vrot.slane %v3973, 4
      %v3975 = vadd.f32 %v3973, %v3974
      %v3976 = vrot.slane %v3975, 2
      %v3977 = vadd.f32 %v3975, %v3976
      %v3978 = vrot.slane %v3977, 1
      %v3979 = vadd.f32 %v3977, %v3978
      %v3980 = vmul.f32 %v3783, %v3783
      %v3981 = vmul.f32 %v3786, %v3786
      %v3982 = vmul.f32 %v3791, %v3791
      %v3983 = vmul.f32 %v3794, %v3794
      %v3984 = vmul.f32 %v3799, %v3799
      %v3985 = vmul.f32 %v3802, %v3802
      %v3986 = vmul.f32 %v3807, %v3807
      %v3987 = vmul.f32 %v3810, %v3810
      %v3988 = vmul.f32 %v3815, %v3815
      %v3989 = vmul.f32 %v3818, %v3818
      %v3990 = vmul.f32 %v3823, %v3823
      %v3991 = vmul.f32 %v3826, %v3826
      %v3992 = vmul.f32 %v3831, %v3831
      %v3993 = vmul.f32 %v3834, %v3834
      %v3994 = vmul.f32 %v3839, %v3839
      %v3995 = vmul.f32 %v3842, %v3842
      %v3996 = vmul.f32 %v3847, %v3847
      %v3997 = vmul.f32 %v3850, %v3850
      %v3998 = vmul.f32 %v3855, %v3855
      %v3999 = vmul.f32 %v3858, %v3858
      %v4000 = vmul.f32 %v3863, %v3863
      %v4001 = vmul.f32 %v3866, %v3866
      %v4002 = vmul.f32 %v3871, %v3871
      %v4003 = vmul.f32 %v3874, %v3874
      %v4004 = vmul.f32 %v3879, %v3879
      %v4005 = vmul.f32 %v3882, %v3882
      %v4006 = vmul.f32 %v3887, %v3887
      %v4007 = vmul.f32 %v3890, %v3890
      %v4008 = vmul.f32 %v3895, %v3895
      %v4009 = vmul.f32 %v3898, %v3898
      %v4010 = vmul.f32 %v3903, %v3903
      %v4011 = vmul.f32 %v3906, %v3906
      %v4012 = vsel %vm449, %v3980, 0.0
      %v4013 = vsel %vm449, %v3981, 0.0
      %v4014 = vadd.f32 %v4012, %v4013
      %v4015 = vsel %vm449, %v3982, 0.0
      %v4016 = vadd.f32 %v4014, %v4015
      %v4017 = vsel %vm449, %v3983, 0.0
      %v4018 = vadd.f32 %v4016, %v4017
      %v4019 = vsel %vm449, %v3984, 0.0
      %v4020 = vadd.f32 %v4018, %v4019
      %v4021 = vsel %vm449, %v3985, 0.0
      %v4022 = vadd.f32 %v4020, %v4021
      %v4023 = vsel %vm449, %v3986, 0.0
      %v4024 = vadd.f32 %v4022, %v4023
      %v4025 = vsel %vm449, %v3987, 0.0
      %v4026 = vadd.f32 %v4024, %v4025
      %v4027 = vsel %vm449, %v3988, 0.0
      %v4028 = vadd.f32 %v4026, %v4027
      %v4029 = vsel %vm449, %v3989, 0.0
      %v4030 = vadd.f32 %v4028, %v4029
      %v4031 = vsel %vm449, %v3990, 0.0
      %v4032 = vadd.f32 %v4030, %v4031
      %v4033 = vsel %vm449, %v3991, 0.0
      %v4034 = vadd.f32 %v4032, %v4033
      %v4035 = vsel %vm449, %v3992, 0.0
      %v4036 = vadd.f32 %v4034, %v4035
      %v4037 = vsel %vm449, %v3993, 0.0
      %v4038 = vadd.f32 %v4036, %v4037
      %v4039 = vsel %vm449, %v3994, 0.0
      %v4040 = vadd.f32 %v4038, %v4039
      %v4041 = vsel %vm449, %v3995, 0.0
      %v4042 = vadd.f32 %v4040, %v4041
      %v4043 = vsel %vm449, %v3996, 0.0
      %v4044 = vadd.f32 %v4042, %v4043
      %v4045 = vsel %vm449, %v3997, 0.0
      %v4046 = vadd.f32 %v4044, %v4045
      %v4047 = vsel %vm449, %v3998, 0.0
      %v4048 = vadd.f32 %v4046, %v4047
      %v4049 = vsel %vm449, %v3999, 0.0
      %v4050 = vadd.f32 %v4048, %v4049
      %v4051 = vsel %vm449, %v4000, 0.0
      %v4052 = vadd.f32 %v4050, %v4051
      %v4053 = vsel %vm449, %v4001, 0.0
      %v4054 = vadd.f32 %v4052, %v4053
      %v4055 = vsel %vm449, %v4002, 0.0
      %v4056 = vadd.f32 %v4054, %v4055
      %v4057 = vsel %vm449, %v4003, 0.0
      %v4058 = vadd.f32 %v4056, %v4057
      %v4059 = vsel %vm449, %v4004, 0.0
      %v4060 = vadd.f32 %v4058, %v4059
      %v4061 = vsel %vm449, %v4005, 0.0
      %v4062 = vadd.f32 %v4060, %v4061
      %v4063 = vsel %vm449, %v4006, 0.0
      %v4064 = vadd.f32 %v4062, %v4063
      %v4065 = vsel %vm449, %v4007, 0.0
      %v4066 = vadd.f32 %v4064, %v4065
      %v4067 = vsel %vm449, %v4008, 0.0
      %v4068 = vadd.f32 %v4066, %v4067
      %v4069 = vsel %vm449, %v4009, 0.0
      %v4070 = vadd.f32 %v4068, %v4069
      %v4071 = vsel %vm449, %v4010, 0.0
      %v4072 = vadd.f32 %v4070, %v4071
      %v4073 = vsel %vm449, %v4011, 0.0
      %v4074 = vadd.f32 %v4072, %v4073
      %v4075 = vrot.slane %v4074, 4
      %v4076 = vadd.f32 %v4074, %v4075
      %v4077 = vrot.slane %v4076, 2
      %v4078 = vadd.f32 %v4076, %v4077
      %v4079 = vrot.slane %v4078, 1
      %v4080 = vadd.f32 %v4078, %v4079
      %v4081 = vsel %vm982, %v3979, 0.0
      %4082 = vadd.xlane.f32.xlu0 %v4081
      %v4083 = vpop.xlane.xlu0 %4082
      %v4084 = vmul.f32 %v4083, 0.00048828125
      %v4085 = vsel %vm982, %v4080, 0.0
      %4086 = vadd.xlane.f32.xlu0 %v4085
      %v4087 = vpop.xlane.xlu0 %4086
      %v4088 = vmul.f32 %v4087, 0.00048828125
      %v4089 = vmul.f32 %v4084, %v4084
      %v4090 = vsub.f32 %v4088, %v4089
      %v4091 = vadd.f32 %v4090, 1e-05
      %v4092 = vrsqrt.pop %v4091
      %v4093 = vmul.f32 %v3909, %v4092
      %v4094 = vmul.f32 %v4084, %v4093
      %v4095 = vsub.f32 %v3910, %v4094
      %4097 = vrot.lane.b32.xlu0 %v3979, 120
      %v4098 = vpop.permute.xlu0 %4097
      %v4100 = vsel %vm982, %v4098, 0.0
      %4101 = vadd.xlane.f32.xlu0 %v4100
      %v4102 = vpop.xlane.xlu0 %4101
      %v4103 = vmul.f32 %v4102, 0.00048828125
      %4105 = vrot.lane.b32.xlu0 %v4080, 120
      %v4106 = vpop.permute.xlu0 %4105
      %v4108 = vsel %vm982, %v4106, 0.0
      %4109 = vadd.xlane.f32.xlu0 %v4108
      %v4110 = vpop.xlane.xlu0 %4109
      %v4111 = vmul.f32 %v4110, 0.00048828125
      %v4112 = vmul.f32 %v4103, %v4103
      %v4113 = vsub.f32 %v4111, %v4112
      %v4114 = vadd.f32 %v4113, 1e-05
      %v4115 = vrsqrt.pop %v4114
      %v4116 = vmul.f32 %v3909, %v4115
      %v4117 = vmul.f32 %v4103, %v4116
      %v4118 = vsub.f32 %v3910, %v4117
      %4119 = vrot.lane.b32.xlu0 %v3979, 112
      %v4120 = vpop.permute.xlu0 %4119
      %v4122 = vsel %vm982, %v4120, 0.0
      %4123 = vadd.xlane.f32.xlu0 %v4122
      %v4124 = vpop.xlane.xlu0 %4123
      %v4125 = vmul.f32 %v4124, 0.00048828125
      %4126 = vrot.lane.b32.xlu0 %v4080, 112
      %v4127 = vpop.permute.xlu0 %4126
      %v4129 = vsel %vm982, %v4127, 0.0
      %4130 = vadd.xlane.f32.xlu0 %v4129
      %v4131 = vpop.xlane.xlu0 %4130
      %v4132 = vmul.f32 %v4131, 0.00048828125
      %v4133 = vmul.f32 %v4125, %v4125
      %v4134 = vsub.f32 %v4132, %v4133
      %v4135 = vadd.f32 %v4134, 1e-05
      %v4136 = vrsqrt.pop %v4135
      %v4137 = vmul.f32 %v3909, %v4136
      %v4138 = vmul.f32 %v4125, %v4137
      %v4139 = vsub.f32 %v3910, %v4138
      %4140 = vrot.lane.b32.xlu0 %v3979, 104
      %v4141 = vpop.permute.xlu0 %4140
      %v4143 = vsel %vm982, %v4141, 0.0
      %4144 = vadd.xlane.f32.xlu0 %v4143
      %v4145 = vpop.xlane.xlu0 %4144
      %v4146 = vmul.f32 %v4145, 0.00048828125
      %4147 = vrot.lane.b32.xlu0 %v4080, 104
      %v4148 = vpop.permute.xlu0 %4147
      %v4150 = vsel %vm982, %v4148, 0.0
      %4151 = vadd.xlane.f32.xlu0 %v4150
      %v4152 = vpop.xlane.xlu0 %4151
      %v4153 = vmul.f32 %v4152, 0.00048828125
      %v4154 = vmul.f32 %v4146, %v4146
      %v4155 = vsub.f32 %v4153, %v4154
      %v4156 = vadd.f32 %v4155, 1e-05
      %v4157 = vrsqrt.pop %v4156
      %v4158 = vmul.f32 %v3909, %v4157
      %v4159 = vmul.f32 %v4146, %v4158
      %v4160 = vsub.f32 %v3910, %v4159
      %v4161 = vsel %vm982, %v4093, %v4116
      %v4162 = vsel %vm2587, %v4161, %v4137
      %v4163 = vsel %vm2636, %v4162, %v4158
      %v4164 = vsel %vm982, %v4095, %v4118
      %v4165 = vsel %vm2587, %v4164, %v4139
      %v4166 = vsel %vm2636, %v4165, %v4160
      %v4167 = vlaneseq
      %v4168 = vshrl.u32 %v4167, 7
      %v4169 = vsub.s32 0, %v4168
      %v4170 = vrot.slane %v4163, %v4169
      %v4171 = vmul.f32 %v3783, %v4170
      %v4172 = vmul.f32 %v3786, %v4170
      %v4173 = vmul.f32 %v3791, %v4170
      %v4174 = vmul.f32 %v3794, %v4170
      %v4175 = vmul.f32 %v3799, %v4170
      %v4176 = vmul.f32 %v3802, %v4170
      %v4177 = vmul.f32 %v3807, %v4170
      %v4178 = vmul.f32 %v3810, %v4170
      %v4179 = vmul.f32 %v3815, %v4170
      %v4180 = vmul.f32 %v3818, %v4170
      %v4181 = vmul.f32 %v3823, %v4170
      %v4182 = vmul.f32 %v3826, %v4170
      %v4183 = vmul.f32 %v3831, %v4170
      %v4184 = vmul.f32 %v3834, %v4170
      %v4185 = vmul.f32 %v3839, %v4170
      %v4186 = vmul.f32 %v3842, %v4170
      %v4187 = vmul.f32 %v3847, %v4170
      %v4188 = vmul.f32 %v3850, %v4170
      %v4189 = vmul.f32 %v3855, %v4170
      %v4190 = vmul.f32 %v3858, %v4170
      %v4191 = vmul.f32 %v3863, %v4170
      %v4192 = vmul.f32 %v3866, %v4170
      %v4193 = vmul.f32 %v3871, %v4170
      %v4194 = vmul.f32 %v3874, %v4170
      %v4195 = vmul.f32 %v3879, %v4170
      %v4196 = vmul.f32 %v3882, %v4170
      %v4197 = vmul.f32 %v3887, %v4170
      %v4198 = vmul.f32 %v3890, %v4170
      %v4199 = vmul.f32 %v3895, %v4170
      %v4200 = vmul.f32 %v3898, %v4170
      %v4201 = vmul.f32 %v3903, %v4170
      %v4202 = vmul.f32 %v3906, %v4170
      %v4203 = vlaneseq
      %v4204 = vshrl.u32 %v4203, 7
      %v4205 = vsub.s32 0, %v4204
      %v4206 = vrot.slane %v4166, %v4205
      %v4207 = vadd.f32 %v4171, %v4206
      %v4208 = vadd.f32 %v4172, %v4206
      %v4209 = vadd.f32 %v4173, %v4206
      %v4210 = vadd.f32 %v4174, %v4206
      %v4211 = vadd.f32 %v4175, %v4206
      %v4212 = vadd.f32 %v4176, %v4206
      %v4213 = vadd.f32 %v4177, %v4206
      %v4214 = vadd.f32 %v4178, %v4206
      %v4215 = vadd.f32 %v4179, %v4206
      %v4216 = vadd.f32 %v4180, %v4206
      %v4217 = vadd.f32 %v4181, %v4206
      %v4218 = vadd.f32 %v4182, %v4206
      %v4219 = vadd.f32 %v4183, %v4206
      %v4220 = vadd.f32 %v4184, %v4206
      %v4221 = vadd.f32 %v4185, %v4206
      %v4222 = vadd.f32 %v4186, %v4206
      %v4223 = vadd.f32 %v4187, %v4206
      %v4224 = vadd.f32 %v4188, %v4206
      %v4225 = vadd.f32 %v4189, %v4206
      %v4226 = vadd.f32 %v4190, %v4206
      %v4227 = vadd.f32 %v4191, %v4206
      %v4228 = vadd.f32 %v4192, %v4206
      %v4229 = vadd.f32 %v4193, %v4206
      %v4230 = vadd.f32 %v4194, %v4206
      %v4231 = vadd.f32 %v4195, %v4206
      %v4232 = vadd.f32 %v4196, %v4206
      %v4233 = vadd.f32 %v4197, %v4206
      %v4234 = vadd.f32 %v4198, %v4206
      %v4235 = vadd.f32 %v4199, %v4206
      %v4236 = vadd.f32 %v4200, %v4206
      %v4237 = vadd.f32 %v4201, %v4206
      %v4238 = vadd.f32 %v4202, %v4206
      %v4239 = vld [vmem:[%s408] sm:$0xff]
      %v4240 = vld [vmem:[%s408 + $0x8] sm:$0xff]
      %v4241 = vld [vmem:[%s408 + $0x10] sm:$0xff]
      %v4242 = vld [vmem:[%s408 + $0x18] sm:$0xff]
      %v4243 = vld [vmem:[%s408 + $0x20] sm:$0xff]
      %v4244 = vld [vmem:[%s408 + $0x28] sm:$0xff]
      %v4245 = vld [vmem:[%s408 + $0x30] sm:$0xff]
      %v4246 = vld [vmem:[%s408 + $0x38] sm:$0xff]
      %v4247 = vld [vmem:[%s408 + $0x40] sm:$0xff]
      %v4248 = vld [vmem:[%s408 + $0x48] sm:$0xff]
      %v4249 = vld [vmem:[%s408 + $0x50] sm:$0xff]
      %v4250 = vld [vmem:[%s408 + $0x58] sm:$0xff]
      %v4251 = vld [vmem:[%s408 + $0x60] sm:$0xff]
      %v4252 = vld [vmem:[%s408 + $0x68] sm:$0xff]
      %v4253 = vld [vmem:[%s408 + $0x70] sm:$0xff]
      %v4254 = vld [vmem:[%s408 + $0x78] sm:$0xff]
      %v4255 = vld [vmem:[%s408 + $0x80] sm:$0xff]
      %v4256 = vld [vmem:[%s408 + $0x88] sm:$0xff]
      %v4257 = vld [vmem:[%s408 + $0x90] sm:$0xff]
      %v4258 = vld [vmem:[%s408 + $0x98] sm:$0xff]
      %v4259 = vld [vmem:[%s408 + $0xa0] sm:$0xff]
      %v4260 = vld [vmem:[%s408 + $0xa8] sm:$0xff]
      %v4261 = vld [vmem:[%s408 + $0xb0] sm:$0xff]
      %v4262 = vld [vmem:[%s408 + $0xb8] sm:$0xff]
      %v4263 = vld [vmem:[%s408 + $0xc0] sm:$0xff]
      %v4264 = vld [vmem:[%s408 + $0xc8] sm:$0xff]
      %v4265 = vld [vmem:[%s408 + $0xd0] sm:$0xff]
      %v4266 = vld [vmem:[%s408 + $0xd8] sm:$0xff]
      %v4267 = vld [vmem:[%s408 + $0xe0] sm:$0xff]
      %v4268 = vld [vmem:[%s408 + $0xe8] sm:$0xff]
      %v4269 = vld [vmem:[%s408 + $0xf0] sm:$0xff]
      %v4270 = vld [vmem:[%s408 + $0xf8] sm:$0xff]
      %v4271 = vmul.f32 %v4239, %v635
      %v4272 = vmul.f32 %v4240, %v635
      %v4273 = vmul.f32 %v4241, %v635
      %v4274 = vmul.f32 %v4242, %v635
      %v4275 = vmul.f32 %v4243, %v635
      %v4276 = vmul.f32 %v4244, %v635
      %v4277 = vmul.f32 %v4245, %v635
      %v4278 = vmul.f32 %v4246, %v635
      %v4279 = vmul.f32 %v4247, %v635
      %v4280 = vmul.f32 %v4248, %v635
      %v4281 = vmul.f32 %v4249, %v635
      %v4282 = vmul.f32 %v4250, %v635
      %v4283 = vmul.f32 %v4251, %v635
      %v4284 = vmul.f32 %v4252, %v635
      %v4285 = vmul.f32 %v4253, %v635
      %v4286 = vmul.f32 %v4254, %v635
      %v4287 = vmul.f32 %v4255, %v635
      %v4288 = vmul.f32 %v4256, %v635
      %v4289 = vmul.f32 %v4257, %v635
      %v4290 = vmul.f32 %v4258, %v635
      %v4291 = vmul.f32 %v4259, %v635
      %v4292 = vmul.f32 %v4260, %v635
      %v4293 = vmul.f32 %v4261, %v635
      %v4294 = vmul.f32 %v4262, %v635
      %v4295 = vmul.f32 %v4263, %v635
      %v4296 = vmul.f32 %v4264, %v635
      %v4297 = vmul.f32 %v4265, %v635
      %v4298 = vmul.f32 %v4266, %v635
      %v4299 = vmul.f32 %v4267, %v635
      %v4300 = vmul.f32 %v4268, %v635
      %v4301 = vmul.f32 %v4269, %v635
      %v4302 = vmul.f32 %v4270, %v635
      %v4303 = vadd.f32 %v4271, %v673
      %v4304 = vadd.f32 %v4272, %v673
      %v4305 = vadd.f32 %v4273, %v673
      %v4306 = vadd.f32 %v4274, %v673
      %v4307 = vadd.f32 %v4275, %v673
      %v4308 = vadd.f32 %v4276, %v673
      %v4309 = vadd.f32 %v4277, %v673
      %v4310 = vadd.f32 %v4278, %v673
      %v4311 = vadd.f32 %v4279, %v673
      %v4312 = vadd.f32 %v4280, %v673
      %v4313 = vadd.f32 %v4281, %v673
      %v4314 = vadd.f32 %v4282, %v673
      %v4315 = vadd.f32 %v4283, %v673
      %v4316 = vadd.f32 %v4284, %v673
      %v4317 = vadd.f32 %v4285, %v673
      %v4318 = vadd.f32 %v4286, %v673
      %v4319 = vadd.f32 %v4287, %v673
      %v4320 = vadd.f32 %v4288, %v673
      %v4321 = vadd.f32 %v4289, %v673
      %v4322 = vadd.f32 %v4290, %v673
      %v4323 = vadd.f32 %v4291, %v673
      %v4324 = vadd.f32 %v4292, %v673
      %v4325 = vadd.f32 %v4293, %v673
      %v4326 = vadd.f32 %v4294, %v673
      %v4327 = vadd.f32 %v4295, %v673
      %v4328 = vadd.f32 %v4296, %v673
      %v4329 = vadd.f32 %v4297, %v673
      %v4330 = vadd.f32 %v4298, %v673
      %v4331 = vadd.f32 %v4299, %v673
      %v4332 = vadd.f32 %v4300, %v673
      %v4333 = vadd.f32 %v4301, %v673
      %v4334 = vadd.f32 %v4302, %v673
      %v4335 = vmax.f32 %v4303, 0.0
      %v4336 = vmax.f32 %v4304, 0.0
      %v4337 = vmax.f32 %v4305, 0.0
      %v4338 = vmax.f32 %v4306, 0.0
      %v4339 = vmax.f32 %v4307, 0.0
      %v4340 = vmax.f32 %v4308, 0.0
      %v4341 = vmax.f32 %v4309, 0.0
      %v4342 = vmax.f32 %v4310, 0.0
      %v4343 = vmax.f32 %v4311, 0.0
      %v4344 = vmax.f32 %v4312, 0.0
      %v4345 = vmax.f32 %v4313, 0.0
      %v4346 = vmax.f32 %v4314, 0.0
      %v4347 = vmax.f32 %v4315, 0.0
      %v4348 = vmax.f32 %v4316, 0.0
      %v4349 = vmax.f32 %v4317, 0.0
      %v4350 = vmax.f32 %v4318, 0.0
      %v4351 = vmax.f32 %v4319, 0.0
      %v4352 = vmax.f32 %v4320, 0.0
      %v4353 = vmax.f32 %v4321, 0.0
      %v4354 = vmax.f32 %v4322, 0.0
      %v4355 = vmax.f32 %v4323, 0.0
      %v4356 = vmax.f32 %v4324, 0.0
      %v4357 = vmax.f32 %v4325, 0.0
      %v4358 = vmax.f32 %v4326, 0.0
      %v4359 = vmax.f32 %v4327, 0.0
      %v4360 = vmax.f32 %v4328, 0.0
      %v4361 = vmax.f32 %v4329, 0.0
      %v4362 = vmax.f32 %v4330, 0.0
      %v4363 = vmax.f32 %v4331, 0.0
      %v4364 = vmax.f32 %v4332, 0.0
      %v4365 = vmax.f32 %v4333, 0.0
      %v4366 = vmax.f32 %v4334, 0.0
      %v4367 = vadd.f32 %v4207, %v4335
      %v4368 = vadd.f32 %v4208, %v4336
      %v4369 = vadd.f32 %v4209, %v4337
      %v4370 = vadd.f32 %v4210, %v4338
      %v4371 = vadd.f32 %v4211, %v4339
      %v4372 = vadd.f32 %v4212, %v4340
      %v4373 = vadd.f32 %v4213, %v4341
      %v4374 = vadd.f32 %v4214, %v4342
      %v4375 = vadd.f32 %v4215, %v4343
      %v4376 = vadd.f32 %v4216, %v4344
      %v4377 = vadd.f32 %v4217, %v4345
      %v4378 = vadd.f32 %v4218, %v4346
      %v4379 = vadd.f32 %v4219, %v4347
      %v4380 = vadd.f32 %v4220, %v4348
      %v4381 = vadd.f32 %v4221, %v4349
      %v4382 = vadd.f32 %v4222, %v4350
      %v4383 = vadd.f32 %v4223, %v4351
      %v4384 = vadd.f32 %v4224, %v4352
      %v4385 = vadd.f32 %v4225, %v4353
      %v4386 = vadd.f32 %v4226, %v4354
      %v4387 = vadd.f32 %v4227, %v4355
      %v4388 = vadd.f32 %v4228, %v4356
      %v4389 = vadd.f32 %v4229, %v4357
      %v4390 = vadd.f32 %v4230, %v4358
      %v4391 = vadd.f32 %v4231, %v4359
      %v4392 = vadd.f32 %v4232, %v4360
      %v4393 = vadd.f32 %v4233, %v4361
      %v4394 = vadd.f32 %v4234, %v4362
      %v4395 = vadd.f32 %v4235, %v4363
      %v4396 = vadd.f32 %v4236, %v4364
      %v4397 = vadd.f32 %v4237, %v4365
      %v4398 = vadd.f32 %v4238, %v4366
      %v4399 = vmax.f32 %v4367, 0.0
      %v4400 = vmax.f32 %v4368, 0.0
      %v4401 = vmax.f32 %v4369, 0.0
      %v4402 = vmax.f32 %v4370, 0.0
      %v4403 = vmax.f32 %v4371, 0.0
      %v4404 = vmax.f32 %v4372, 0.0
      %v4405 = vmax.f32 %v4373, 0.0
      %v4406 = vmax.f32 %v4374, 0.0
      %v4407 = vmax.f32 %v4375, 0.0
      %v4408 = vmax.f32 %v4376, 0.0
      %v4409 = vmax.f32 %v4377, 0.0
      %v4410 = vmax.f32 %v4378, 0.0
      %v4411 = vmax.f32 %v4379, 0.0
      %v4412 = vmax.f32 %v4380, 0.0
      %v4413 = vmax.f32 %v4381, 0.0
      %v4414 = vmax.f32 %v4382, 0.0
      %v4415 = vmax.f32 %v4383, 0.0
      %v4416 = vmax.f32 %v4384, 0.0
      %v4417 = vmax.f32 %v4385, 0.0
      %v4418 = vmax.f32 %v4386, 0.0
      %v4419 = vmax.f32 %v4387, 0.0
      %v4420 = vmax.f32 %v4388, 0.0
      %v4421 = vmax.f32 %v4389, 0.0
      %v4422 = vmax.f32 %v4390, 0.0
      %v4423 = vmax.f32 %v4391, 0.0
      %v4424 = vmax.f32 %v4392, 0.0
      %v4425 = vmax.f32 %v4393, 0.0
      %v4426 = vmax.f32 %v4394, 0.0
      %v4427 = vmax.f32 %v4395, 0.0
      %v4428 = vmax.f32 %v4396, 0.0
      %v4429 = vmax.f32 %v4397, 0.0
      %v4430 = vmax.f32 %v4398, 0.0
      %v4431 = vpack.c.bf16 %v4400, %v4399
      %v4432 = vpack.c.bf16 %v4402, %v4401
      %v4433 = vpack.c.bf16 %v4404, %v4403
      %v4434 = vpack.c.bf16 %v4406, %v4405
      %v4435 = vpack.c.bf16 %v4408, %v4407
      %v4436 = vpack.c.bf16 %v4410, %v4409
      %v4437 = vpack.c.bf16 %v4412, %v4411
      %v4438 = vpack.c.bf16 %v4414, %v4413
      %v4439 = vpack.c.bf16 %v4416, %v4415
      %v4440 = vpack.c.bf16 %v4418, %v4417
      %v4441 = vpack.c.bf16 %v4420, %v4419
      %v4442 = vpack.c.bf16 %v4422, %v4421
      %v4443 = vpack.c.bf16 %v4424, %v4423
      %v4444 = vpack.c.bf16 %v4426, %v4425
      %v4445 = vpack.c.bf16 %v4428, %v4427
      %v4446 = vpack.c.bf16 %v4430, %v4429
      %v4463 = vunpack.c.l.b16 %v4431
      %v4464 = vunpack.c.h.b16 %v4431
      %v4465 = vunpack.c.l.b16 %v4432
      %v4466 = vunpack.c.h.b16 %v4432
      %v4467 = vunpack.c.l.b16 %v4433
      %v4468 = vunpack.c.h.b16 %v4433
      %v4469 = vunpack.c.l.b16 %v4434
      %v4470 = vunpack.c.h.b16 %v4434
      %v4471 = vunpack.c.l.b16 %v4435
      %v4472 = vunpack.c.h.b16 %v4435
      %v4473 = vunpack.c.l.b16 %v4436
      %v4474 = vunpack.c.h.b16 %v4436
      %v4475 = vunpack.c.l.b16 %v4437
      %v4476 = vunpack.c.h.b16 %v4437
      %v4477 = vunpack.c.l.b16 %v4438
      %v4478 = vunpack.c.h.b16 %v4438
      %v4479 = vunpack.c.l.b16 %v4439
      %v4480 = vunpack.c.h.b16 %v4439
      %v4481 = vunpack.c.l.b16 %v4440
      %v4482 = vunpack.c.h.b16 %v4440
      %v4483 = vunpack.c.l.b16 %v4441
      %v4484 = vunpack.c.h.b16 %v4441
      %v4485 = vunpack.c.l.b16 %v4442
      %v4486 = vunpack.c.h.b16 %v4442
      %v4487 = vunpack.c.l.b16 %v4443
      %v4488 = vunpack.c.h.b16 %v4443
      %v4489 = vunpack.c.l.b16 %v4444
      %v4490 = vunpack.c.h.b16 %v4444
      %v4491 = vunpack.c.l.b16 %v4445
      %v4492 = vunpack.c.h.b16 %v4445
      %v4493 = vunpack.c.l.b16 %v4446
      %v4494 = vunpack.c.h.b16 %v4446
      %v4495 = vpack.c.b16 %v4463, %v4463
      %v4496 = vpack.c.b16 %v4464, %v4464
      %v4497 = vpack.c.b16 %v4465, %v4465
      %v4498 = vpack.c.b16 %v4466, %v4466
      %v4499 = vpack.c.b16 %v4467, %v4467
      %v4500 = vpack.c.b16 %v4468, %v4468
      %v4501 = vpack.c.b16 %v4469, %v4469
      %v4502 = vpack.c.b16 %v4470, %v4470
      %v4503 = vpack.c.b16 %v4471, %v4471
      %v4504 = vpack.c.b16 %v4472, %v4472
      %v4505 = vpack.c.b16 %v4473, %v4473
      %v4506 = vpack.c.b16 %v4474, %v4474
      %v4507 = vpack.c.b16 %v4475, %v4475
      %v4508 = vpack.c.b16 %v4476, %v4476
      %v4509 = vpack.c.b16 %v4477, %v4477
      %v4510 = vpack.c.b16 %v4478, %v4478
      %v4511 = vpack.c.b16 %v4479, %v4479
      %v4512 = vpack.c.b16 %v4480, %v4480
      %v4513 = vpack.c.b16 %v4481, %v4481
      %v4514 = vpack.c.b16 %v4482, %v4482
      %v4515 = vpack.c.b16 %v4483, %v4483
      %v4516 = vpack.c.b16 %v4484, %v4484
      %v4517 = vpack.c.b16 %v4485, %v4485
      %v4518 = vpack.c.b16 %v4486, %v4486
      %v4519 = vpack.c.b16 %v4487, %v4487
      %v4520 = vpack.c.b16 %v4488, %v4488
      %v4521 = vpack.c.b16 %v4489, %v4489
      %v4522 = vpack.c.b16 %v4490, %v4490
      %v4523 = vpack.c.b16 %v4491, %v4491
      %v4524 = vpack.c.b16 %v4492, %v4492
      %v4525 = vpack.c.b16 %v4493, %v4493
      %v4526 = vpack.c.b16 %v4494, %v4494
      %vm4559 = vcmask 257024
      %4560 = vst.msk [vmem:[%s413] sm:$0xf] %vm4559, %v4495
      %4561 = vst.msk [vmem:[%s413 + $0x4] sm:$0xf] %vm4559, %v4496
      %4562 = vst.msk [vmem:[%s413 + $0x8] sm:$0xf] %vm4559, %v4497
      %4563 = vst.msk [vmem:[%s413 + $0xc] sm:$0xf] %vm4559, %v4498
      %4564 = vst.msk [vmem:[%s413 + $0x10] sm:$0xf] %vm4559, %v4499
      %4565 = vst.msk [vmem:[%s413 + $0x14] sm:$0xf] %vm4559, %v4500
      %4566 = vst.msk [vmem:[%s413 + $0x18] sm:$0xf] %vm4559, %v4501
      %4567 = vst.msk [vmem:[%s413 + $0x1c] sm:$0xf] %vm4559, %v4502
      %4568 = vst.msk [vmem:[%s413 + $0x20] sm:$0xf] %vm4559, %v4503
      %4569 = vst.msk [vmem:[%s413 + $0x24] sm:$0xf] %vm4559, %v4504
      %4570 = vst.msk [vmem:[%s413 + $0x28] sm:$0xf] %vm4559, %v4505
      %4571 = vst.msk [vmem:[%s413 + $0x2c] sm:$0xf] %vm4559, %v4506
      %4572 = vst.msk [vmem:[%s413 + $0x30] sm:$0xf] %vm4559, %v4507
      %4573 = vst.msk [vmem:[%s413 + $0x34] sm:$0xf] %vm4559, %v4508
      %4574 = vst.msk [vmem:[%s413 + $0x38] sm:$0xf] %vm4559, %v4509
      %4575 = vst.msk [vmem:[%s413 + $0x3c] sm:$0xf] %vm4559, %v4510
      %4576 = vst.msk [vmem:[%s413 + $0x40] sm:$0xf] %vm4559, %v4511
      %4577 = vst.msk [vmem:[%s413 + $0x44] sm:$0xf] %vm4559, %v4512
      %4578 = vst.msk [vmem:[%s413 + $0x48] sm:$0xf] %vm4559, %v4513
      %4579 = vst.msk [vmem:[%s413 + $0x4c] sm:$0xf] %vm4559, %v4514
      %4580 = vst.msk [vmem:[%s413 + $0x50] sm:$0xf] %vm4559, %v4515
      %4581 = vst.msk [vmem:[%s413 + $0x54] sm:$0xf] %vm4559, %v4516
      %4582 = vst.msk [vmem:[%s413 + $0x58] sm:$0xf] %vm4559, %v4517
      %4583 = vst.msk [vmem:[%s413 + $0x5c] sm:$0xf] %vm4559, %v4518
      %4584 = vst.msk [vmem:[%s413 + $0x60] sm:$0xf] %vm4559, %v4519
      %4585 = vst.msk [vmem:[%s413 + $0x64] sm:$0xf] %vm4559, %v4520
      %4586 = vst.msk [vmem:[%s413 + $0x68] sm:$0xf] %vm4559, %v4521
      %4587 = vst.msk [vmem:[%s413 + $0x6c] sm:$0xf] %vm4559, %v4522
      %4588 = vst.msk [vmem:[%s413 + $0x70] sm:$0xf] %vm4559, %v4523
      %4589 = vst.msk [vmem:[%s413 + $0x74] sm:$0xf] %vm4559, %v4524
      %4590 = vst.msk [vmem:[%s413 + $0x78] sm:$0xf] %vm4559, %v4525
      %4591 = vst.msk [vmem:[%s413 + $0x7c] sm:$0xf] %vm4559, %v4526
      %p4592 = scmp.lt.s32.totalorder %s23, 1
      %s4593 = scalar_select %p4592, %s23, 1
      %s4594 = smul.addr %s4593, 32
      %s4595 = smul.addr %s4594, 4
      %s4596 = scalar_lea.vmem %s12, %s4595
      // Predicated region
      $region69: #{tpu_custom_call.1} parent=67 // pred_check
        %p4597 = pneg %p298
      $region70: #{tpu_custom_call.1} parent=67 // pred_check_branch
        %4599 = sbr.rel (%p4597) target = $region72
      $region71: #{tpu_custom_call.1} parent=67 // pred_region
        _
      $region72: #{tpu_custom_call.1} parent=67 // pred_fallthru
        _
    $region68: #{tpu_custom_call.1} parent=5 // pred_fallthru
      _
    %p4600 = scmp.le.s32.totalorder 2, %s18
    // Predicated region
    $region73: #{tpu_custom_call.1} parent=5 // pred_check
      %p4601 = pneg %p4600
    $region74: #{tpu_custom_call.1} parent=5 // pred_check_branch
      %4603 = sbr.rel (%p4601) target = $region76
    $region75: #{tpu_custom_call.1} parent=5 // pred_region
      %s4604 = ssub.s32 %s18, 2
      // Predicated region
      $region77: #{tpu_custom_call.1} parent=75 // pred_check
        %p4605 = pneg %p304
      $region78: #{tpu_custom_call.1} parent=75 // pred_check_branch
        %4607 = sbr.rel (%p4605) target = $region80
      $region79: #{tpu_custom_call.1} parent=75 // pred_region
        %p4608 = scmp.lt.s32.totalorder %s24, 1
        %s4609 = scalar_select %p4608, %s24, 1
        %s4610 = smul.addr %s4609, 32
        %s4611 = smul.addr %s4610, 4
        %s4612 = scalar_lea.vmem %s12, %s4611
      $region80: #{tpu_custom_call.1} parent=75 // pred_fallthru
        _
    $region76: #{tpu_custom_call.1} parent=5 // pred_fallthru
      _
  $region6: #{tpu_custom_call.1} parent=0 // loop_footer
    %s22 = sadd.s32 1, %s18
  $region7: #{tpu_custom_call.1} parent=0 // loop_footer_branch
    %17 = sbr.rel target = $region3
  $region8: #{tpu_custom_call.1} parent=0 // loop_exit
    _

</llo_original>
